<compile_context>
chip_gen: v5e
topology: v5e:2x2
jax: 0.10.0
libtpu: 0.0.40
codegen_flags: <defaults>
</compile_context>

<pallas_src>
import math

import jax
import jax.numpy as jnp
from jax.experimental import pallas as pl
from jax.experimental.pallas import tpu as pltpu

# ---------------- config (small synthetic CLIP visual tower) ----------------
B, T = 2, 2                  # batch, frames per video
D_IMG, PATCH = 16, 8         # image side, patch size
GRID = D_IMG // PATCH
P = GRID * GRID              # patches per frame (4)
S = P + 1                    # tokens incl. CLS (5)
S_PAD = 8                    # sequence padded to a sublane multiple
CIN = 3 * PATCH * PATCH      # 192
W = 128                      # transformer width
HEADS = 4
HD = W // HEADS
LAYERS = 2                   # number of resblocks
K = 2                        # self.k : keep last k layer embeddings
EPS = 1e-5

N = B * T                    # total frames
GROUPS = 2                   # grid steps (v7x: one per TensorCore)
NG = N // GROUPS             # frames per grid step

PARAMS_PER_BLOCK = 12


# ---------------------------- kernel helpers ----------------------------------
def _ln(v, g, b):
    """Row-wise LayerNorm in f32."""
    mu = jnp.mean(v, axis=-1, keepdims=True)
    var = jnp.mean((v - mu) ** 2, axis=-1, keepdims=True)
    return (v - mu) * jax.lax.rsqrt(var + EPS) * g + b


def _resblock_body(x, refs, kbias):
    """One CLIP ResidualAttentionBlock on NG padded sequences.

    x: (NG*S_PAD, W) f32 residual stream.  refs: 12 weight/bias VMEM refs.
    """
    (ln1g, ln1b, wqkv, bqkv, wproj, bproj,
     ln2g, ln2b, wfc1, bfc1, wfc2, bfc2) = refs

    # ---- multi-head self-attention ------------------------------------------
    xn = _ln(x, ln1g[...], ln1b[...])
    qkv = jnp.dot(xn.astype(jnp.bfloat16), wqkv[...],
                  preferred_element_type=jnp.float32) + bqkv[...]   # (NG*S_PAD, 3W)

    attn_out = jnp.zeros((NG * S_PAD, W), jnp.float32)
    for h in range(HEADS):                                          # static unroll
        qh = qkv[:, h * HD:(h + 1) * HD].reshape(NG, S_PAD, HD)
        kh = qkv[:, W + h * HD:W + (h + 1) * HD].reshape(NG, S_PAD, HD)
        vh = qkv[:, 2 * W + h * HD:2 * W + (h + 1) * HD].reshape(NG, S_PAD, HD)
        # scale 1/sqrt(HD) already folded into the Q projection at init time
        s = jnp.einsum('nqd,nkd->nqk', qh.astype(jnp.bfloat16),
                       kh.astype(jnp.bfloat16),
                       preferred_element_type=jnp.float32) + kbias
        m = jnp.max(s, axis=-1, keepdims=True)
        e = jnp.exp(s - m)
        a = e * pl.reciprocal(jnp.sum(e, axis=-1, keepdims=True), approx=True)
        oh = jnp.einsum('nqk,nkd->nqd', a.astype(jnp.bfloat16),
                        vh.astype(jnp.bfloat16),
                        preferred_element_type=jnp.float32)         # (NG, S_PAD, HD)
        # project this head with its slice of the out-proj weight (no concat)
        attn_out = attn_out + jnp.dot(
            oh.reshape(NG * S_PAD, HD).astype(jnp.bfloat16), wproj[h],
            preferred_element_type=jnp.float32)
    x = x + attn_out + bproj[...]

    # ---- MLP (QuickGELU, as in CLIP) -----------------------------------------
    xn2 = _ln(x, ln2g[...], ln2b[...])
    h1 = jnp.dot(xn2.astype(jnp.bfloat16), wfc1[...],
                 preferred_element_type=jnp.float32) + bfc1[...]
    h1 = h1 * jax.nn.sigmoid(1.702 * h1)
    h2 = jnp.dot(h1.astype(jnp.bfloat16), wfc2[...],
                 preferred_element_type=jnp.float32) + bfc2[...]
    return x + h2


def _tower_kernel(xp_ref, w_ref, cls_ref, pos_ref, g_ref, b_ref, *rest):
    """Fused visual tower for NG frames: embed + ln_pre + LAYERS resblocks.

    rest = LAYERS*12 weight refs followed by the output ref
           (LAYERS+1, NG, S_PAD, W).
    """
    blk_refs = rest[:-1]
    o_ref = rest[-1]

    # ---- patch embed (Conv2d k=stride=PATCH, no bias) as one bf16 matmul -----
    patches = jnp.dot(xp_ref[...].astype(jnp.bfloat16), w_ref[...],
                      preferred_element_type=jnp.float32)           # (NG*P, W) f32

    # ---- CLS prepend + seq padding + positional embedding + ln_pre -----------
    rows = []
    for n in range(NG):                                             # static, tiny
        rows.append(cls_ref[...])                                   # (1, W) CLS
        rows.append(patches[n * P:(n + 1) * P, :])                  # (P, W)
        rows.append(jnp.zeros((S_PAD - S, W), jnp.float32))         # pad rows
    x = jnp.concatenate(rows, axis=0) + pos_ref[...]                # (NG*S_PAD, W)
    x = _ln(x, g_ref[...], b_ref[...])
    o_ref[0] = x.reshape(NG, S_PAD, W)                              # emb[0]

    # additive mask: padded key positions (k >= S) -> -inf (shared by all layers)
    kidx = jax.lax.broadcasted_iota(jnp.int32, (S_PAD, S_PAD), 1)
    kbias = jnp.where(kidx < S, 0.0, -1e30).astype(jnp.float32)

    # ---- residual attention blocks (activations never leave VMEM) ------------
    for l in range(LAYERS):
        refs = blk_refs[l * PARAMS_PER_BLOCK:(l + 1) * PARAMS_PER_BLOCK]
        x = _resblock_body(x, refs, kbias)
        o_ref[l + 1] = x.reshape(NG, S_PAD, W)                      # emb[l+1]


# ---------------------------- wrapper ------------------------------------------
def clip_video_tower(frames, params):
    """frames: (N, 3, d, d) f32 NCHW -> (LAYERS+1, N, S_PAD, W) f32 embeddings."""
    conv_wmat, cls_emb, pos_tiled, ln_g, ln_b, blocks = params
    n = frames.shape[0]
    # Conv2d(3, W, k=stride=PATCH, bias=False) == patchify + matmul (glue reshape)
    xp = frames.reshape(n, 3, GRID, PATCH, GRID, PATCH)
    xp = xp.transpose(0, 2, 4, 1, 3, 5).reshape(n * P, CIN)

    flat_blocks = [p for blk in blocks for p in blk]

    def full(p):
        return pl.BlockSpec(p.shape, lambda i, nd=p.ndim: (0,) * nd)

    in_specs = [
        pl.BlockSpec((NG * P, CIN), lambda i: (i, 0)),        # patch pixels (tiled)
        pl.BlockSpec((CIN, W), lambda i: (0, 0)),             # conv weight
        pl.BlockSpec((1, W), lambda i: (0, 0)),               # class embedding
        pl.BlockSpec((NG * S_PAD, W), lambda i: (0, 0)),      # pos emb (pre-tiled)
        pl.BlockSpec((1, W), lambda i: (0, 0)),               # ln_pre gamma
        pl.BlockSpec((1, W), lambda i: (0, 0)),               # ln_pre beta
    ] + [full(p) for p in flat_blocks]

    return pl.pallas_call(
        _tower_kernel,
        out_shape=jax.ShapeDtypeStruct((LAYERS + 1, N, S_PAD, W), jnp.float32),
        grid=(GROUPS,),
        in_specs=in_specs,
        out_specs=pl.BlockSpec((LAYERS + 1, NG, S_PAD, W), lambda i: (0, i, 0, 0)),
        compiler_params=pltpu.CompilerParams(dimension_semantics=("parallel",)),
        # TODO(synk): at real CLIP widths, tile wqkv/wfc1/wfc2 with a reduction
        # grid axis + VMEM accumulator and raise vmem_limit_bytes (v7x 64 MiB VMEM).
    )(xp, conv_wmat, cls_emb, pos_tiled, ln_g, ln_b, *flat_blocks)


# ---------------------------- parameters (kernel-ready layout) -----------------
def init_params(key):
    ks = jax.random.split(key, 3 + LAYERS)
    conv_w = jax.random.normal(ks[0], (W, 3, PATCH, PATCH), jnp.float32) * 0.02
    conv_wmat = conv_w.reshape(W, CIN).T.astype(jnp.bfloat16)          # (CIN, W)
    cls_emb = (jax.random.normal(ks[1], (W,), jnp.float32) * 0.02).reshape(1, W)
    pos_emb = jax.random.normal(ks[2], (S, W), jnp.float32) * 0.02
    pos_pad = jnp.zeros((S_PAD, W), jnp.float32).at[:S].set(pos_emb)
    pos_tiled = jnp.tile(pos_pad, (NG, 1))                             # (NG*S_PAD, W)
    ln_pre_g = jnp.ones((1, W), jnp.float32)
    ln_pre_b = jnp.zeros((1, W), jnp.float32)

    scale = 1.0 / math.sqrt(HD)
    blocks = []
    for l in range(LAYERS):
        kb = jax.random.split(ks[3 + l], 4)
        wqkv = jax.random.normal(kb[0], (W, 3 * W), jnp.float32) * 0.02
        bqkv = jnp.zeros((1, 3 * W), jnp.float32)
        # fold attention scale into the Q projection (weights + bias)
        wqkv = wqkv.at[:, :W].multiply(scale)
        bqkv = bqkv.at[:, :W].multiply(scale)
        wproj = (jax.random.normal(kb[1], (W, W), jnp.float32) * 0.02
                 ).reshape(HEADS, HD, W)                               # per-head slices
        blocks.append((
            jnp.ones((1, W), jnp.float32), jnp.zeros((1, W), jnp.float32),   # ln_1
            wqkv.astype(jnp.bfloat16), bqkv,                                 # in_proj
            wproj.astype(jnp.bfloat16), jnp.zeros((1, W), jnp.float32),      # out_proj
            jnp.ones((1, W), jnp.float32), jnp.zeros((1, W), jnp.float32),   # ln_2
            (jax.random.normal(kb[2], (W, 4 * W), jnp.float32) * 0.02).astype(jnp.bfloat16),
            jnp.zeros((1, 4 * W), jnp.float32),                              # mlp c_fc
            (jax.random.normal(kb[3], (4 * W, W), jnp.float32) * 0.02).astype(jnp.bfloat16),
            jnp.zeros((1, W), jnp.float32),                                  # mlp c_proj
        ))
    return conv_wmat, cls_emb, pos_tiled, ln_pre_g, ln_pre_b, blocks


# ---------------------------- model forward ------------------------------------
@jax.jit
def clip_forward(video, params):
    # video: (b, t, 3*d*d), may contain non-finite values
    video_msk = jnp.where(jnp.isfinite(video[:, :, 0]), 1, 0)          # (b, t)
    video = jnp.where(jnp.isfinite(video), video, 0.0)
    frames = video.reshape(B * T, 3, D_IMG, D_IMG)

    video_emb = clip_video_tower(frames, params)                       # (L+1, N, S_PAD, W)
    video_emb = video_emb[:, :, :S, :]                                 # drop seq padding
    video_emb = video_emb.reshape(LAYERS + 1, B, T, S, W)
    emb = video_emb[-K:]                                               # (K, B, T, S, W)
    emb = jnp.transpose(emb, (1, 2, 0, 3, 4)).astype(jnp.bfloat16)     # (B, T, K, S, W)
    # zero masked (non-finite) frames on device and return the mask instead of a
    # host-synchronizing per-batch prefix slice (video_msk[i].sum()).
    emb = emb * video_msk[:, :, None, None, None].astype(jnp.bfloat16)
    # TODO(synk): reference dumps emb[i, :msk[i].sum()] to f"{out_path}/{vid}.npy"; file I/O skipped.
    # TODO(synk): query branch (token_embedding + text transformer) not exercised here.
    return emb, video_msk


# ---------------------------- main ----------------------------------------------
if __name__ == "__main__":
    key = jax.random.PRNGKey(0)
    video = jax.random.normal(key, (B, T, 3 * D_IMG * D_IMG), jnp.float32)
    # inject non-finite values into one frame to exercise the masking path
    video = video.at[1, 1].set(jnp.nan)

    params = init_params(jax.random.PRNGKey(42))
    emb, msk = clip_forward(video, params)
    jax.block_until_ready((emb, msk))
    print("KERNEL_OK")
</pallas_src>

<mosaic_0001>
module attributes {stable_mosaic.version = 11 : i64} {
  func.func @_tower_kernel(%arg0: i32, %arg1: memref<8x192xf32, #tpu.memory_space<vmem>>, %arg2: memref<192x128xbf16, #tpu.memory_space<vmem>>, %arg3: memref<1x128xf32, #tpu.memory_space<vmem>>, %arg4: memref<16x128xf32, #tpu.memory_space<vmem>>, %arg5: memref<1x128xf32, #tpu.memory_space<vmem>>, %arg6: memref<1x128xf32, #tpu.memory_space<vmem>>, %arg7: memref<1x128xf32, #tpu.memory_space<vmem>>, %arg8: memref<1x128xf32, #tpu.memory_space<vmem>>, %arg9: memref<128x384xbf16, #tpu.memory_space<vmem>>, %arg10: memref<1x384xf32, #tpu.memory_space<vmem>>, %arg11: memref<4x32x128xbf16, #tpu.memory_space<vmem>>, %arg12: memref<1x128xf32, #tpu.memory_space<vmem>>, %arg13: memref<1x128xf32, #tpu.memory_space<vmem>>, %arg14: memref<1x128xf32, #tpu.memory_space<vmem>>, %arg15: memref<128x512xbf16, #tpu.memory_space<vmem>>, %arg16: memref<1x512xf32, #tpu.memory_space<vmem>>, %arg17: memref<512x128xbf16, #tpu.memory_space<vmem>>, %arg18: memref<1x128xf32, #tpu.memory_space<vmem>>, %arg19: memref<1x128xf32, #tpu.memory_space<vmem>>, %arg20: memref<1x128xf32, #tpu.memory_space<vmem>>, %arg21: memref<128x384xbf16, #tpu.memory_space<vmem>>, %arg22: memref<1x384xf32, #tpu.memory_space<vmem>>, %arg23: memref<4x32x128xbf16, #tpu.memory_space<vmem>>, %arg24: memref<1x128xf32, #tpu.memory_space<vmem>>, %arg25: memref<1x128xf32, #tpu.memory_space<vmem>>, %arg26: memref<1x128xf32, #tpu.memory_space<vmem>>, %arg27: memref<128x512xbf16, #tpu.memory_space<vmem>>, %arg28: memref<1x512xf32, #tpu.memory_space<vmem>>, %arg29: memref<512x128xbf16, #tpu.memory_space<vmem>>, %arg30: memref<1x128xf32, #tpu.memory_space<vmem>>, %arg31: memref<3x2x8x128xf32, #tpu.memory_space<vmem>>) attributes {dimension_semantics = [#tpu.dimension_semantics<parallel>], iteration_bounds = array<i64: 2>, scalar_prefetch = 0 : i64, scratch_operands = 0 : i64, tpu.core_type = #tpu.core_type<tc>, window_params = [{transform_indices = @transform_0, window_bounds = array<i64: 8, 192>}, {pipeline_mode = #tpu.pipeline_mode<synchronous>, transform_indices = @transform_1, window_bounds = array<i64: 192, 128>}, {pipeline_mode = #tpu.pipeline_mode<synchronous>, transform_indices = @transform_2, window_bounds = array<i64: 1, 128>}, {pipeline_mode = #tpu.pipeline_mode<synchronous>, transform_indices = @transform_3, window_bounds = array<i64: 16, 128>}, {pipeline_mode = #tpu.pipeline_mode<synchronous>, transform_indices = @transform_4, window_bounds = array<i64: 1, 128>}, {pipeline_mode = #tpu.pipeline_mode<synchronous>, transform_indices = @transform_5, window_bounds = array<i64: 1, 128>}, {pipeline_mode = #tpu.pipeline_mode<synchronous>, transform_indices = @transform_6, window_bounds = array<i64: 1, 128>}, {pipeline_mode = #tpu.pipeline_mode<synchronous>, transform_indices = @transform_7, window_bounds = array<i64: 1, 128>}, {pipeline_mode = #tpu.pipeline_mode<synchronous>, transform_indices = @transform_8, window_bounds = array<i64: 128, 384>}, {pipeline_mode = #tpu.pipeline_mode<synchronous>, transform_indices = @transform_9, window_bounds = array<i64: 1, 384>}, {pipeline_mode = #tpu.pipeline_mode<synchronous>, transform_indices = @transform_10, window_bounds = array<i64: 4, 32, 128>}, {pipeline_mode = #tpu.pipeline_mode<synchronous>, transform_indices = @transform_11, window_bounds = array<i64: 1, 128>}, {pipeline_mode = #tpu.pipeline_mode<synchronous>, transform_indices = @transform_12, window_bounds = array<i64: 1, 128>}, {pipeline_mode = #tpu.pipeline_mode<synchronous>, transform_indices = @transform_13, window_bounds = array<i64: 1, 128>}, {pipeline_mode = #tpu.pipeline_mode<synchronous>, transform_indices = @transform_14, window_bounds = array<i64: 128, 512>}, {pipeline_mode = #tpu.pipeline_mode<synchronous>, transform_indices = @transform_15, window_bounds = array<i64: 1, 512>}, {pipeline_mode = #tpu.pipeline_mode<synchronous>, transform_indices = @transform_16, window_bounds = array<i64: 512, 128>}, {pipeline_mode = #tpu.pipeline_mode<synchronous>, transform_indices = @transform_17, window_bounds = array<i64: 1, 128>}, {pipeline_mode = #tpu.pipeline_mode<synchronous>, transform_indices = @transform_18, window_bounds = array<i64: 1, 128>}, {pipeline_mode = #tpu.pipeline_mode<synchronous>, transform_indices = @transform_19, window_bounds = array<i64: 1, 128>}, {pipeline_mode = #tpu.pipeline_mode<synchronous>, transform_indices = @transform_20, window_bounds = array<i64: 128, 384>}, {pipeline_mode = #tpu.pipeline_mode<synchronous>, transform_indices = @transform_21, window_bounds = array<i64: 1, 384>}, {pipeline_mode = #tpu.pipeline_mode<synchronous>, transform_indices = @transform_22, window_bounds = array<i64: 4, 32, 128>}, {pipeline_mode = #tpu.pipeline_mode<synchronous>, transform_indices = @transform_23, window_bounds = array<i64: 1, 128>}, {pipeline_mode = #tpu.pipeline_mode<synchronous>, transform_indices = @transform_24, window_bounds = array<i64: 1, 128>}, {pipeline_mode = #tpu.pipeline_mode<synchronous>, transform_indices = @transform_25, window_bounds = array<i64: 1, 128>}, {pipeline_mode = #tpu.pipeline_mode<synchronous>, transform_indices = @transform_26, window_bounds = array<i64: 128, 512>}, {pipeline_mode = #tpu.pipeline_mode<synchronous>, transform_indices = @transform_27, window_bounds = array<i64: 1, 512>}, {pipeline_mode = #tpu.pipeline_mode<synchronous>, transform_indices = @transform_28, window_bounds = array<i64: 512, 128>}, {pipeline_mode = #tpu.pipeline_mode<synchronous>, transform_indices = @transform_29, window_bounds = array<i64: 1, 128>}, {transform_indices = @transform_30, window_bounds = array<i64: 3, 2, 8, 128>}]} {
    %c0 = arith.constant 0 : index
    %c0_0 = arith.constant 0 : index
    %0 = vector.load %arg1[%c0, %c0_0] : memref<8x192xf32, #tpu.memory_space<vmem>>, vector<8x192xf32>
    %1 = arith.truncf %0 : vector<8x192xf32> to vector<8x192xbf16>
    %c0_1 = arith.constant 0 : index
    %c0_2 = arith.constant 0 : index
    %2 = vector.load %arg2[%c0_1, %c0_2] : memref<192x128xbf16, #tpu.memory_space<vmem>>, vector<192x128xbf16>
    %cst = arith.constant dense<0.000000e+00> : vector<8x128xf32>
    %3 = tpu.matmul %1, %2, %cst {dimension_numbers = #tpu.dot_dimension_numbers<[1], [0], [0], [1], [0, 0, 1, 1], [], []>} : vector<8x192xbf16>, vector<192x128xbf16>, vector<8x128xf32> -> vector<8x128xf32>
    %c0_3 = arith.constant 0 : index
    %c0_4 = arith.constant 0 : index
    %4 = vector.load %arg3[%c0_3, %c0_4] : memref<1x128xf32, #tpu.memory_space<vmem>>, vector<1x128xf32>
    %5 = vector.extract_strided_slice %3 {offsets = [0, 0], sizes = [4, 128], strides = [1, 1]} : vector<8x128xf32> to vector<4x128xf32>
    %cst_5 = arith.constant 0.000000e+00 : f32
    %6 = vector.broadcast %cst_5 : f32 to vector<3x128xf32>
    %c0_6 = arith.constant 0 : index
    %c0_7 = arith.constant 0 : index
    %7 = vector.load %arg3[%c0_6, %c0_7] : memref<1x128xf32, #tpu.memory_space<vmem>>, vector<1x128xf32>
    %8 = vector.extract_strided_slice %3 {offsets = [4, 0], sizes = [4, 128], strides = [1, 1]} : vector<8x128xf32> to vector<4x128xf32>
    %cst_8 = arith.constant 0.000000e+00 : f32
    %9 = vector.broadcast %cst_8 : f32 to vector<3x128xf32>
    %10 = tpu.concatenate %4, %5, %6, %7, %8, %9 in 0 : vector<1x128xf32>, vector<4x128xf32>, vector<3x128xf32>, vector<1x128xf32>, vector<4x128xf32>, vector<3x128xf32> -> vector<16x128xf32>
    %c0_9 = arith.constant 0 : index
    %c0_10 = arith.constant 0 : index
    %11 = vector.load %arg4[%c0_9, %c0_10] : memref<16x128xf32, #tpu.memory_space<vmem>>, vector<16x128xf32>
    %12 = arith.addf %10, %11 : vector<16x128xf32>
    %c0_11 = arith.constant 0 : index
    %c0_12 = arith.constant 0 : index
    %13 = vector.load %arg5[%c0_11, %c0_12] : memref<1x128xf32, #tpu.memory_space<vmem>>, vector<1x128xf32>
    %c0_13 = arith.constant 0 : index
    %c0_14 = arith.constant 0 : index
    %14 = vector.load %arg6[%c0_13, %c0_14] : memref<1x128xf32, #tpu.memory_space<vmem>>, vector<1x128xf32>
    %cst_15 = arith.constant dense<0.000000e+00> : vector<16xf32>
    %15 = vector.multi_reduction <add>, %12, %cst_15 [1] : vector<16x128xf32> to vector<16xf32>
    %16 = vector.shape_cast %15 : vector<16xf32> to vector<16x1xf32>
    %cst_16 = arith.constant 1.280000e+02 : f32
    %17 = vector.broadcast %cst_16 : f32 to vector<16x1xf32>
    %18 = arith.divf %16, %17 : vector<16x1xf32>
    %19 = vector.broadcast %18 : vector<16x1xf32> to vector<16x128xf32>
    %20 = arith.subf %12, %19 : vector<16x128xf32>
    %21 = arith.mulf %20, %20 : vector<16x128xf32>
    %cst_17 = arith.constant dense<0.000000e+00> : vector<16xf32>
    %22 = vector.multi_reduction <add>, %21, %cst_17 [1] : vector<16x128xf32> to vector<16xf32>
    %23 = vector.shape_cast %22 : vector<16xf32> to vector<16x1xf32>
    %cst_18 = arith.constant 1.280000e+02 : f32
    %24 = vector.broadcast %cst_18 : f32 to vector<16x1xf32>
    %25 = arith.divf %23, %24 : vector<16x1xf32>
    %26 = vector.broadcast %18 : vector<16x1xf32> to vector<16x128xf32>
    %27 = arith.subf %12, %26 : vector<16x128xf32>
    %cst_19 = arith.constant 9.99999974E-6 : f32
    %28 = vector.broadcast %cst_19 : f32 to vector<16x1xf32>
    %29 = arith.addf %25, %28 : vector<16x1xf32>
    %30 = math.rsqrt %29 : vector<16x1xf32>
    %31 = vector.broadcast %30 : vector<16x1xf32> to vector<16x128xf32>
    %32 = arith.mulf %27, %31 : vector<16x128xf32>
    %33 = vector.broadcast %13 : vector<1x128xf32> to vector<16x128xf32>
    %34 = arith.mulf %32, %33 : vector<16x128xf32>
    %35 = vector.broadcast %14 : vector<1x128xf32> to vector<16x128xf32>
    %36 = arith.addf %34, %35 : vector<16x128xf32>
    %37 = vector.shape_cast %36 : vector<16x128xf32> to vector<2x8x128xf32>
    %c0_20 = arith.constant 0 : index
    %c0_21 = arith.constant 0 : index
    %c0_22 = arith.constant 0 : index
    %c0_23 = arith.constant 0 : index
    %38 = vector.load %arg31[%c0_20, %c0_21, %c0_22, %c0_23] : memref<3x2x8x128xf32, #tpu.memory_space<vmem>>, vector<1x2x8x128xf32>
    %39 = vector.shape_cast %38 : vector<1x2x8x128xf32> to vector<2x8x128xf32>
    %40 = vector.shape_cast %37 : vector<2x8x128xf32> to vector<1x2x8x128xf32>
    tpu.vector_store %arg31[%c0_20, %c0_21, %c0_22, %c0_23], %40 {strides = array<i32>} : memref<3x2x8x128xf32, #tpu.memory_space<vmem>>, vector<1x2x8x128xf32>,
    %41 = tpu.iota {dimensions = array<i32: 1>} : vector<8x8xi32>
    %c5_i32 = arith.constant 5 : i32
    %42 = vector.broadcast %c5_i32 : i32 to vector<8x8xi32>
    %43 = arith.cmpi slt, %41, %42 : vector<8x8xi32>
    %cst_24 = arith.constant 0.000000e+00 : f32
    %cst_25 = arith.constant -1.000000e+30 : f32
    %44 = vector.broadcast %cst_24 : f32 to vector<8x8xf32>
    %45 = vector.broadcast %cst_25 : f32 to vector<8x8xf32>
    %46 = arith.select %43, %44, %45 : vector<8x8xi1>, vector<8x8xf32>
    %c0_26 = arith.constant 0 : index
    %c0_27 = arith.constant 0 : index
    %47 = vector.load %arg7[%c0_26, %c0_27] : memref<1x128xf32, #tpu.memory_space<vmem>>, vector<1x128xf32>
    %c0_28 = arith.constant 0 : index
    %c0_29 = arith.constant 0 : index
    %48 = vector.load %arg8[%c0_28, %c0_29] : memref<1x128xf32, #tpu.memory_space<vmem>>, vector<1x128xf32>
    %cst_30 = arith.constant dense<0.000000e+00> : vector<16xf32>
    %49 = vector.multi_reduction <add>, %36, %cst_30 [1] : vector<16x128xf32> to vector<16xf32>
    %50 = vector.shape_cast %49 : vector<16xf32> to vector<16x1xf32>
    %cst_31 = arith.constant 1.280000e+02 : f32
    %51 = vector.broadcast %cst_31 : f32 to vector<16x1xf32>
    %52 = arith.divf %50, %51 : vector<16x1xf32>
    %53 = vector.broadcast %52 : vector<16x1xf32> to vector<16x128xf32>
    %54 = arith.subf %36, %53 : vector<16x128xf32>
    %55 = arith.mulf %54, %54 : vector<16x128xf32>
    %cst_32 = arith.constant dense<0.000000e+00> : vector<16xf32>
    %56 = vector.multi_reduction <add>, %55, %cst_32 [1] : vector<16x128xf32> to vector<16xf32>
    %57 = vector.shape_cast %56 : vector<16xf32> to vector<16x1xf32>
    %cst_33 = arith.constant 1.280000e+02 : f32
    %58 = vector.broadcast %cst_33 : f32 to vector<16x1xf32>
    %59 = arith.divf %57, %58 : vector<16x1xf32>
    %60 = vector.broadcast %52 : vector<16x1xf32> to vector<16x128xf32>
    %61 = arith.subf %36, %60 : vector<16x128xf32>
    %cst_34 = arith.constant 9.99999974E-6 : f32
    %62 = vector.broadcast %cst_34 : f32 to vector<16x1xf32>
    %63 = arith.addf %59, %62 : vector<16x1xf32>
    %64 = math.rsqrt %63 : vector<16x1xf32>
    %65 = vector.broadcast %64 : vector<16x1xf32> to vector<16x128xf32>
    %66 = arith.mulf %61, %65 : vector<16x128xf32>
    %67 = vector.broadcast %47 : vector<1x128xf32> to vector<16x128xf32>
    %68 = arith.mulf %66, %67 : vector<16x128xf32>
    %69 = vector.broadcast %48 : vector<1x128xf32> to vector<16x128xf32>
    %70 = arith.addf %68, %69 : vector<16x128xf32>
    %71 = arith.truncf %70 : vector<16x128xf32> to vector<16x128xbf16>
    %c0_35 = arith.constant 0 : index
    %c0_36 = arith.constant 0 : index
    %72 = vector.load %arg9[%c0_35, %c0_36] : memref<128x384xbf16, #tpu.memory_space<vmem>>, vector<128x384xbf16>
    %cst_37 = arith.constant dense<0.000000e+00> : vector<16x384xf32>
    %73 = tpu.matmul %71, %72, %cst_37 {dimension_numbers = #tpu.dot_dimension_numbers<[1], [0], [0], [1], [0, 0, 1, 1], [], []>} : vector<16x128xbf16>, vector<128x384xbf16>, vector<16x384xf32> -> vector<16x384xf32>
    %c0_38 = arith.constant 0 : index
    %c0_39 = arith.constant 0 : index
    %74 = vector.load %arg10[%c0_38, %c0_39] : memref<1x384xf32, #tpu.memory_space<vmem>>, vector<1x384xf32>
    %75 = vector.broadcast %74 : vector<1x384xf32> to vector<16x384xf32>
    %76 = arith.addf %73, %75 : vector<16x384xf32>
    %cst_40 = arith.constant 0.000000e+00 : f32
    %77 = vector.broadcast %cst_40 : f32 to vector<16x128xf32>
    %78 = vector.extract_strided_slice %76 {offsets = [0, 0], sizes = [16, 32], strides = [1, 1]} : vector<16x384xf32> to vector<16x32xf32>
    %79 = vector.shape_cast %78 : vector<16x32xf32> to vector<2x8x32xf32>
    %80 = vector.extract_strided_slice %76 {offsets = [0, 128], sizes = [16, 32], strides = [1, 1]} : vector<16x384xf32> to vector<16x32xf32>
    %81 = vector.shape_cast %80 : vector<16x32xf32> to vector<2x8x32xf32>
    %82 = vector.extract_strided_slice %76 {offsets = [0, 256], sizes = [16, 32], strides = [1, 1]} : vector<16x384xf32> to vector<16x32xf32>
    %83 = vector.shape_cast %82 : vector<16x32xf32> to vector<2x8x32xf32>
    %84 = arith.truncf %79 : vector<2x8x32xf32> to vector<2x8x32xbf16>
    %85 = arith.truncf %81 : vector<2x8x32xf32> to vector<2x8x32xbf16>
    "tpu.trace_start"() <{level = 10 : i32, message = "nqd,nkd->nqk"}> : () -> ()
    %cst_41 = arith.constant dense<0.000000e+00> : vector<2x8x8xf32>
    %86 = tpu.matmul %84, %85, %cst_41 {dimension_numbers = #tpu.dot_dimension_numbers<[2], [2], [1], [1], [0, 0, 0, 1, 1, 1], [0], [0]>} : vector<2x8x32xbf16>, vector<2x8x32xbf16>, vector<2x8x8xf32> -> vector<2x8x8xf32>
    "tpu.trace_stop"() : () -> ()
    %87 = vector.shape_cast %46 : vector<8x8xf32> to vector<1x8x8xf32>
    %88 = vector.broadcast %87 : vector<1x8x8xf32> to vector<2x8x8xf32>
    %89 = arith.addf %86, %88 : vector<2x8x8xf32>
    %cst_42 = arith.constant dense<0xFF800000> : vector<2x8xf32>
    %90 = vector.multi_reduction <maximumf>, %89, %cst_42 [2] : vector<2x8x8xf32> to vector<2x8xf32>
    %91 = vector.shape_cast %90 : vector<2x8xf32> to vector<2x8x1xf32>
    %92 = vector.broadcast %91 : vector<2x8x1xf32> to vector<2x8x8xf32>
    %93 = arith.subf %89, %92 : vector<2x8x8xf32>
    %94 = math.exp %93 : vector<2x8x8xf32>
    %cst_43 = arith.constant dense<0.000000e+00> : vector<2x8xf32>
    %95 = vector.multi_reduction <add>, %94, %cst_43 [2] : vector<2x8x8xf32> to vector<2x8xf32>
    %96 = vector.shape_cast %95 : vector<2x8xf32> to vector<2x8x1xf32>
    %97 = tpu.reciprocal %96 {approx = true} : vector<2x8x1xf32> -> vector<2x8x1xf32>
    %98 = vector.broadcast %97 : vector<2x8x1xf32> to vector<2x8x8xf32>
    %99 = arith.mulf %94, %98 : vector<2x8x8xf32>
    %100 = arith.truncf %99 : vector<2x8x8xf32> to vector<2x8x8xbf16>
    %101 = arith.truncf %83 : vector<2x8x32xf32> to vector<2x8x32xbf16>
    "tpu.trace_start"() <{level = 10 : i32, message = "nqk,nkd->nqd"}> : () -> ()
    %cst_44 = arith.constant dense<0.000000e+00> : vector<2x8x32xf32>
    %102 = tpu.matmul %100, %101, %cst_44 {dimension_numbers = #tpu.dot_dimension_numbers<[2], [1], [1], [2], [0, 0, 0, 1, 1, 2], [0], [0]>} : vector<2x8x8xbf16>, vector<2x8x32xbf16>, vector<2x8x32xf32> -> vector<2x8x32xf32>
    "tpu.trace_stop"() : () -> ()
    %103 = vector.shape_cast %102 : vector<2x8x32xf32> to vector<16x32xf32>
    %104 = arith.truncf %103 : vector<16x32xf32> to vector<16x32xbf16>
    %c0_45 = arith.constant 0 : index
    %c0_46 = arith.constant 0 : index
    %c0_47 = arith.constant 0 : index
    %105 = vector.load %arg11[%c0_45, %c0_46, %c0_47] : memref<4x32x128xbf16, #tpu.memory_space<vmem>>, vector<1x32x128xbf16>
    %106 = vector.shape_cast %105 : vector<1x32x128xbf16> to vector<32x128xbf16>
    %cst_48 = arith.constant dense<0.000000e+00> : vector<16x128xf32>
    %107 = tpu.matmul %104, %106, %cst_48 {dimension_numbers = #tpu.dot_dimension_numbers<[1], [0], [0], [1], [0, 0, 1, 1], [], []>} : vector<16x32xbf16>, vector<32x128xbf16>, vector<16x128xf32> -> vector<16x128xf32>
    %108 = arith.addf %77, %107 : vector<16x128xf32>
    %109 = vector.extract_strided_slice %76 {offsets = [0, 32], sizes = [16, 32], strides = [1, 1]} : vector<16x384xf32> to vector<16x32xf32>
    %110 = vector.shape_cast %109 : vector<16x32xf32> to vector<2x8x32xf32>
    %111 = vector.extract_strided_slice %76 {offsets = [0, 160], sizes = [16, 32], strides = [1, 1]} : vector<16x384xf32> to vector<16x32xf32>
    %112 = vector.shape_cast %111 : vector<16x32xf32> to vector<2x8x32xf32>
    %113 = vector.extract_strided_slice %76 {offsets = [0, 288], sizes = [16, 32], strides = [1, 1]} : vector<16x384xf32> to vector<16x32xf32>
    %114 = vector.shape_cast %113 : vector<16x32xf32> to vector<2x8x32xf32>
    %115 = arith.truncf %110 : vector<2x8x32xf32> to vector<2x8x32xbf16>
    %116 = arith.truncf %112 : vector<2x8x32xf32> to vector<2x8x32xbf16>
    "tpu.trace_start"() <{level = 10 : i32, message = "nqd,nkd->nqk"}> : () -> ()
    %cst_49 = arith.constant dense<0.000000e+00> : vector<2x8x8xf32>
    %117 = tpu.matmul %115, %116, %cst_49 {dimension_numbers = #tpu.dot_dimension_numbers<[2], [2], [1], [1], [0, 0, 0, 1, 1, 1], [0], [0]>} : vector<2x8x32xbf16>, vector<2x8x32xbf16>, vector<2x8x8xf32> -> vector<2x8x8xf32>
    "tpu.trace_stop"() : () -> ()
    %118 = vector.shape_cast %46 : vector<8x8xf32> to vector<1x8x8xf32>
    %119 = vector.broadcast %118 : vector<1x8x8xf32> to vector<2x8x8xf32>
    %120 = arith.addf %117, %119 : vector<2x8x8xf32>
    %cst_50 = arith.constant dense<0xFF800000> : vector<2x8xf32>
    %121 = vector.multi_reduction <maximumf>, %120, %cst_50 [2] : vector<2x8x8xf32> to vector<2x8xf32>
    %122 = vector.shape_cast %121 : vector<2x8xf32> to vector<2x8x1xf32>
    %123 = vector.broadcast %122 : vector<2x8x1xf32> to vector<2x8x8xf32>
    %124 = arith.subf %120, %123 : vector<2x8x8xf32>
    %125 = math.exp %124 : vector<2x8x8xf32>
    %cst_51 = arith.constant dense<0.000000e+00> : vector<2x8xf32>
    %126 = vector.multi_reduction <add>, %125, %cst_51 [2] : vector<2x8x8xf32> to vector<2x8xf32>
    %127 = vector.shape_cast %126 : vector<2x8xf32> to vector<2x8x1xf32>
    %128 = tpu.reciprocal %127 {approx = true} : vector<2x8x1xf32> -> vector<2x8x1xf32>
    %129 = vector.broadcast %128 : vector<2x8x1xf32> to vector<2x8x8xf32>
    %130 = arith.mulf %125, %129 : vector<2x8x8xf32>
    %131 = arith.truncf %130 : vector<2x8x8xf32> to vector<2x8x8xbf16>
    %132 = arith.truncf %114 : vector<2x8x32xf32> to vector<2x8x32xbf16>
    "tpu.trace_start"() <{level = 10 : i32, message = "nqk,nkd->nqd"}> : () -> ()
    %cst_52 = arith.constant dense<0.000000e+00> : vector<2x8x32xf32>
    %133 = tpu.matmul %131, %132, %cst_52 {dimension_numbers = #tpu.dot_dimension_numbers<[2], [1], [1], [2], [0, 0, 0, 1, 1, 2], [0], [0]>} : vector<2x8x8xbf16>, vector<2x8x32xbf16>, vector<2x8x32xf32> -> vector<2x8x32xf32>
    "tpu.trace_stop"() : () -> ()
    %134 = vector.shape_cast %133 : vector<2x8x32xf32> to vector<16x32xf32>
    %135 = arith.truncf %134 : vector<16x32xf32> to vector<16x32xbf16>
    %c1 = arith.constant 1 : index
    %c0_53 = arith.constant 0 : index
    %c0_54 = arith.constant 0 : index
    %136 = vector.load %arg11[%c1, %c0_53, %c0_54] : memref<4x32x128xbf16, #tpu.memory_space<vmem>>, vector<1x32x128xbf16>
    %137 = vector.shape_cast %136 : vector<1x32x128xbf16> to vector<32x128xbf16>
    %cst_55 = arith.constant dense<0.000000e+00> : vector<16x128xf32>
    %138 = tpu.matmul %135, %137, %cst_55 {dimension_numbers = #tpu.dot_dimension_numbers<[1], [0], [0], [1], [0, 0, 1, 1], [], []>} : vector<16x32xbf16>, vector<32x128xbf16>, vector<16x128xf32> -> vector<16x128xf32>
    %139 = arith.addf %108, %138 : vector<16x128xf32>
    %140 = vector.extract_strided_slice %76 {offsets = [0, 64], sizes = [16, 32], strides = [1, 1]} : vector<16x384xf32> to vector<16x32xf32>
    %141 = vector.shape_cast %140 : vector<16x32xf32> to vector<2x8x32xf32>
    %142 = vector.extract_strided_slice %76 {offsets = [0, 192], sizes = [16, 32], strides = [1, 1]} : vector<16x384xf32> to vector<16x32xf32>
    %143 = vector.shape_cast %142 : vector<16x32xf32> to vector<2x8x32xf32>
    %144 = vector.extract_strided_slice %76 {offsets = [0, 320], sizes = [16, 32], strides = [1, 1]} : vector<16x384xf32> to vector<16x32xf32>
    %145 = vector.shape_cast %144 : vector<16x32xf32> to vector<2x8x32xf32>
    %146 = arith.truncf %141 : vector<2x8x32xf32> to vector<2x8x32xbf16>
    %147 = arith.truncf %143 : vector<2x8x32xf32> to vector<2x8x32xbf16>
    "tpu.trace_start"() <{level = 10 : i32, message = "nqd,nkd->nqk"}> : () -> ()
    %cst_56 = arith.constant dense<0.000000e+00> : vector<2x8x8xf32>
    %148 = tpu.matmul %146, %147, %cst_56 {dimension_numbers = #tpu.dot_dimension_numbers<[2], [2], [1], [1], [0, 0, 0, 1, 1, 1], [0], [0]>} : vector<2x8x32xbf16>, vector<2x8x32xbf16>, vector<2x8x8xf32> -> vector<2x8x8xf32>
    "tpu.trace_stop"() : () -> ()
    %149 = vector.shape_cast %46 : vector<8x8xf32> to vector<1x8x8xf32>
    %150 = vector.broadcast %149 : vector<1x8x8xf32> to vector<2x8x8xf32>
    %151 = arith.addf %148, %150 : vector<2x8x8xf32>
    %cst_57 = arith.constant dense<0xFF800000> : vector<2x8xf32>
    %152 = vector.multi_reduction <maximumf>, %151, %cst_57 [2] : vector<2x8x8xf32> to vector<2x8xf32>
    %153 = vector.shape_cast %152 : vector<2x8xf32> to vector<2x8x1xf32>
    %154 = vector.broadcast %153 : vector<2x8x1xf32> to vector<2x8x8xf32>
    %155 = arith.subf %151, %154 : vector<2x8x8xf32>
    %156 = math.exp %155 : vector<2x8x8xf32>
    %cst_58 = arith.constant dense<0.000000e+00> : vector<2x8xf32>
    %157 = vector.multi_reduction <add>, %156, %cst_58 [2] : vector<2x8x8xf32> to vector<2x8xf32>
    %158 = vector.shape_cast %157 : vector<2x8xf32> to vector<2x8x1xf32>
    %159 = tpu.reciprocal %158 {approx = true} : vector<2x8x1xf32> -> vector<2x8x1xf32>
    %160 = vector.broadcast %159 : vector<2x8x1xf32> to vector<2x8x8xf32>
    %161 = arith.mulf %156, %160 : vector<2x8x8xf32>
    %162 = arith.truncf %161 : vector<2x8x8xf32> to vector<2x8x8xbf16>
    %163 = arith.truncf %145 : vector<2x8x32xf32> to vector<2x8x32xbf16>
    "tpu.trace_start"() <{level = 10 : i32, message = "nqk,nkd->nqd"}> : () -> ()
    %cst_59 = arith.constant dense<0.000000e+00> : vector<2x8x32xf32>
    %164 = tpu.matmul %162, %163, %cst_59 {dimension_numbers = #tpu.dot_dimension_numbers<[2], [1], [1], [2], [0, 0, 0, 1, 1, 2], [0], [0]>} : vector<2x8x8xbf16>, vector<2x8x32xbf16>, vector<2x8x32xf32> -> vector<2x8x32xf32>
    "tpu.trace_stop"() : () -> ()
    %165 = vector.shape_cast %164 : vector<2x8x32xf32> to vector<16x32xf32>
    %166 = arith.truncf %165 : vector<16x32xf32> to vector<16x32xbf16>
    %c2 = arith.constant 2 : index
    %c0_60 = arith.constant 0 : index
    %c0_61 = arith.constant 0 : index
    %167 = vector.load %arg11[%c2, %c0_60, %c0_61] : memref<4x32x128xbf16, #tpu.memory_space<vmem>>, vector<1x32x128xbf16>
    %168 = vector.shape_cast %167 : vector<1x32x128xbf16> to vector<32x128xbf16>
    %cst_62 = arith.constant dense<0.000000e+00> : vector<16x128xf32>
    %169 = tpu.matmul %166, %168, %cst_62 {dimension_numbers = #tpu.dot_dimension_numbers<[1], [0], [0], [1], [0, 0, 1, 1], [], []>} : vector<16x32xbf16>, vector<32x128xbf16>, vector<16x128xf32> -> vector<16x128xf32>
    %170 = arith.addf %139, %169 : vector<16x128xf32>
    %171 = vector.extract_strided_slice %76 {offsets = [0, 96], sizes = [16, 32], strides = [1, 1]} : vector<16x384xf32> to vector<16x32xf32>
    %172 = vector.shape_cast %171 : vector<16x32xf32> to vector<2x8x32xf32>
    %173 = vector.extract_strided_slice %76 {offsets = [0, 224], sizes = [16, 32], strides = [1, 1]} : vector<16x384xf32> to vector<16x32xf32>
    %174 = vector.shape_cast %173 : vector<16x32xf32> to vector<2x8x32xf32>
    %175 = vector.extract_strided_slice %76 {offsets = [0, 352], sizes = [16, 32], strides = [1, 1]} : vector<16x384xf32> to vector<16x32xf32>
    %176 = vector.shape_cast %175 : vector<16x32xf32> to vector<2x8x32xf32>
    %177 = arith.truncf %172 : vector<2x8x32xf32> to vector<2x8x32xbf16>
    %178 = arith.truncf %174 : vector<2x8x32xf32> to vector<2x8x32xbf16>
    "tpu.trace_start"() <{level = 10 : i32, message = "nqd,nkd->nqk"}> : () -> ()
    %cst_63 = arith.constant dense<0.000000e+00> : vector<2x8x8xf32>
    %179 = tpu.matmul %177, %178, %cst_63 {dimension_numbers = #tpu.dot_dimension_numbers<[2], [2], [1], [1], [0, 0, 0, 1, 1, 1], [0], [0]>} : vector<2x8x32xbf16>, vector<2x8x32xbf16>, vector<2x8x8xf32> -> vector<2x8x8xf32>
    "tpu.trace_stop"() : () -> ()
    %180 = vector.shape_cast %46 : vector<8x8xf32> to vector<1x8x8xf32>
    %181 = vector.broadcast %180 : vector<1x8x8xf32> to vector<2x8x8xf32>
    %182 = arith.addf %179, %181 : vector<2x8x8xf32>
    %cst_64 = arith.constant dense<0xFF800000> : vector<2x8xf32>
    %183 = vector.multi_reduction <maximumf>, %182, %cst_64 [2] : vector<2x8x8xf32> to vector<2x8xf32>
    %184 = vector.shape_cast %183 : vector<2x8xf32> to vector<2x8x1xf32>
    %185 = vector.broadcast %184 : vector<2x8x1xf32> to vector<2x8x8xf32>
    %186 = arith.subf %182, %185 : vector<2x8x8xf32>
    %187 = math.exp %186 : vector<2x8x8xf32>
    %cst_65 = arith.constant dense<0.000000e+00> : vector<2x8xf32>
    %188 = vector.multi_reduction <add>, %187, %cst_65 [2] : vector<2x8x8xf32> to vector<2x8xf32>
    %189 = vector.shape_cast %188 : vector<2x8xf32> to vector<2x8x1xf32>
    %190 = tpu.reciprocal %189 {approx = true} : vector<2x8x1xf32> -> vector<2x8x1xf32>
    %191 = vector.broadcast %190 : vector<2x8x1xf32> to vector<2x8x8xf32>
    %192 = arith.mulf %187, %191 : vector<2x8x8xf32>
    %193 = arith.truncf %192 : vector<2x8x8xf32> to vector<2x8x8xbf16>
    %194 = arith.truncf %176 : vector<2x8x32xf32> to vector<2x8x32xbf16>
    "tpu.trace_start"() <{level = 10 : i32, message = "nqk,nkd->nqd"}> : () -> ()
    %cst_66 = arith.constant dense<0.000000e+00> : vector<2x8x32xf32>
    %195 = tpu.matmul %193, %194, %cst_66 {dimension_numbers = #tpu.dot_dimension_numbers<[2], [1], [1], [2], [0, 0, 0, 1, 1, 2], [0], [0]>} : vector<2x8x8xbf16>, vector<2x8x32xbf16>, vector<2x8x32xf32> -> vector<2x8x32xf32>
    "tpu.trace_stop"() : () -> ()
    %196 = vector.shape_cast %195 : vector<2x8x32xf32> to vector<16x32xf32>
    %197 = arith.truncf %196 : vector<16x32xf32> to vector<16x32xbf16>
    %c3 = arith.constant 3 : index
    %c0_67 = arith.constant 0 : index
    %c0_68 = arith.constant 0 : index
    %198 = vector.load %arg11[%c3, %c0_67, %c0_68] : memref<4x32x128xbf16, #tpu.memory_space<vmem>>, vector<1x32x128xbf16>
    %199 = vector.shape_cast %198 : vector<1x32x128xbf16> to vector<32x128xbf16>
    %cst_69 = arith.constant dense<0.000000e+00> : vector<16x128xf32>
    %200 = tpu.matmul %197, %199, %cst_69 {dimension_numbers = #tpu.dot_dimension_numbers<[1], [0], [0], [1], [0, 0, 1, 1], [], []>} : vector<16x32xbf16>, vector<32x128xbf16>, vector<16x128xf32> -> vector<16x128xf32>
    %201 = arith.addf %170, %200 : vector<16x128xf32>
    %202 = arith.addf %36, %201 : vector<16x128xf32>
    %c0_70 = arith.constant 0 : index
    %c0_71 = arith.constant 0 : index
    %203 = vector.load %arg12[%c0_70, %c0_71] : memref<1x128xf32, #tpu.memory_space<vmem>>, vector<1x128xf32>
    %204 = vector.broadcast %203 : vector<1x128xf32> to vector<16x128xf32>
    %205 = arith.addf %202, %204 : vector<16x128xf32>
    %c0_72 = arith.constant 0 : index
    %c0_73 = arith.constant 0 : index
    %206 = vector.load %arg13[%c0_72, %c0_73] : memref<1x128xf32, #tpu.memory_space<vmem>>, vector<1x128xf32>
    %c0_74 = arith.constant 0 : index
    %c0_75 = arith.constant 0 : index
    %207 = vector.load %arg14[%c0_74, %c0_75] : memref<1x128xf32, #tpu.memory_space<vmem>>, vector<1x128xf32>
    %cst_76 = arith.constant dense<0.000000e+00> : vector<16xf32>
    %208 = vector.multi_reduction <add>, %205, %cst_76 [1] : vector<16x128xf32> to vector<16xf32>
    %209 = vector.shape_cast %208 : vector<16xf32> to vector<16x1xf32>
    %cst_77 = arith.constant 1.280000e+02 : f32
    %210 = vector.broadcast %cst_77 : f32 to vector<16x1xf32>
    %211 = arith.divf %209, %210 : vector<16x1xf32>
    %212 = vector.broadcast %211 : vector<16x1xf32> to vector<16x128xf32>
    %213 = arith.subf %205, %212 : vector<16x128xf32>
    %214 = arith.mulf %213, %213 : vector<16x128xf32>
    %cst_78 = arith.constant dense<0.000000e+00> : vector<16xf32>
    %215 = vector.multi_reduction <add>, %214, %cst_78 [1] : vector<16x128xf32> to vector<16xf32>
    %216 = vector.shape_cast %215 : vector<16xf32> to vector<16x1xf32>
    %cst_79 = arith.constant 1.280000e+02 : f32
    %217 = vector.broadcast %cst_79 : f32 to vector<16x1xf32>
    %218 = arith.divf %216, %217 : vector<16x1xf32>
    %219 = vector.broadcast %211 : vector<16x1xf32> to vector<16x128xf32>
    %220 = arith.subf %205, %219 : vector<16x128xf32>
    %cst_80 = arith.constant 9.99999974E-6 : f32
    %221 = vector.broadcast %cst_80 : f32 to vector<16x1xf32>
    %222 = arith.addf %218, %221 : vector<16x1xf32>
    %223 = math.rsqrt %222 : vector<16x1xf32>
    %224 = vector.broadcast %223 : vector<16x1xf32> to vector<16x128xf32>
    %225 = arith.mulf %220, %224 : vector<16x128xf32>
    %226 = vector.broadcast %206 : vector<1x128xf32> to vector<16x128xf32>
    %227 = arith.mulf %225, %226 : vector<16x128xf32>
    %228 = vector.broadcast %207 : vector<1x128xf32> to vector<16x128xf32>
    %229 = arith.addf %227, %228 : vector<16x128xf32>
    %230 = arith.truncf %229 : vector<16x128xf32> to vector<16x128xbf16>
    %c0_81 = arith.constant 0 : index
    %c0_82 = arith.constant 0 : index
    %231 = vector.load %arg15[%c0_81, %c0_82] : memref<128x512xbf16, #tpu.memory_space<vmem>>, vector<128x512xbf16>
    %cst_83 = arith.constant dense<0.000000e+00> : vector<16x512xf32>
    %232 = tpu.matmul %230, %231, %cst_83 {dimension_numbers = #tpu.dot_dimension_numbers<[1], [0], [0], [1], [0, 0, 1, 1], [], []>} : vector<16x128xbf16>, vector<128x512xbf16>, vector<16x512xf32> -> vector<16x512xf32>
    %c0_84 = arith.constant 0 : index
    %c0_85 = arith.constant 0 : index
    %233 = vector.load %arg16[%c0_84, %c0_85] : memref<1x512xf32, #tpu.memory_space<vmem>>, vector<1x512xf32>
    %234 = vector.broadcast %233 : vector<1x512xf32> to vector<16x512xf32>
    %235 = arith.addf %232, %234 : vector<16x512xf32>
    %cst_86 = arith.constant 1.702000e+00 : f32
    %236 = vector.broadcast %cst_86 : f32 to vector<16x512xf32>
    %237 = arith.mulf %236, %235 : vector<16x512xf32>
    %238 = arith.negf %237 : vector<16x512xf32>
    %239 = math.exp %238 : vector<16x512xf32>
    %cst_87 = arith.constant 1.000000e+00 : f32
    %240 = vector.broadcast %cst_87 : f32 to vector<16x512xf32>
    %241 = arith.addf %240, %239 : vector<16x512xf32>
    %242 = arith.divf %240, %241 : vector<16x512xf32>
    %243 = arith.mulf %235, %242 : vector<16x512xf32>
    %244 = arith.truncf %243 : vector<16x512xf32> to vector<16x512xbf16>
    %c0_88 = arith.constant 0 : index
    %c0_89 = arith.constant 0 : index
    %245 = vector.load %arg17[%c0_88, %c0_89] : memref<512x128xbf16, #tpu.memory_space<vmem>>, vector<512x128xbf16>
    %cst_90 = arith.constant dense<0.000000e+00> : vector<16x128xf32>
    %246 = tpu.matmul %244, %245, %cst_90 {dimension_numbers = #tpu.dot_dimension_numbers<[1], [0], [0], [1], [0, 0, 1, 1], [], []>} : vector<16x512xbf16>, vector<512x128xbf16>, vector<16x128xf32> -> vector<16x128xf32>
    %c0_91 = arith.constant 0 : index
    %c0_92 = arith.constant 0 : index
    %247 = vector.load %arg18[%c0_91, %c0_92] : memref<1x128xf32, #tpu.memory_space<vmem>>, vector<1x128xf32>
    %248 = vector.broadcast %247 : vector<1x128xf32> to vector<16x128xf32>
    %249 = arith.addf %246, %248 : vector<16x128xf32>
    %250 = arith.addf %205, %249 : vector<16x128xf32>
    %251 = vector.shape_cast %250 : vector<16x128xf32> to vector<2x8x128xf32>
    %c1_93 = arith.constant 1 : index
    %c0_94 = arith.constant 0 : index
    %c0_95 = arith.constant 0 : index
    %c0_96 = arith.constant 0 : index
    %252 = vector.load %arg31[%c1_93, %c0_94, %c0_95, %c0_96] : memref<3x2x8x128xf32, #tpu.memory_space<vmem>>, vector<1x2x8x128xf32>
    %253 = vector.shape_cast %252 : vector<1x2x8x128xf32> to vector<2x8x128xf32>
    %254 = vector.shape_cast %251 : vector<2x8x128xf32> to vector<1x2x8x128xf32>
    tpu.vector_store %arg31[%c1_93, %c0_94, %c0_95, %c0_96], %254 {strides = array<i32>} : memref<3x2x8x128xf32, #tpu.memory_space<vmem>>, vector<1x2x8x128xf32>,
    %c0_97 = arith.constant 0 : index
    %c0_98 = arith.constant 0 : index
    %255 = vector.load %arg19[%c0_97, %c0_98] : memref<1x128xf32, #tpu.memory_space<vmem>>, vector<1x128xf32>
    %c0_99 = arith.constant 0 : index
    %c0_100 = arith.constant 0 : index
    %256 = vector.load %arg20[%c0_99, %c0_100] : memref<1x128xf32, #tpu.memory_space<vmem>>, vector<1x128xf32>
    %cst_101 = arith.constant dense<0.000000e+00> : vector<16xf32>
    %257 = vector.multi_reduction <add>, %250, %cst_101 [1] : vector<16x128xf32> to vector<16xf32>
    %258 = vector.shape_cast %257 : vector<16xf32> to vector<16x1xf32>
    %cst_102 = arith.constant 1.280000e+02 : f32
    %259 = vector.broadcast %cst_102 : f32 to vector<16x1xf32>
    %260 = arith.divf %258, %259 : vector<16x1xf32>
    %261 = vector.broadcast %260 : vector<16x1xf32> to vector<16x128xf32>
    %262 = arith.subf %250, %261 : vector<16x128xf32>
    %263 = arith.mulf %262, %262 : vector<16x128xf32>
    %cst_103 = arith.constant dense<0.000000e+00> : vector<16xf32>
    %264 = vector.multi_reduction <add>, %263, %cst_103 [1] : vector<16x128xf32> to vector<16xf32>
    %265 = vector.shape_cast %264 : vector<16xf32> to vector<16x1xf32>
    %cst_104 = arith.constant 1.280000e+02 : f32
    %266 = vector.broadcast %cst_104 : f32 to vector<16x1xf32>
    %267 = arith.divf %265, %266 : vector<16x1xf32>
    %268 = vector.broadcast %260 : vector<16x1xf32> to vector<16x128xf32>
    %269 = arith.subf %250, %268 : vector<16x128xf32>
    %cst_105 = arith.constant 9.99999974E-6 : f32
    %270 = vector.broadcast %cst_105 : f32 to vector<16x1xf32>
    %271 = arith.addf %267, %270 : vector<16x1xf32>
    %272 = math.rsqrt %271 : vector<16x1xf32>
    %273 = vector.broadcast %272 : vector<16x1xf32> to vector<16x128xf32>
    %274 = arith.mulf %269, %273 : vector<16x128xf32>
    %275 = vector.broadcast %255 : vector<1x128xf32> to vector<16x128xf32>
    %276 = arith.mulf %274, %275 : vector<16x128xf32>
    %277 = vector.broadcast %256 : vector<1x128xf32> to vector<16x128xf32>
    %278 = arith.addf %276, %277 : vector<16x128xf32>
    %279 = arith.truncf %278 : vector<16x128xf32> to vector<16x128xbf16>
    %c0_106 = arith.constant 0 : index
    %c0_107 = arith.constant 0 : index
    %280 = vector.load %arg21[%c0_106, %c0_107] : memref<128x384xbf16, #tpu.memory_space<vmem>>, vector<128x384xbf16>
    %cst_108 = arith.constant dense<0.000000e+00> : vector<16x384xf32>
    %281 = tpu.matmul %279, %280, %cst_108 {dimension_numbers = #tpu.dot_dimension_numbers<[1], [0], [0], [1], [0, 0, 1, 1], [], []>} : vector<16x128xbf16>, vector<128x384xbf16>, vector<16x384xf32> -> vector<16x384xf32>
    %c0_109 = arith.constant 0 : index
    %c0_110 = arith.constant 0 : index
    %282 = vector.load %arg22[%c0_109, %c0_110] : memref<1x384xf32, #tpu.memory_space<vmem>>, vector<1x384xf32>
    %283 = vector.broadcast %282 : vector<1x384xf32> to vector<16x384xf32>
    %284 = arith.addf %281, %283 : vector<16x384xf32>
    %cst_111 = arith.constant 0.000000e+00 : f32
    %285 = vector.broadcast %cst_111 : f32 to vector<16x128xf32>
    %286 = vector.extract_strided_slice %284 {offsets = [0, 0], sizes = [16, 32], strides = [1, 1]} : vector<16x384xf32> to vector<16x32xf32>
    %287 = vector.shape_cast %286 : vector<16x32xf32> to vector<2x8x32xf32>
    %288 = vector.extract_strided_slice %284 {offsets = [0, 128], sizes = [16, 32], strides = [1, 1]} : vector<16x384xf32> to vector<16x32xf32>
    %289 = vector.shape_cast %288 : vector<16x32xf32> to vector<2x8x32xf32>
    %290 = vector.extract_strided_slice %284 {offsets = [0, 256], sizes = [16, 32], strides = [1, 1]} : vector<16x384xf32> to vector<16x32xf32>
    %291 = vector.shape_cast %290 : vector<16x32xf32> to vector<2x8x32xf32>
    %292 = arith.truncf %287 : vector<2x8x32xf32> to vector<2x8x32xbf16>
    %293 = arith.truncf %289 : vector<2x8x32xf32> to vector<2x8x32xbf16>
    "tpu.trace_start"() <{level = 10 : i32, message = "nqd,nkd->nqk"}> : () -> ()
    %cst_112 = arith.constant dense<0.000000e+00> : vector<2x8x8xf32>
    %294 = tpu.matmul %292, %293, %cst_112 {dimension_numbers = #tpu.dot_dimension_numbers<[2], [2], [1], [1], [0, 0, 0, 1, 1, 1], [0], [0]>} : vector<2x8x32xbf16>, vector<2x8x32xbf16>, vector<2x8x8xf32> -> vector<2x8x8xf32>
    "tpu.trace_stop"() : () -> ()
    %295 = vector.shape_cast %46 : vector<8x8xf32> to vector<1x8x8xf32>
    %296 = vector.broadcast %295 : vector<1x8x8xf32> to vector<2x8x8xf32>
    %297 = arith.addf %294, %296 : vector<2x8x8xf32>
    %cst_113 = arith.constant dense<0xFF800000> : vector<2x8xf32>
    %298 = vector.multi_reduction <maximumf>, %297, %cst_113 [2] : vector<2x8x8xf32> to vector<2x8xf32>
    %299 = vector.shape_cast %298 : vector<2x8xf32> to vector<2x8x1xf32>
    %300 = vector.broadcast %299 : vector<2x8x1xf32> to vector<2x8x8xf32>
    %301 = arith.subf %297, %300 : vector<2x8x8xf32>
    %302 = math.exp %301 : vector<2x8x8xf32>
    %cst_114 = arith.constant dense<0.000000e+00> : vector<2x8xf32>
    %303 = vector.multi_reduction <add>, %302, %cst_114 [2] : vector<2x8x8xf32> to vector<2x8xf32>
    %304 = vector.shape_cast %303 : vector<2x8xf32> to vector<2x8x1xf32>
    %305 = tpu.reciprocal %304 {approx = true} : vector<2x8x1xf32> -> vector<2x8x1xf32>
    %306 = vector.broadcast %305 : vector<2x8x1xf32> to vector<2x8x8xf32>
    %307 = arith.mulf %302, %306 : vector<2x8x8xf32>
    %308 = arith.truncf %307 : vector<2x8x8xf32> to vector<2x8x8xbf16>
    %309 = arith.truncf %291 : vector<2x8x32xf32> to vector<2x8x32xbf16>
    "tpu.trace_start"() <{level = 10 : i32, message = "nqk,nkd->nqd"}> : () -> ()
    %cst_115 = arith.constant dense<0.000000e+00> : vector<2x8x32xf32>
    %310 = tpu.matmul %308, %309, %cst_115 {dimension_numbers = #tpu.dot_dimension_numbers<[2], [1], [1], [2], [0, 0, 0, 1, 1, 2], [0], [0]>} : vector<2x8x8xbf16>, vector<2x8x32xbf16>, vector<2x8x32xf32> -> vector<2x8x32xf32>
    "tpu.trace_stop"() : () -> ()
    %311 = vector.shape_cast %310 : vector<2x8x32xf32> to vector<16x32xf32>
    %312 = arith.truncf %311 : vector<16x32xf32> to vector<16x32xbf16>
    %c0_116 = arith.constant 0 : index
    %c0_117 = arith.constant 0 : index
    %c0_118 = arith.constant 0 : index
    %313 = vector.load %arg23[%c0_116, %c0_117, %c0_118] : memref<4x32x128xbf16, #tpu.memory_space<vmem>>, vector<1x32x128xbf16>
    %314 = vector.shape_cast %313 : vector<1x32x128xbf16> to vector<32x128xbf16>
    %cst_119 = arith.constant dense<0.000000e+00> : vector<16x128xf32>
    %315 = tpu.matmul %312, %314, %cst_119 {dimension_numbers = #tpu.dot_dimension_numbers<[1], [0], [0], [1], [0, 0, 1, 1], [], []>} : vector<16x32xbf16>, vector<32x128xbf16>, vector<16x128xf32> -> vector<16x128xf32>
    %316 = arith.addf %285, %315 : vector<16x128xf32>
    %317 = vector.extract_strided_slice %284 {offsets = [0, 32], sizes = [16, 32], strides = [1, 1]} : vector<16x384xf32> to vector<16x32xf32>
    %318 = vector.shape_cast %317 : vector<16x32xf32> to vector<2x8x32xf32>
    %319 = vector.extract_strided_slice %284 {offsets = [0, 160], sizes = [16, 32], strides = [1, 1]} : vector<16x384xf32> to vector<16x32xf32>
    %320 = vector.shape_cast %319 : vector<16x32xf32> to vector<2x8x32xf32>
    %321 = vector.extract_strided_slice %284 {offsets = [0, 288], sizes = [16, 32], strides = [1, 1]} : vector<16x384xf32> to vector<16x32xf32>
    %322 = vector.shape_cast %321 : vector<16x32xf32> to vector<2x8x32xf32>
    %323 = arith.truncf %318 : vector<2x8x32xf32> to vector<2x8x32xbf16>
    %324 = arith.truncf %320 : vector<2x8x32xf32> to vector<2x8x32xbf16>
    "tpu.trace_start"() <{level = 10 : i32, message = "nqd,nkd->nqk"}> : () -> ()
    %cst_120 = arith.constant dense<0.000000e+00> : vector<2x8x8xf32>
    %325 = tpu.matmul %323, %324, %cst_120 {dimension_numbers = #tpu.dot_dimension_numbers<[2], [2], [1], [1], [0, 0, 0, 1, 1, 1], [0], [0]>} : vector<2x8x32xbf16>, vector<2x8x32xbf16>, vector<2x8x8xf32> -> vector<2x8x8xf32>
    "tpu.trace_stop"() : () -> ()
    %326 = vector.shape_cast %46 : vector<8x8xf32> to vector<1x8x8xf32>
    %327 = vector.broadcast %326 : vector<1x8x8xf32> to vector<2x8x8xf32>
    %328 = arith.addf %325, %327 : vector<2x8x8xf32>
    %cst_121 = arith.constant dense<0xFF800000> : vector<2x8xf32>
    %329 = vector.multi_reduction <maximumf>, %328, %cst_121 [2] : vector<2x8x8xf32> to vector<2x8xf32>
    %330 = vector.shape_cast %329 : vector<2x8xf32> to vector<2x8x1xf32>
    %331 = vector.broadcast %330 : vector<2x8x1xf32> to vector<2x8x8xf32>
    %332 = arith.subf %328, %331 : vector<2x8x8xf32>
    %333 = math.exp %332 : vector<2x8x8xf32>
    %cst_122 = arith.constant dense<0.000000e+00> : vector<2x8xf32>
    %334 = vector.multi_reduction <add>, %333, %cst_122 [2] : vector<2x8x8xf32> to vector<2x8xf32>
    %335 = vector.shape_cast %334 : vector<2x8xf32> to vector<2x8x1xf32>
    %336 = tpu.reciprocal %335 {approx = true} : vector<2x8x1xf32> -> vector<2x8x1xf32>
    %337 = vector.broadcast %336 : vector<2x8x1xf32> to vector<2x8x8xf32>
    %338 = arith.mulf %333, %337 : vector<2x8x8xf32>
    %339 = arith.truncf %338 : vector<2x8x8xf32> to vector<2x8x8xbf16>
    %340 = arith.truncf %322 : vector<2x8x32xf32> to vector<2x8x32xbf16>
    "tpu.trace_start"() <{level = 10 : i32, message = "nqk,nkd->nqd"}> : () -> ()
    %cst_123 = arith.constant dense<0.000000e+00> : vector<2x8x32xf32>
    %341 = tpu.matmul %339, %340, %cst_123 {dimension_numbers = #tpu.dot_dimension_numbers<[2], [1], [1], [2], [0, 0, 0, 1, 1, 2], [0], [0]>} : vector<2x8x8xbf16>, vector<2x8x32xbf16>, vector<2x8x32xf32> -> vector<2x8x32xf32>
    "tpu.trace_stop"() : () -> ()
    %342 = vector.shape_cast %341 : vector<2x8x32xf32> to vector<16x32xf32>
    %343 = arith.truncf %342 : vector<16x32xf32> to vector<16x32xbf16>
    %c1_124 = arith.constant 1 : index
    %c0_125 = arith.constant 0 : index
    %c0_126 = arith.constant 0 : index
    %344 = vector.load %arg23[%c1_124, %c0_125, %c0_126] : memref<4x32x128xbf16, #tpu.memory_space<vmem>>, vector<1x32x128xbf16>
    %345 = vector.shape_cast %344 : vector<1x32x128xbf16> to vector<32x128xbf16>
    %cst_127 = arith.constant dense<0.000000e+00> : vector<16x128xf32>
    %346 = tpu.matmul %343, %345, %cst_127 {dimension_numbers = #tpu.dot_dimension_numbers<[1], [0], [0], [1], [0, 0, 1, 1], [], []>} : vector<16x32xbf16>, vector<32x128xbf16>, vector<16x128xf32> -> vector<16x128xf32>
    %347 = arith.addf %316, %346 : vector<16x128xf32>
    %348 = vector.extract_strided_slice %284 {offsets = [0, 64], sizes = [16, 32], strides = [1, 1]} : vector<16x384xf32> to vector<16x32xf32>
    %349 = vector.shape_cast %348 : vector<16x32xf32> to vector<2x8x32xf32>
    %350 = vector.extract_strided_slice %284 {offsets = [0, 192], sizes = [16, 32], strides = [1, 1]} : vector<16x384xf32> to vector<16x32xf32>
    %351 = vector.shape_cast %350 : vector<16x32xf32> to vector<2x8x32xf32>
    %352 = vector.extract_strided_slice %284 {offsets = [0, 320], sizes = [16, 32], strides = [1, 1]} : vector<16x384xf32> to vector<16x32xf32>
    %353 = vector.shape_cast %352 : vector<16x32xf32> to vector<2x8x32xf32>
    %354 = arith.truncf %349 : vector<2x8x32xf32> to vector<2x8x32xbf16>
    %355 = arith.truncf %351 : vector<2x8x32xf32> to vector<2x8x32xbf16>
    "tpu.trace_start"() <{level = 10 : i32, message = "nqd,nkd->nqk"}> : () -> ()
    %cst_128 = arith.constant dense<0.000000e+00> : vector<2x8x8xf32>
    %356 = tpu.matmul %354, %355, %cst_128 {dimension_numbers = #tpu.dot_dimension_numbers<[2], [2], [1], [1], [0, 0, 0, 1, 1, 1], [0], [0]>} : vector<2x8x32xbf16>, vector<2x8x32xbf16>, vector<2x8x8xf32> -> vector<2x8x8xf32>
    "tpu.trace_stop"() : () -> ()
    %357 = vector.shape_cast %46 : vector<8x8xf32> to vector<1x8x8xf32>
    %358 = vector.broadcast %357 : vector<1x8x8xf32> to vector<2x8x8xf32>
    %359 = arith.addf %356, %358 : vector<2x8x8xf32>
    %cst_129 = arith.constant dense<0xFF800000> : vector<2x8xf32>
    %360 = vector.multi_reduction <maximumf>, %359, %cst_129 [2] : vector<2x8x8xf32> to vector<2x8xf32>
    %361 = vector.shape_cast %360 : vector<2x8xf32> to vector<2x8x1xf32>
    %362 = vector.broadcast %361 : vector<2x8x1xf32> to vector<2x8x8xf32>
    %363 = arith.subf %359, %362 : vector<2x8x8xf32>
    %364 = math.exp %363 : vector<2x8x8xf32>
    %cst_130 = arith.constant dense<0.000000e+00> : vector<2x8xf32>
    %365 = vector.multi_reduction <add>, %364, %cst_130 [2] : vector<2x8x8xf32> to vector<2x8xf32>
    %366 = vector.shape_cast %365 : vector<2x8xf32> to vector<2x8x1xf32>
    %367 = tpu.reciprocal %366 {approx = true} : vector<2x8x1xf32> -> vector<2x8x1xf32>
    %368 = vector.broadcast %367 : vector<2x8x1xf32> to vector<2x8x8xf32>
    %369 = arith.mulf %364, %368 : vector<2x8x8xf32>
    %370 = arith.truncf %369 : vector<2x8x8xf32> to vector<2x8x8xbf16>
    %371 = arith.truncf %353 : vector<2x8x32xf32> to vector<2x8x32xbf16>
    "tpu.trace_start"() <{level = 10 : i32, message = "nqk,nkd->nqd"}> : () -> ()
    %cst_131 = arith.constant dense<0.000000e+00> : vector<2x8x32xf32>
    %372 = tpu.matmul %370, %371, %cst_131 {dimension_numbers = #tpu.dot_dimension_numbers<[2], [1], [1], [2], [0, 0, 0, 1, 1, 2], [0], [0]>} : vector<2x8x8xbf16>, vector<2x8x32xbf16>, vector<2x8x32xf32> -> vector<2x8x32xf32>
    "tpu.trace_stop"() : () -> ()
    %373 = vector.shape_cast %372 : vector<2x8x32xf32> to vector<16x32xf32>
    %374 = arith.truncf %373 : vector<16x32xf32> to vector<16x32xbf16>
    %c2_132 = arith.constant 2 : index
    %c0_133 = arith.constant 0 : index
    %c0_134 = arith.constant 0 : index
    %375 = vector.load %arg23[%c2_132, %c0_133, %c0_134] : memref<4x32x128xbf16, #tpu.memory_space<vmem>>, vector<1x32x128xbf16>
    %376 = vector.shape_cast %375 : vector<1x32x128xbf16> to vector<32x128xbf16>
    %cst_135 = arith.constant dense<0.000000e+00> : vector<16x128xf32>
    %377 = tpu.matmul %374, %376, %cst_135 {dimension_numbers = #tpu.dot_dimension_numbers<[1], [0], [0], [1], [0, 0, 1, 1], [], []>} : vector<16x32xbf16>, vector<32x128xbf16>, vector<16x128xf32> -> vector<16x128xf32>
    %378 = arith.addf %347, %377 : vector<16x128xf32>
    %379 = vector.extract_strided_slice %284 {offsets = [0, 96], sizes = [16, 32], strides = [1, 1]} : vector<16x384xf32> to vector<16x32xf32>
    %380 = vector.shape_cast %379 : vector<16x32xf32> to vector<2x8x32xf32>
    %381 = vector.extract_strided_slice %284 {offsets = [0, 224], sizes = [16, 32], strides = [1, 1]} : vector<16x384xf32> to vector<16x32xf32>
    %382 = vector.shape_cast %381 : vector<16x32xf32> to vector<2x8x32xf32>
    %383 = vector.extract_strided_slice %284 {offsets = [0, 352], sizes = [16, 32], strides = [1, 1]} : vector<16x384xf32> to vector<16x32xf32>
    %384 = vector.shape_cast %383 : vector<16x32xf32> to vector<2x8x32xf32>
    %385 = arith.truncf %380 : vector<2x8x32xf32> to vector<2x8x32xbf16>
    %386 = arith.truncf %382 : vector<2x8x32xf32> to vector<2x8x32xbf16>
    "tpu.trace_start"() <{level = 10 : i32, message = "nqd,nkd->nqk"}> : () -> ()
    %cst_136 = arith.constant dense<0.000000e+00> : vector<2x8x8xf32>
    %387 = tpu.matmul %385, %386, %cst_136 {dimension_numbers = #tpu.dot_dimension_numbers<[2], [2], [1], [1], [0, 0, 0, 1, 1, 1], [0], [0]>} : vector<2x8x32xbf16>, vector<2x8x32xbf16>, vector<2x8x8xf32> -> vector<2x8x8xf32>
    "tpu.trace_stop"() : () -> ()
    %388 = vector.shape_cast %46 : vector<8x8xf32> to vector<1x8x8xf32>
    %389 = vector.broadcast %388 : vector<1x8x8xf32> to vector<2x8x8xf32>
    %390 = arith.addf %387, %389 : vector<2x8x8xf32>
    %cst_137 = arith.constant dense<0xFF800000> : vector<2x8xf32>
    %391 = vector.multi_reduction <maximumf>, %390, %cst_137 [2] : vector<2x8x8xf32> to vector<2x8xf32>
    %392 = vector.shape_cast %391 : vector<2x8xf32> to vector<2x8x1xf32>
    %393 = vector.broadcast %392 : vector<2x8x1xf32> to vector<2x8x8xf32>
    %394 = arith.subf %390, %393 : vector<2x8x8xf32>
    %395 = math.exp %394 : vector<2x8x8xf32>
    %cst_138 = arith.constant dense<0.000000e+00> : vector<2x8xf32>
    %396 = vector.multi_reduction <add>, %395, %cst_138 [2] : vector<2x8x8xf32> to vector<2x8xf32>
    %397 = vector.shape_cast %396 : vector<2x8xf32> to vector<2x8x1xf32>
    %398 = tpu.reciprocal %397 {approx = true} : vector<2x8x1xf32> -> vector<2x8x1xf32>
    %399 = vector.broadcast %398 : vector<2x8x1xf32> to vector<2x8x8xf32>
    %400 = arith.mulf %395, %399 : vector<2x8x8xf32>
    %401 = arith.truncf %400 : vector<2x8x8xf32> to vector<2x8x8xbf16>
    %402 = arith.truncf %384 : vector<2x8x32xf32> to vector<2x8x32xbf16>
    "tpu.trace_start"() <{level = 10 : i32, message = "nqk,nkd->nqd"}> : () -> ()
    %cst_139 = arith.constant dense<0.000000e+00> : vector<2x8x32xf32>
    %403 = tpu.matmul %401, %402, %cst_139 {dimension_numbers = #tpu.dot_dimension_numbers<[2], [1], [1], [2], [0, 0, 0, 1, 1, 2], [0], [0]>} : vector<2x8x8xbf16>, vector<2x8x32xbf16>, vector<2x8x32xf32> -> vector<2x8x32xf32>
    "tpu.trace_stop"() : () -> ()
    %404 = vector.shape_cast %403 : vector<2x8x32xf32> to vector<16x32xf32>
    %405 = arith.truncf %404 : vector<16x32xf32> to vector<16x32xbf16>
    %c3_140 = arith.constant 3 : index
    %c0_141 = arith.constant 0 : index
    %c0_142 = arith.constant 0 : index
    %406 = vector.load %arg23[%c3_140, %c0_141, %c0_142] : memref<4x32x128xbf16, #tpu.memory_space<vmem>>, vector<1x32x128xbf16>
    %407 = vector.shape_cast %406 : vector<1x32x128xbf16> to vector<32x128xbf16>
    %cst_143 = arith.constant dense<0.000000e+00> : vector<16x128xf32>
    %408 = tpu.matmul %405, %407, %cst_143 {dimension_numbers = #tpu.dot_dimension_numbers<[1], [0], [0], [1], [0, 0, 1, 1], [], []>} : vector<16x32xbf16>, vector<32x128xbf16>, vector<16x128xf32> -> vector<16x128xf32>
    %409 = arith.addf %378, %408 : vector<16x128xf32>
    %410 = arith.addf %250, %409 : vector<16x128xf32>
    %c0_144 = arith.constant 0 : index
    %c0_145 = arith.constant 0 : index
    %411 = vector.load %arg24[%c0_144, %c0_145] : memref<1x128xf32, #tpu.memory_space<vmem>>, vector<1x128xf32>
    %412 = vector.broadcast %411 : vector<1x128xf32> to vector<16x128xf32>
    %413 = arith.addf %410, %412 : vector<16x128xf32>
    %c0_146 = arith.constant 0 : index
    %c0_147 = arith.constant 0 : index
    %414 = vector.load %arg25[%c0_146, %c0_147] : memref<1x128xf32, #tpu.memory_space<vmem>>, vector<1x128xf32>
    %c0_148 = arith.constant 0 : index
    %c0_149 = arith.constant 0 : index
    %415 = vector.load %arg26[%c0_148, %c0_149] : memref<1x128xf32, #tpu.memory_space<vmem>>, vector<1x128xf32>
    %cst_150 = arith.constant dense<0.000000e+00> : vector<16xf32>
    %416 = vector.multi_reduction <add>, %413, %cst_150 [1] : vector<16x128xf32> to vector<16xf32>
    %417 = vector.shape_cast %416 : vector<16xf32> to vector<16x1xf32>
    %cst_151 = arith.constant 1.280000e+02 : f32
    %418 = vector.broadcast %cst_151 : f32 to vector<16x1xf32>
    %419 = arith.divf %417, %418 : vector<16x1xf32>
    %420 = vector.broadcast %419 : vector<16x1xf32> to vector<16x128xf32>
    %421 = arith.subf %413, %420 : vector<16x128xf32>
    %422 = arith.mulf %421, %421 : vector<16x128xf32>
    %cst_152 = arith.constant dense<0.000000e+00> : vector<16xf32>
    %423 = vector.multi_reduction <add>, %422, %cst_152 [1] : vector<16x128xf32> to vector<16xf32>
    %424 = vector.shape_cast %423 : vector<16xf32> to vector<16x1xf32>
    %cst_153 = arith.constant 1.280000e+02 : f32
    %425 = vector.broadcast %cst_153 : f32 to vector<16x1xf32>
    %426 = arith.divf %424, %425 : vector<16x1xf32>
    %427 = vector.broadcast %419 : vector<16x1xf32> to vector<16x128xf32>
    %428 = arith.subf %413, %427 : vector<16x128xf32>
    %cst_154 = arith.constant 9.99999974E-6 : f32
    %429 = vector.broadcast %cst_154 : f32 to vector<16x1xf32>
    %430 = arith.addf %426, %429 : vector<16x1xf32>
    %431 = math.rsqrt %430 : vector<16x1xf32>
    %432 = vector.broadcast %431 : vector<16x1xf32> to vector<16x128xf32>
    %433 = arith.mulf %428, %432 : vector<16x128xf32>
    %434 = vector.broadcast %414 : vector<1x128xf32> to vector<16x128xf32>
    %435 = arith.mulf %433, %434 : vector<16x128xf32>
    %436 = vector.broadcast %415 : vector<1x128xf32> to vector<16x128xf32>
    %437 = arith.addf %435, %436 : vector<16x128xf32>
    %438 = arith.truncf %437 : vector<16x128xf32> to vector<16x128xbf16>
    %c0_155 = arith.constant 0 : index
    %c0_156 = arith.constant 0 : index
    %439 = vector.load %arg27[%c0_155, %c0_156] : memref<128x512xbf16, #tpu.memory_space<vmem>>, vector<128x512xbf16>
    %cst_157 = arith.constant dense<0.000000e+00> : vector<16x512xf32>
    %440 = tpu.matmul %438, %439, %cst_157 {dimension_numbers = #tpu.dot_dimension_numbers<[1], [0], [0], [1], [0, 0, 1, 1], [], []>} : vector<16x128xbf16>, vector<128x512xbf16>, vector<16x512xf32> -> vector<16x512xf32>
    %c0_158 = arith.constant 0 : index
    %c0_159 = arith.constant 0 : index
    %441 = vector.load %arg28[%c0_158, %c0_159] : memref<1x512xf32, #tpu.memory_space<vmem>>, vector<1x512xf32>
    %442 = vector.broadcast %441 : vector<1x512xf32> to vector<16x512xf32>
    %443 = arith.addf %440, %442 : vector<16x512xf32>
    %cst_160 = arith.constant 1.702000e+00 : f32
    %444 = vector.broadcast %cst_160 : f32 to vector<16x512xf32>
    %445 = arith.mulf %444, %443 : vector<16x512xf32>
    %446 = arith.negf %445 : vector<16x512xf32>
    %447 = math.exp %446 : vector<16x512xf32>
    %cst_161 = arith.constant 1.000000e+00 : f32
    %448 = vector.broadcast %cst_161 : f32 to vector<16x512xf32>
    %449 = arith.addf %448, %447 : vector<16x512xf32>
    %450 = arith.divf %448, %449 : vector<16x512xf32>
    %451 = arith.mulf %443, %450 : vector<16x512xf32>
    %452 = arith.truncf %451 : vector<16x512xf32> to vector<16x512xbf16>
    %c0_162 = arith.constant 0 : index
    %c0_163 = arith.constant 0 : index
    %453 = vector.load %arg29[%c0_162, %c0_163] : memref<512x128xbf16, #tpu.memory_space<vmem>>, vector<512x128xbf16>
    %cst_164 = arith.constant dense<0.000000e+00> : vector<16x128xf32>
    %454 = tpu.matmul %452, %453, %cst_164 {dimension_numbers = #tpu.dot_dimension_numbers<[1], [0], [0], [1], [0, 0, 1, 1], [], []>} : vector<16x512xbf16>, vector<512x128xbf16>, vector<16x128xf32> -> vector<16x128xf32>
    %c0_165 = arith.constant 0 : index
    %c0_166 = arith.constant 0 : index
    %455 = vector.load %arg30[%c0_165, %c0_166] : memref<1x128xf32, #tpu.memory_space<vmem>>, vector<1x128xf32>
    %456 = vector.broadcast %455 : vector<1x128xf32> to vector<16x128xf32>
    %457 = arith.addf %454, %456 : vector<16x128xf32>
    %458 = arith.addf %413, %457 : vector<16x128xf32>
    %459 = vector.shape_cast %458 : vector<16x128xf32> to vector<2x8x128xf32>
    %c2_167 = arith.constant 2 : index
    %c0_168 = arith.constant 0 : index
    %c0_169 = arith.constant 0 : index
    %c0_170 = arith.constant 0 : index
    %460 = vector.load %arg31[%c2_167, %c0_168, %c0_169, %c0_170] : memref<3x2x8x128xf32, #tpu.memory_space<vmem>>, vector<1x2x8x128xf32>
    %461 = vector.shape_cast %460 : vector<1x2x8x128xf32> to vector<2x8x128xf32>
    %462 = vector.shape_cast %459 : vector<2x8x128xf32> to vector<1x2x8x128xf32>
    tpu.vector_store %arg31[%c2_167, %c0_168, %c0_169, %c0_170], %462 {strides = array<i32>} : memref<3x2x8x128xf32, #tpu.memory_space<vmem>>, vector<1x2x8x128xf32>,
    return
  }
  func.func @transform_0(%arg0: i32) -> (i32, i32) {
    %c0_i32 = arith.constant 0 : i32
    %c0_i32_0 = arith.constant 0 : i32
    return %arg0, %c0_i32 : i32, i32
  }
  func.func @transform_1(%arg0: i32) -> (i32, i32) {
    %c0_i32 = arith.constant 0 : i32
    %c0_i32_0 = arith.constant 0 : i32
    %c0_i32_1 = arith.constant 0 : i32
    return %c0_i32, %c0_i32_0 : i32, i32
  }
  func.func @transform_2(%arg0: i32) -> (i32, i32) {
    %c0_i32 = arith.constant 0 : i32
    %c0_i32_0 = arith.constant 0 : i32
    %c0_i32_1 = arith.constant 0 : i32
    return %c0_i32, %c0_i32_0 : i32, i32
  }
  func.func @transform_3(%arg0: i32) -> (i32, i32) {
    %c0_i32 = arith.constant 0 : i32
    %c0_i32_0 = arith.constant 0 : i32
    %c0_i32_1 = arith.constant 0 : i32
    return %c0_i32, %c0_i32_0 : i32, i32
  }
  func.func @transform_4(%arg0: i32) -> (i32, i32) {
    %c0_i32 = arith.constant 0 : i32
    %c0_i32_0 = arith.constant 0 : i32
    %c0_i32_1 = arith.constant 0 : i32
    return %c0_i32, %c0_i32_0 : i32, i32
  }
  func.func @transform_5(%arg0: i32) -> (i32, i32) {
    %c0_i32 = arith.constant 0 : i32
    %c0_i32_0 = arith.constant 0 : i32
    %c0_i32_1 = arith.constant 0 : i32
    return %c0_i32, %c0_i32_0 : i32, i32
  }
  func.func @transform_6(%arg0: i32) -> (i32, i32) {
    %c0_i32 = arith.constant 0 : i32
    %c0_i32_0 = arith.constant 0 : i32
    %c0_i32_1 = arith.constant 0 : i32
    return %c0_i32, %c0_i32_0 : i32, i32
  }
  func.func @transform_7(%arg0: i32) -> (i32, i32) {
    %c0_i32 = arith.constant 0 : i32
    %c0_i32_0 = arith.constant 0 : i32
    %c0_i32_1 = arith.constant 0 : i32
    return %c0_i32, %c0_i32_0 : i32, i32
  }
  func.func @transform_8(%arg0: i32) -> (i32, i32) {
    %c0_i32 = arith.constant 0 : i32
    %c0_i32_0 = arith.constant 0 : i32
    %c0_i32_1 = arith.constant 0 : i32
    return %c0_i32, %c0_i32_0 : i32, i32
  }
  func.func @transform_9(%arg0: i32) -> (i32, i32) {
    %c0_i32 = arith.constant 0 : i32
    %c0_i32_0 = arith.constant 0 : i32
    %c0_i32_1 = arith.constant 0 : i32
    return %c0_i32, %c0_i32_0 : i32, i32
  }
  func.func @transform_10(%arg0: i32) -> (i32, i32, i32) {
    %c0_i32 = arith.constant 0 : i32
    %c0_i32_0 = arith.constant 0 : i32
    %c0_i32_1 = arith.constant 0 : i32
    %c0_i32_2 = arith.constant 0 : i32
    return %c0_i32, %c0_i32_0, %c0_i32_1 : i32, i32, i32
  }
  func.func @transform_11(%arg0: i32) -> (i32, i32) {
    %c0_i32 = arith.constant 0 : i32
    %c0_i32_0 = arith.constant 0 : i32
    %c0_i32_1 = arith.constant 0 : i32
    return %c0_i32, %c0_i32_0 : i32, i32
  }
  func.func @transform_12(%arg0: i32) -> (i32, i32) {
    %c0_i32 = arith.constant 0 : i32
    %c0_i32_0 = arith.constant 0 : i32
    %c0_i32_1 = arith.constant 0 : i32
    return %c0_i32, %c0_i32_0 : i32, i32
  }
  func.func @transform_13(%arg0: i32) -> (i32, i32) {
    %c0_i32 = arith.constant 0 : i32
    %c0_i32_0 = arith.constant 0 : i32
    %c0_i32_1 = arith.constant 0 : i32
    return %c0_i32, %c0_i32_0 : i32, i32
  }
  func.func @transform_14(%arg0: i32) -> (i32, i32) {
    %c0_i32 = arith.constant 0 : i32
    %c0_i32_0 = arith.constant 0 : i32
    %c0_i32_1 = arith.constant 0 : i32
    return %c0_i32, %c0_i32_0 : i32, i32
  }
  func.func @transform_15(%arg0: i32) -> (i32, i32) {
    %c0_i32 = arith.constant 0 : i32
    %c0_i32_0 = arith.constant 0 : i32
    %c0_i32_1 = arith.constant 0 : i32
    return %c0_i32, %c0_i32_0 : i32, i32
  }
  func.func @transform_16(%arg0: i32) -> (i32, i32) {
    %c0_i32 = arith.constant 0 : i32
    %c0_i32_0 = arith.constant 0 : i32
    %c0_i32_1 = arith.constant 0 : i32
    return %c0_i32, %c0_i32_0 : i32, i32
  }
  func.func @transform_17(%arg0: i32) -> (i32, i32) {
    %c0_i32 = arith.constant 0 : i32
    %c0_i32_0 = arith.constant 0 : i32
    %c0_i32_1 = arith.constant 0 : i32
    return %c0_i32, %c0_i32_0 : i32, i32
  }
  func.func @transform_18(%arg0: i32) -> (i32, i32) {
    %c0_i32 = arith.constant 0 : i32
    %c0_i32_0 = arith.constant 0 : i32
    %c0_i32_1 = arith.constant 0 : i32
    return %c0_i32, %c0_i32_0 : i32, i32
  }
  func.func @transform_19(%arg0: i32) -> (i32, i32) {
    %c0_i32 = arith.constant 0 : i32
    %c0_i32_0 = arith.constant 0 : i32
    %c0_i32_1 = arith.constant 0 : i32
    return %c0_i32, %c0_i32_0 : i32, i32
  }
  func.func @transform_20(%arg0: i32) -> (i32, i32) {
    %c0_i32 = arith.constant 0 : i32
    %c0_i32_0 = arith.constant 0 : i32
    %c0_i32_1 = arith.constant 0 : i32
    return %c0_i32, %c0_i32_0 : i32, i32
  }
  func.func @transform_21(%arg0: i32) -> (i32, i32) {
    %c0_i32 = arith.constant 0 : i32
    %c0_i32_0 = arith.constant 0 : i32
    %c0_i32_1 = arith.constant 0 : i32
    return %c0_i32, %c0_i32_0 : i32, i32
  }
  func.func @transform_22(%arg0: i32) -> (i32, i32, i32) {
    %c0_i32 = arith.constant 0 : i32
    %c0_i32_0 = arith.constant 0 : i32
    %c0_i32_1 = arith.constant 0 : i32
    %c0_i32_2 = arith.constant 0 : i32
    return %c0_i32, %c0_i32_0, %c0_i32_1 : i32, i32, i32
  }
  func.func @transform_23(%arg0: i32) -> (i32, i32) {
    %c0_i32 = arith.constant 0 : i32
    %c0_i32_0 = arith.constant 0 : i32
    %c0_i32_1 = arith.constant 0 : i32
    return %c0_i32, %c0_i32_0 : i32, i32
  }
  func.func @transform_24(%arg0: i32) -> (i32, i32) {
    %c0_i32 = arith.constant 0 : i32
    %c0_i32_0 = arith.constant 0 : i32
    %c0_i32_1 = arith.constant 0 : i32
    return %c0_i32, %c0_i32_0 : i32, i32
  }
  func.func @transform_25(%arg0: i32) -> (i32, i32) {
    %c0_i32 = arith.constant 0 : i32
    %c0_i32_0 = arith.constant 0 : i32
    %c0_i32_1 = arith.constant 0 : i32
    return %c0_i32, %c0_i32_0 : i32, i32
  }
  func.func @transform_26(%arg0: i32) -> (i32, i32) {
    %c0_i32 = arith.constant 0 : i32
    %c0_i32_0 = arith.constant 0 : i32
    %c0_i32_1 = arith.constant 0 : i32
    return %c0_i32, %c0_i32_0 : i32, i32
  }
  func.func @transform_27(%arg0: i32) -> (i32, i32) {
    %c0_i32 = arith.constant 0 : i32
    %c0_i32_0 = arith.constant 0 : i32
    %c0_i32_1 = arith.constant 0 : i32
    return %c0_i32, %c0_i32_0 : i32, i32
  }
  func.func @transform_28(%arg0: i32) -> (i32, i32) {
    %c0_i32 = arith.constant 0 : i32
    %c0_i32_0 = arith.constant 0 : i32
    %c0_i32_1 = arith.constant 0 : i32
    return %c0_i32, %c0_i32_0 : i32, i32
  }
  func.func @transform_29(%arg0: i32) -> (i32, i32) {
    %c0_i32 = arith.constant 0 : i32
    %c0_i32_0 = arith.constant 0 : i32
    %c0_i32_1 = arith.constant 0 : i32
    return %c0_i32, %c0_i32_0 : i32, i32
  }
  func.func @transform_30(%arg0: i32) -> (i32, i32, i32, i32) {
    %c0_i32 = arith.constant 0 : i32
    %c0_i32_0 = arith.constant 0 : i32
    %c0_i32_1 = arith.constant 0 : i32
    %c0_i32_2 = arith.constant 0 : i32
    return %c0_i32, %arg0, %c0_i32_0, %c0_i32_1 : i32, i32, i32, i32
  }
}

</mosaic_0001>

<llo_original>
// kernel: clip_forward.1
$region0: #{clip_forward.1}
  #allocation0 [shape = 'u32[]', space=smem, size = 0x4, offset = 0x4, fixed_abs, tag = 'smem constant byte address 0x4 - core index']
  #allocation1 [shape = 'u32[72,128]{1,0:T(1,128)}', space=vmem, size = 0x9000, scoped, tag = 'internal scratch']
  %s0 = inlined_call_operand.smem [shape: u32[31], index: -1, kind: input, shape index: {}]
  %s1 = sld [smem:[%s0]]
  %s2 = scalar_lea.smem %s0, 1
  %s3 = sld [smem:[%s2]]
  %s4 = scalar_lea.smem %s0, 2
  %s5 = sld [smem:[%s4]]
  %s6 = scalar_lea.smem %s0, 3
  %s7 = sld [smem:[%s6]]
  %s8 = scalar_lea.smem %s0, 4
  %s9 = sld [smem:[%s8]]
  %s10 = scalar_lea.smem %s0, 5
  %s11 = sld [smem:[%s10]]
  %s12 = scalar_lea.smem %s0, 6
  %s13 = sld [smem:[%s12]]
  %s14 = scalar_lea.smem %s0, 7
  %s15 = sld [smem:[%s14]]
  %s16 = scalar_lea.smem %s0, 8
  %s17 = sld [smem:[%s16]]
  %s18 = scalar_lea.smem %s0, 9
  %s19 = sld [smem:[%s18]]
  %s20 = scalar_lea.smem %s0, 10
  %s21 = sld [smem:[%s20]]
  %s22 = scalar_lea.smem %s0, 11
  %s23 = sld [smem:[%s22]]
  %s24 = scalar_lea.smem %s0, 12
  %s25 = sld [smem:[%s24]]
  %s26 = scalar_lea.smem %s0, 13
  %s27 = sld [smem:[%s26]]
  %s28 = scalar_lea.smem %s0, 14
  %s29 = sld [smem:[%s28]]
  %s30 = scalar_lea.smem %s0, 15
  %s31 = sld [smem:[%s30]]
  %s32 = scalar_lea.smem %s0, 16
  %s33 = sld [smem:[%s32]]
  %s34 = scalar_lea.smem %s0, 17
  %s35 = sld [smem:[%s34]]
  %s36 = scalar_lea.smem %s0, 18
  %s37 = sld [smem:[%s36]]
  %s38 = scalar_lea.smem %s0, 19
  %s39 = sld [smem:[%s38]]
  %s40 = scalar_lea.smem %s0, 20
  %s41 = sld [smem:[%s40]]
  %s42 = scalar_lea.smem %s0, 21
  %s43 = sld [smem:[%s42]]
  %s44 = scalar_lea.smem %s0, 22
  %s45 = sld [smem:[%s44]]
  %s46 = scalar_lea.smem %s0, 23
  %s47 = sld [smem:[%s46]]
  %s48 = scalar_lea.smem %s0, 24
  %s49 = sld [smem:[%s48]]
  %s50 = scalar_lea.smem %s0, 25
  %s51 = sld [smem:[%s50]]
  %s52 = scalar_lea.smem %s0, 26
  %s53 = sld [smem:[%s52]]
  %s54 = scalar_lea.smem %s0, 27
  %s55 = sld [smem:[%s54]]
  %s56 = scalar_lea.smem %s0, 28
  %s57 = sld [smem:[%s56]]
  %s58 = scalar_lea.smem %s0, 29
  %s59 = sld [smem:[%s58]]
  %s60 = scalar_lea.smem %s0, 30
  %s61 = sld [smem:[%s60]]
  %s62 = sld [smem:[#allocation0]]
  $region255: #{clip_forward.1} parent=0
    _
  %s64 = ssub.s32 1, %s62
  %s65 = scalar_select 0, %s64, %s62
  $region1: #{clip_forward.1} parent=0
    #allocation2 [shape = 'u8[512]{0}', space=vmem, size = 0x400, scoped, tag = 'input window, operand 2, single buffered']
    #allocation3 [shape = 's32[2]{0}', space=sflag, size = 0x8, scoped, tag = 'scoped memory for clip_forward.1']
    #allocation4 [shape = 'u8[8192]{0}', space=vmem, size = 0x2000, scoped, tag = 'input window, operand 3, single buffered']
    #allocation5 [shape = 's32[1]{0}', space=sflag, size = 0x4, scoped, tag = 'scoped memory for clip_forward.1']
    #allocation6 [shape = 'u8[512]{0}', space=vmem, size = 0x400, scoped, tag = 'input window, operand 4, single buffered']
    #allocation7 [shape = 'u8[512]{0}', space=vmem, size = 0x400, scoped, tag = 'input window, operand 5, single buffered']
    #allocation8 [shape = 's32[1]{0}', space=sflag, size = 0x4, scoped, tag = 'scoped memory for clip_forward.1']
    #allocation9 [shape = 'u8[512]{0}', space=vmem, size = 0x400, scoped, tag = 'input window, operand 6, single buffered']
    #allocation10 [shape = 'u8[512]{0}', space=vmem, size = 0x400, scoped, tag = 'input window, operand 7, single buffered']
    #allocation11 [shape = 's32[1]{0}', space=sflag, size = 0x4, scoped, tag = 'scoped memory for clip_forward.1']
    #allocation12 [shape = 'u8[512]{0}', space=vmem, size = 0x400, scoped, tag = 'input window, operand 11, single buffered']
    #allocation13 [shape = 'u8[512]{0}', space=vmem, size = 0x400, scoped, tag = 'input window, operand 12, single buffered']
    #allocation14 [shape = 's32[1]{0}', space=sflag, size = 0x4, scoped, tag = 'scoped memory for clip_forward.1']
    #allocation15 [shape = 'u8[512]{0}', space=vmem, size = 0x400, scoped, tag = 'input window, operand 13, single buffered']
    #allocation16 [shape = 'u8[512]{0}', space=vmem, size = 0x400, scoped, tag = 'input window, operand 17, single buffered']
    #allocation17 [shape = 's32[1]{0}', space=sflag, size = 0x4, scoped, tag = 'scoped memory for clip_forward.1']
    #allocation18 [shape = 'u8[512]{0}', space=vmem, size = 0x400, scoped, tag = 'input window, operand 18, single buffered']
    #allocation19 [shape = 'u8[512]{0}', space=vmem, size = 0x400, scoped, tag = 'input window, operand 19, single buffered']
    #allocation20 [shape = 's32[1]{0}', space=sflag, size = 0x4, scoped, tag = 'scoped memory for clip_forward.1']
    #allocation21 [shape = 'u8[1536]{0}', space=vmem, size = 0x800, scoped, tag = 'input window, operand 21, single buffered']
    #allocation22 [shape = 'u8[512]{0}', space=vmem, size = 0x400, scoped, tag = 'input window, operand 23, single buffered']
    #allocation23 [shape = 's32[1]{0}', space=sflag, size = 0x4, scoped, tag = 'scoped memory for clip_forward.1']
    #allocation24 [shape = 'u8[512]{0}', space=vmem, size = 0x400, scoped, tag = 'input window, operand 24, single buffered']
    #allocation25 [shape = 'u8[512]{0}', space=vmem, size = 0x400, scoped, tag = 'input window, operand 25, single buffered']
    #allocation26 [shape = 's32[1]{0}', space=sflag, size = 0x4, scoped, tag = 'scoped memory for clip_forward.1']
    #allocation27 [shape = 'u8[512]{0}', space=vmem, size = 0x400, scoped, tag = 'input window, operand 29, single buffered']
    #allocation28 [shape = 'u8[49152]{0}', space=vmem, size = 0xc000, scoped, tag = 'output window, operand 0']
    %66 = vsyncpa [#allocation3], 0
    %67 = vsyncpa [#allocation5], 0
    %68 = vsyncpa [#allocation8], 0
    %69 = vsyncpa [#allocation11], 0
    %70 = vsyncpa [#allocation14], 0
    %71 = vsyncpa [#allocation17], 0
    %72 = vsyncpa [#allocation20], 0
    %73 = vsyncpa [#allocation23], 0
    %74 = vsyncpa [#allocation26], 0
    loop: start=0, step=1, limit=4
    $region2: #{clip_forward.1} parent=1 // loop_pre_header
      _
    $region3: #{clip_forward.1} parent=1 // loop_header
      %s76 = sphi 0, %s80
      %p77 = scmp.ge.s32.totalorder %s76, 4
      %s86 = sphi 0, %s88
      %s89 = sphi 0, %s86
      %s90 = sphi 0, %s89
      %s106 = sphi 0, %s90
      %s110 = sphi 0, %s110
      %s112 = sphi 0, %s110
      %s113 = sphi 0, %s112
      %s127 = sphi 0, %s113
      %s131 = sphi 0, %s131
      %s133 = sphi 0, %s131
      %s134 = sphi 0, %s133
      %s148 = sphi 0, %s134
      %s152 = sphi 0, %s152
      %s154 = sphi 0, %s152
      %s155 = sphi 0, %s154
      %s169 = sphi 0, %s155
      %s173 = sphi 0, %s173
      %s175 = sphi 0, %s173
      %s176 = sphi 0, %s175
      %s190 = sphi 0, %s176
      %s194 = sphi 0, %s194
      %s196 = sphi 0, %s194
      %s197 = sphi 0, %s196
      %s211 = sphi 0, %s197
      %s215 = sphi 0, %s215
      %s217 = sphi 0, %s215
      %s218 = sphi 0, %s217
      %s232 = sphi 0, %s218
      %s236 = sphi 0, %s236
      %s238 = sphi 0, %s236
      %s239 = sphi 0, %s238
      %s253 = sphi 0, %s239
      %s257 = sphi 0, %s257
      %s259 = sphi 0, %s257
      %s260 = sphi 0, %s259
      %s274 = sphi 0, %s260
      %s278 = sphi 0, %s278
      %s280 = sphi 0, %s278
      %s281 = sphi 0, %s280
      %s295 = sphi 0, %s281
      %s299 = sphi 0, %s299
      %s301 = sphi 0, %s299
      %s302 = sphi 0, %s301
      %s316 = sphi 0, %s302
      %s320 = sphi 0, %s320
      %s322 = sphi 0, %s320
      %s323 = sphi 0, %s322
      %s337 = sphi 0, %s323
      %s341 = sphi 0, %s341
      %s343 = sphi 0, %s341
      %s344 = sphi 0, %s343
      %s358 = sphi 0, %s344
      %s362 = sphi 0, %s362
      %s364 = sphi 0, %s362
      %s365 = sphi 0, %s364
      %s379 = sphi 0, %s365
      %s383 = sphi 0, %s383
      %s385 = sphi 0, %s383
      %s386 = sphi 0, %s385
      %s400 = sphi 0, %s386
      %s404 = sphi 0, %s404
      %s406 = sphi 0, %s404
      %s407 = sphi 0, %s406
      %s421 = sphi 0, %s407
      %s425 = sphi 0, %s425
      %s427 = sphi 0, %s425
      %s428 = sphi 0, %s427
      %s442 = sphi 0, %s428
      %s446 = sphi 0, %s446
      %s448 = sphi 0, %s446
      %s449 = sphi 0, %s448
      %s463 = sphi 0, %s449
      %s467 = sphi 0, %s467
      %s469 = sphi 0, %s467
      %s470 = sphi 0, %s469
      %s484 = sphi 0, %s470
      %s488 = sphi 0, %s488
      %s490 = sphi 0, %s488
      %s491 = sphi 0, %s490
      %s505 = sphi 0, %s491
      %s509 = sphi 0, %s509
      %s511 = sphi 0, %s509
      %s512 = sphi 0, %s511
      %s526 = sphi 0, %s512
      %s530 = sphi 0, %s530
      %s532 = sphi 0, %s530
      %s533 = sphi 0, %s532
      %s547 = sphi 0, %s533
      %s551 = sphi 0, %s551
      %s553 = sphi 0, %s551
      %s554 = sphi 0, %s553
      %s568 = sphi 0, %s554
      %s572 = sphi 0, %s572
      %s574 = sphi 0, %s572
      %s575 = sphi 0, %s574
      %s589 = sphi 0, %s575
      %s593 = sphi 0, %s593
      %s595 = sphi 0, %s593
      %s596 = sphi 0, %s595
      %s610 = sphi 0, %s596
      %s614 = sphi 0, %s614
      %s616 = sphi 0, %s614
      %s617 = sphi 0, %s616
      %s631 = sphi 0, %s617
      %s635 = sphi 0, %s635
      %s637 = sphi 0, %s635
      %s638 = sphi 0, %s637
      %s652 = sphi 0, %s638
      %s656 = sphi 0, %s656
      %s658 = sphi 0, %s656
      %s659 = sphi 0, %s658
      %s673 = sphi 0, %s659
      %s677 = sphi 0, %s677
      %s679 = sphi 0, %s677
      %s680 = sphi 0, %s679
      %s694 = sphi 0, %s680
      %s698 = sphi 0, %s698
      %s700 = sphi 0, %s698
      %s701 = sphi 0, %s700
      %s715 = sphi 0, %s701
      %s721 = sphi 0, %s723
      %s724 = sphi 0, %s721
      %s725 = sphi 0, %s724
      %s741 = sphi 0, %s725
    $region4: #{clip_forward.1} parent=1 // loop_header_branch
      %79 = sbr.rel (%p77) target = $region8
    $region5: #{clip_forward.1} parent=1 // loop_body
      %s81 = ssub.s32 %s76, 1
      %s82 = ssub.s32 %s76, 2
      %s83 = sadd.s32 %s76, 1
      %s84 = ssub.s32 %s76, %s83
      %p85 = scmp.eq.s32.totalorder %s84, 0
      %s87 = sadd.s32 %s86, 1
      %s88 = scalar_select %p85, %s86, %s87
      %p91 = pneg %p85
      %p92 = scmp.eq.s32.totalorder %s76, 1
      %p93 = por %p91, %p92
      %p94 = scmp.ne.s32.totalorder %s86, %s89
      %p95 = scmp.eq.s32.totalorder %s76, 0
      %p96 = por %p94, %p95
      %p97 = scmp.ne.s32.totalorder %s86, %s89
      %p98 = scmp.eq.s32.totalorder %s81, 1
      %p99 = por %p97, %p98
      %p100 = scmp.ne.s32.totalorder %s89, %s90
      %p101 = scmp.eq.s32.totalorder %s81, 0
      %p102 = por %p100, %p101
      %p103 = scmp.ne.s32.totalorder %s89, %s90
      %p104 = scmp.eq.s32.totalorder %s82, 1
      %p105 = por %p103, %p104
      %p107 = scmp.ne.s32.totalorder %s90, %s106
      %p108 = scmp.eq.s32.totalorder %s82, 0
      %p109 = por %p107, %p108
      %s111 = sadd.s32 %s110, 1
      %p114 = scmp.eq.s32.totalorder %s76, 1
      %p115 = scmp.ne.s32.totalorder %s110, %s112
      %p116 = scmp.eq.s32.totalorder %s76, 0
      %p117 = por %p115, %p116
      %p118 = scmp.ne.s32.totalorder %s110, %s112
      %p119 = scmp.eq.s32.totalorder %s81, 1
      %p120 = por %p118, %p119
      %p121 = scmp.ne.s32.totalorder %s112, %s113
      %p122 = scmp.eq.s32.totalorder %s81, 0
      %p123 = por %p121, %p122
      %p124 = scmp.ne.s32.totalorder %s112, %s113
      %p125 = scmp.eq.s32.totalorder %s82, 1
      %p126 = por %p124, %p125
      %p128 = scmp.ne.s32.totalorder %s113, %s127
      %p129 = scmp.eq.s32.totalorder %s82, 0
      %p130 = por %p128, %p129
      %s132 = sadd.s32 %s131, 1
      %p135 = scmp.eq.s32.totalorder %s76, 1
      %p136 = scmp.ne.s32.totalorder %s131, %s133
      %p137 = scmp.eq.s32.totalorder %s76, 0
      %p138 = por %p136, %p137
      %p139 = scmp.ne.s32.totalorder %s131, %s133
      %p140 = scmp.eq.s32.totalorder %s81, 1
      %p141 = por %p139, %p140
      %p142 = scmp.ne.s32.totalorder %s133, %s134
      %p143 = scmp.eq.s32.totalorder %s81, 0
      %p144 = por %p142, %p143
      %p145 = scmp.ne.s32.totalorder %s133, %s134
      %p146 = scmp.eq.s32.totalorder %s82, 1
      %p147 = por %p145, %p146
      %p149 = scmp.ne.s32.totalorder %s134, %s148
      %p150 = scmp.eq.s32.totalorder %s82, 0
      %p151 = por %p149, %p150
      %s153 = sadd.s32 %s152, 1
      %p156 = scmp.eq.s32.totalorder %s76, 1
      %p157 = scmp.ne.s32.totalorder %s152, %s154
      %p158 = scmp.eq.s32.totalorder %s76, 0
      %p159 = por %p157, %p158
      %p160 = scmp.ne.s32.totalorder %s152, %s154
      %p161 = scmp.eq.s32.totalorder %s81, 1
      %p162 = por %p160, %p161
      %p163 = scmp.ne.s32.totalorder %s154, %s155
      %p164 = scmp.eq.s32.totalorder %s81, 0
      %p165 = por %p163, %p164
      %p166 = scmp.ne.s32.totalorder %s154, %s155
      %p167 = scmp.eq.s32.totalorder %s82, 1
      %p168 = por %p166, %p167
      %p170 = scmp.ne.s32.totalorder %s155, %s169
      %p171 = scmp.eq.s32.totalorder %s82, 0
      %p172 = por %p170, %p171
      %s174 = sadd.s32 %s173, 1
      %p177 = scmp.eq.s32.totalorder %s76, 1
      %p178 = scmp.ne.s32.totalorder %s173, %s175
      %p179 = scmp.eq.s32.totalorder %s76, 0
      %p180 = por %p178, %p179
      %p181 = scmp.ne.s32.totalorder %s173, %s175
      %p182 = scmp.eq.s32.totalorder %s81, 1
      %p183 = por %p181, %p182
      %p184 = scmp.ne.s32.totalorder %s175, %s176
      %p185 = scmp.eq.s32.totalorder %s81, 0
      %p186 = por %p184, %p185
      %p187 = scmp.ne.s32.totalorder %s175, %s176
      %p188 = scmp.eq.s32.totalorder %s82, 1
      %p189 = por %p187, %p188
      %p191 = scmp.ne.s32.totalorder %s176, %s190
      %p192 = scmp.eq.s32.totalorder %s82, 0
      %p193 = por %p191, %p192
      %s195 = sadd.s32 %s194, 1
      %p198 = scmp.eq.s32.totalorder %s76, 1
      %p199 = scmp.ne.s32.totalorder %s194, %s196
      %p200 = scmp.eq.s32.totalorder %s76, 0
      %p201 = por %p199, %p200
      %p202 = scmp.ne.s32.totalorder %s194, %s196
      %p203 = scmp.eq.s32.totalorder %s81, 1
      %p204 = por %p202, %p203
      %p205 = scmp.ne.s32.totalorder %s196, %s197
      %p206 = scmp.eq.s32.totalorder %s81, 0
      %p207 = por %p205, %p206
      %p208 = scmp.ne.s32.totalorder %s196, %s197
      %p209 = scmp.eq.s32.totalorder %s82, 1
      %p210 = por %p208, %p209
      %p212 = scmp.ne.s32.totalorder %s197, %s211
      %p213 = scmp.eq.s32.totalorder %s82, 0
      %p214 = por %p212, %p213
      %s216 = sadd.s32 %s215, 1
      %p219 = scmp.eq.s32.totalorder %s76, 1
      %p220 = scmp.ne.s32.totalorder %s215, %s217
      %p221 = scmp.eq.s32.totalorder %s76, 0
      %p222 = por %p220, %p221
      %p223 = scmp.ne.s32.totalorder %s215, %s217
      %p224 = scmp.eq.s32.totalorder %s81, 1
      %p225 = por %p223, %p224
      %p226 = scmp.ne.s32.totalorder %s217, %s218
      %p227 = scmp.eq.s32.totalorder %s81, 0
      %p228 = por %p226, %p227
      %p229 = scmp.ne.s32.totalorder %s217, %s218
      %p230 = scmp.eq.s32.totalorder %s82, 1
      %p231 = por %p229, %p230
      %p233 = scmp.ne.s32.totalorder %s218, %s232
      %p234 = scmp.eq.s32.totalorder %s82, 0
      %p235 = por %p233, %p234
      %s237 = sadd.s32 %s236, 1
      %p240 = scmp.eq.s32.totalorder %s76, 1
      %p241 = scmp.ne.s32.totalorder %s236, %s238
      %p242 = scmp.eq.s32.totalorder %s76, 0
      %p243 = por %p241, %p242
      %p244 = scmp.ne.s32.totalorder %s236, %s238
      %p245 = scmp.eq.s32.totalorder %s81, 1
      %p246 = por %p244, %p245
      %p247 = scmp.ne.s32.totalorder %s238, %s239
      %p248 = scmp.eq.s32.totalorder %s81, 0
      %p249 = por %p247, %p248
      %p250 = scmp.ne.s32.totalorder %s238, %s239
      %p251 = scmp.eq.s32.totalorder %s82, 1
      %p252 = por %p250, %p251
      %p254 = scmp.ne.s32.totalorder %s239, %s253
      %p255 = scmp.eq.s32.totalorder %s82, 0
      %p256 = por %p254, %p255
      %s258 = sadd.s32 %s257, 1
      %p261 = scmp.eq.s32.totalorder %s76, 1
      %p262 = scmp.ne.s32.totalorder %s257, %s259
      %p263 = scmp.eq.s32.totalorder %s76, 0
      %p264 = por %p262, %p263
      %p265 = scmp.ne.s32.totalorder %s257, %s259
      %p266 = scmp.eq.s32.totalorder %s81, 1
      %p267 = por %p265, %p266
      %p268 = scmp.ne.s32.totalorder %s259, %s260
      %p269 = scmp.eq.s32.totalorder %s81, 0
      %p270 = por %p268, %p269
      %p271 = scmp.ne.s32.totalorder %s259, %s260
      %p272 = scmp.eq.s32.totalorder %s82, 1
      %p273 = por %p271, %p272
      %p275 = scmp.ne.s32.totalorder %s260, %s274
      %p276 = scmp.eq.s32.totalorder %s82, 0
      %p277 = por %p275, %p276
      %s279 = sadd.s32 %s278, 1
      %p282 = scmp.eq.s32.totalorder %s76, 1
      %p283 = scmp.ne.s32.totalorder %s278, %s280
      %p284 = scmp.eq.s32.totalorder %s76, 0
      %p285 = por %p283, %p284
      %p286 = scmp.ne.s32.totalorder %s278, %s280
      %p287 = scmp.eq.s32.totalorder %s81, 1
      %p288 = por %p286, %p287
      %p289 = scmp.ne.s32.totalorder %s280, %s281
      %p290 = scmp.eq.s32.totalorder %s81, 0
      %p291 = por %p289, %p290
      %p292 = scmp.ne.s32.totalorder %s280, %s281
      %p293 = scmp.eq.s32.totalorder %s82, 1
      %p294 = por %p292, %p293
      %p296 = scmp.ne.s32.totalorder %s281, %s295
      %p297 = scmp.eq.s32.totalorder %s82, 0
      %p298 = por %p296, %p297
      %s300 = sadd.s32 %s299, 1
      %p303 = scmp.eq.s32.totalorder %s76, 1
      %p304 = scmp.ne.s32.totalorder %s299, %s301
      %p305 = scmp.eq.s32.totalorder %s76, 0
      %p306 = por %p304, %p305
      %p307 = scmp.ne.s32.totalorder %s299, %s301
      %p308 = scmp.eq.s32.totalorder %s81, 1
      %p309 = por %p307, %p308
      %p310 = scmp.ne.s32.totalorder %s301, %s302
      %p311 = scmp.eq.s32.totalorder %s81, 0
      %p312 = por %p310, %p311
      %p313 = scmp.ne.s32.totalorder %s301, %s302
      %p314 = scmp.eq.s32.totalorder %s82, 1
      %p315 = por %p313, %p314
      %p317 = scmp.ne.s32.totalorder %s302, %s316
      %p318 = scmp.eq.s32.totalorder %s82, 0
      %p319 = por %p317, %p318
      %s321 = sadd.s32 %s320, 1
      %p324 = scmp.eq.s32.totalorder %s76, 1
      %p325 = scmp.ne.s32.totalorder %s320, %s322
      %p326 = scmp.eq.s32.totalorder %s76, 0
      %p327 = por %p325, %p326
      %p328 = scmp.ne.s32.totalorder %s320, %s322
      %p329 = scmp.eq.s32.totalorder %s81, 1
      %p330 = por %p328, %p329
      %p331 = scmp.ne.s32.totalorder %s322, %s323
      %p332 = scmp.eq.s32.totalorder %s81, 0
      %p333 = por %p331, %p332
      %p334 = scmp.ne.s32.totalorder %s322, %s323
      %p335 = scmp.eq.s32.totalorder %s82, 1
      %p336 = por %p334, %p335
      %p338 = scmp.ne.s32.totalorder %s323, %s337
      %p339 = scmp.eq.s32.totalorder %s82, 0
      %p340 = por %p338, %p339
      %s342 = sadd.s32 %s341, 1
      %p345 = scmp.eq.s32.totalorder %s76, 1
      %p346 = scmp.ne.s32.totalorder %s341, %s343
      %p347 = scmp.eq.s32.totalorder %s76, 0
      %p348 = por %p346, %p347
      %p349 = scmp.ne.s32.totalorder %s341, %s343
      %p350 = scmp.eq.s32.totalorder %s81, 1
      %p351 = por %p349, %p350
      %p352 = scmp.ne.s32.totalorder %s343, %s344
      %p353 = scmp.eq.s32.totalorder %s81, 0
      %p354 = por %p352, %p353
      %p355 = scmp.ne.s32.totalorder %s343, %s344
      %p356 = scmp.eq.s32.totalorder %s82, 1
      %p357 = por %p355, %p356
      %p359 = scmp.ne.s32.totalorder %s344, %s358
      %p360 = scmp.eq.s32.totalorder %s82, 0
      %p361 = por %p359, %p360
      %s363 = sadd.s32 %s362, 1
      %p366 = scmp.eq.s32.totalorder %s76, 1
      %p367 = scmp.ne.s32.totalorder %s362, %s364
      %p368 = scmp.eq.s32.totalorder %s76, 0
      %p369 = por %p367, %p368
      %p370 = scmp.ne.s32.totalorder %s362, %s364
      %p371 = scmp.eq.s32.totalorder %s81, 1
      %p372 = por %p370, %p371
      %p373 = scmp.ne.s32.totalorder %s364, %s365
      %p374 = scmp.eq.s32.totalorder %s81, 0
      %p375 = por %p373, %p374
      %p376 = scmp.ne.s32.totalorder %s364, %s365
      %p377 = scmp.eq.s32.totalorder %s82, 1
      %p378 = por %p376, %p377
      %p380 = scmp.ne.s32.totalorder %s365, %s379
      %p381 = scmp.eq.s32.totalorder %s82, 0
      %p382 = por %p380, %p381
      %s384 = sadd.s32 %s383, 1
      %p387 = scmp.eq.s32.totalorder %s76, 1
      %p388 = scmp.ne.s32.totalorder %s383, %s385
      %p389 = scmp.eq.s32.totalorder %s76, 0
      %p390 = por %p388, %p389
      %p391 = scmp.ne.s32.totalorder %s383, %s385
      %p392 = scmp.eq.s32.totalorder %s81, 1
      %p393 = por %p391, %p392
      %p394 = scmp.ne.s32.totalorder %s385, %s386
      %p395 = scmp.eq.s32.totalorder %s81, 0
      %p396 = por %p394, %p395
      %p397 = scmp.ne.s32.totalorder %s385, %s386
      %p398 = scmp.eq.s32.totalorder %s82, 1
      %p399 = por %p397, %p398
      %p401 = scmp.ne.s32.totalorder %s386, %s400
      %p402 = scmp.eq.s32.totalorder %s82, 0
      %p403 = por %p401, %p402
      %s405 = sadd.s32 %s404, 1
      %p408 = scmp.eq.s32.totalorder %s76, 1
      %p409 = scmp.ne.s32.totalorder %s404, %s406
      %p410 = scmp.eq.s32.totalorder %s76, 0
      %p411 = por %p409, %p410
      %p412 = scmp.ne.s32.totalorder %s404, %s406
      %p413 = scmp.eq.s32.totalorder %s81, 1
      %p414 = por %p412, %p413
      %p415 = scmp.ne.s32.totalorder %s406, %s407
      %p416 = scmp.eq.s32.totalorder %s81, 0
      %p417 = por %p415, %p416
      %p418 = scmp.ne.s32.totalorder %s406, %s407
      %p419 = scmp.eq.s32.totalorder %s82, 1
      %p420 = por %p418, %p419
      %p422 = scmp.ne.s32.totalorder %s407, %s421
      %p423 = scmp.eq.s32.totalorder %s82, 0
      %p424 = por %p422, %p423
      %s426 = sadd.s32 %s425, 1
      %p429 = scmp.eq.s32.totalorder %s76, 1
      %p430 = scmp.ne.s32.totalorder %s425, %s427
      %p431 = scmp.eq.s32.totalorder %s76, 0
      %p432 = por %p430, %p431
      %p433 = scmp.ne.s32.totalorder %s425, %s427
      %p434 = scmp.eq.s32.totalorder %s81, 1
      %p435 = por %p433, %p434
      %p436 = scmp.ne.s32.totalorder %s427, %s428
      %p437 = scmp.eq.s32.totalorder %s81, 0
      %p438 = por %p436, %p437
      %p439 = scmp.ne.s32.totalorder %s427, %s428
      %p440 = scmp.eq.s32.totalorder %s82, 1
      %p441 = por %p439, %p440
      %p443 = scmp.ne.s32.totalorder %s428, %s442
      %p444 = scmp.eq.s32.totalorder %s82, 0
      %p445 = por %p443, %p444
      %s447 = sadd.s32 %s446, 1
      %p450 = scmp.eq.s32.totalorder %s76, 1
      %p451 = scmp.ne.s32.totalorder %s446, %s448
      %p452 = scmp.eq.s32.totalorder %s76, 0
      %p453 = por %p451, %p452
      %p454 = scmp.ne.s32.totalorder %s446, %s448
      %p455 = scmp.eq.s32.totalorder %s81, 1
      %p456 = por %p454, %p455
      %p457 = scmp.ne.s32.totalorder %s448, %s449
      %p458 = scmp.eq.s32.totalorder %s81, 0
      %p459 = por %p457, %p458
      %p460 = scmp.ne.s32.totalorder %s448, %s449
      %p461 = scmp.eq.s32.totalorder %s82, 1
      %p462 = por %p460, %p461
      %p464 = scmp.ne.s32.totalorder %s449, %s463
      %p465 = scmp.eq.s32.totalorder %s82, 0
      %p466 = por %p464, %p465
      %s468 = sadd.s32 %s467, 1
      %p471 = scmp.eq.s32.totalorder %s76, 1
      %p472 = scmp.ne.s32.totalorder %s467, %s469
      %p473 = scmp.eq.s32.totalorder %s76, 0
      %p474 = por %p472, %p473
      %p475 = scmp.ne.s32.totalorder %s467, %s469
      %p476 = scmp.eq.s32.totalorder %s81, 1
      %p477 = por %p475, %p476
      %p478 = scmp.ne.s32.totalorder %s469, %s470
      %p479 = scmp.eq.s32.totalorder %s81, 0
      %p480 = por %p478, %p479
      %p481 = scmp.ne.s32.totalorder %s469, %s470
      %p482 = scmp.eq.s32.totalorder %s82, 1
      %p483 = por %p481, %p482
      %p485 = scmp.ne.s32.totalorder %s470, %s484
      %p486 = scmp.eq.s32.totalorder %s82, 0
      %p487 = por %p485, %p486
      %s489 = sadd.s32 %s488, 1
      %p492 = scmp.eq.s32.totalorder %s76, 1
      %p493 = scmp.ne.s32.totalorder %s488, %s490
      %p494 = scmp.eq.s32.totalorder %s76, 0
      %p495 = por %p493, %p494
      %p496 = scmp.ne.s32.totalorder %s488, %s490
      %p497 = scmp.eq.s32.totalorder %s81, 1
      %p498 = por %p496, %p497
      %p499 = scmp.ne.s32.totalorder %s490, %s491
      %p500 = scmp.eq.s32.totalorder %s81, 0
      %p501 = por %p499, %p500
      %p502 = scmp.ne.s32.totalorder %s490, %s491
      %p503 = scmp.eq.s32.totalorder %s82, 1
      %p504 = por %p502, %p503
      %p506 = scmp.ne.s32.totalorder %s491, %s505
      %p507 = scmp.eq.s32.totalorder %s82, 0
      %p508 = por %p506, %p507
      %s510 = sadd.s32 %s509, 1
      %p513 = scmp.eq.s32.totalorder %s76, 1
      %p514 = scmp.ne.s32.totalorder %s509, %s511
      %p515 = scmp.eq.s32.totalorder %s76, 0
      %p516 = por %p514, %p515
      %p517 = scmp.ne.s32.totalorder %s509, %s511
      %p518 = scmp.eq.s32.totalorder %s81, 1
      %p519 = por %p517, %p518
      %p520 = scmp.ne.s32.totalorder %s511, %s512
      %p521 = scmp.eq.s32.totalorder %s81, 0
      %p522 = por %p520, %p521
      %p523 = scmp.ne.s32.totalorder %s511, %s512
      %p524 = scmp.eq.s32.totalorder %s82, 1
      %p525 = por %p523, %p524
      %p527 = scmp.ne.s32.totalorder %s512, %s526
      %p528 = scmp.eq.s32.totalorder %s82, 0
      %p529 = por %p527, %p528
      %s531 = sadd.s32 %s530, 1
      %p534 = scmp.eq.s32.totalorder %s76, 1
      %p535 = scmp.ne.s32.totalorder %s530, %s532
      %p536 = scmp.eq.s32.totalorder %s76, 0
      %p537 = por %p535, %p536
      %p538 = scmp.ne.s32.totalorder %s530, %s532
      %p539 = scmp.eq.s32.totalorder %s81, 1
      %p540 = por %p538, %p539
      %p541 = scmp.ne.s32.totalorder %s532, %s533
      %p542 = scmp.eq.s32.totalorder %s81, 0
      %p543 = por %p541, %p542
      %p544 = scmp.ne.s32.totalorder %s532, %s533
      %p545 = scmp.eq.s32.totalorder %s82, 1
      %p546 = por %p544, %p545
      %p548 = scmp.ne.s32.totalorder %s533, %s547
      %p549 = scmp.eq.s32.totalorder %s82, 0
      %p550 = por %p548, %p549
      %s552 = sadd.s32 %s551, 1
      %p555 = scmp.eq.s32.totalorder %s76, 1
      %p556 = scmp.ne.s32.totalorder %s551, %s553
      %p557 = scmp.eq.s32.totalorder %s76, 0
      %p558 = por %p556, %p557
      %p559 = scmp.ne.s32.totalorder %s551, %s553
      %p560 = scmp.eq.s32.totalorder %s81, 1
      %p561 = por %p559, %p560
      %p562 = scmp.ne.s32.totalorder %s553, %s554
      %p563 = scmp.eq.s32.totalorder %s81, 0
      %p564 = por %p562, %p563
      %p565 = scmp.ne.s32.totalorder %s553, %s554
      %p566 = scmp.eq.s32.totalorder %s82, 1
      %p567 = por %p565, %p566
      %p569 = scmp.ne.s32.totalorder %s554, %s568
      %p570 = scmp.eq.s32.totalorder %s82, 0
      %p571 = por %p569, %p570
      %s573 = sadd.s32 %s572, 1
      %p576 = scmp.eq.s32.totalorder %s76, 1
      %p577 = scmp.ne.s32.totalorder %s572, %s574
      %p578 = scmp.eq.s32.totalorder %s76, 0
      %p579 = por %p577, %p578
      %p580 = scmp.ne.s32.totalorder %s572, %s574
      %p581 = scmp.eq.s32.totalorder %s81, 1
      %p582 = por %p580, %p581
      %p583 = scmp.ne.s32.totalorder %s574, %s575
      %p584 = scmp.eq.s32.totalorder %s81, 0
      %p585 = por %p583, %p584
      %p586 = scmp.ne.s32.totalorder %s574, %s575
      %p587 = scmp.eq.s32.totalorder %s82, 1
      %p588 = por %p586, %p587
      %p590 = scmp.ne.s32.totalorder %s575, %s589
      %p591 = scmp.eq.s32.totalorder %s82, 0
      %p592 = por %p590, %p591
      %s594 = sadd.s32 %s593, 1
      %p597 = scmp.eq.s32.totalorder %s76, 1
      %p598 = scmp.ne.s32.totalorder %s593, %s595
      %p599 = scmp.eq.s32.totalorder %s76, 0
      %p600 = por %p598, %p599
      %p601 = scmp.ne.s32.totalorder %s593, %s595
      %p602 = scmp.eq.s32.totalorder %s81, 1
      %p603 = por %p601, %p602
      %p604 = scmp.ne.s32.totalorder %s595, %s596
      %p605 = scmp.eq.s32.totalorder %s81, 0
      %p606 = por %p604, %p605
      %p607 = scmp.ne.s32.totalorder %s595, %s596
      %p608 = scmp.eq.s32.totalorder %s82, 1
      %p609 = por %p607, %p608
      %p611 = scmp.ne.s32.totalorder %s596, %s610
      %p612 = scmp.eq.s32.totalorder %s82, 0
      %p613 = por %p611, %p612
      %s615 = sadd.s32 %s614, 1
      %p618 = scmp.eq.s32.totalorder %s76, 1
      %p619 = scmp.ne.s32.totalorder %s614, %s616
      %p620 = scmp.eq.s32.totalorder %s76, 0
      %p621 = por %p619, %p620
      %p622 = scmp.ne.s32.totalorder %s614, %s616
      %p623 = scmp.eq.s32.totalorder %s81, 1
      %p624 = por %p622, %p623
      %p625 = scmp.ne.s32.totalorder %s616, %s617
      %p626 = scmp.eq.s32.totalorder %s81, 0
      %p627 = por %p625, %p626
      %p628 = scmp.ne.s32.totalorder %s616, %s617
      %p629 = scmp.eq.s32.totalorder %s82, 1
      %p630 = por %p628, %p629
      %p632 = scmp.ne.s32.totalorder %s617, %s631
      %p633 = scmp.eq.s32.totalorder %s82, 0
      %p634 = por %p632, %p633
      %s636 = sadd.s32 %s635, 1
      %p639 = scmp.eq.s32.totalorder %s76, 1
      %p640 = scmp.ne.s32.totalorder %s635, %s637
      %p641 = scmp.eq.s32.totalorder %s76, 0
      %p642 = por %p640, %p641
      %p643 = scmp.ne.s32.totalorder %s635, %s637
      %p644 = scmp.eq.s32.totalorder %s81, 1
      %p645 = por %p643, %p644
      %p646 = scmp.ne.s32.totalorder %s637, %s638
      %p647 = scmp.eq.s32.totalorder %s81, 0
      %p648 = por %p646, %p647
      %p649 = scmp.ne.s32.totalorder %s637, %s638
      %p650 = scmp.eq.s32.totalorder %s82, 1
      %p651 = por %p649, %p650
      %p653 = scmp.ne.s32.totalorder %s638, %s652
      %p654 = scmp.eq.s32.totalorder %s82, 0
      %p655 = por %p653, %p654
      %s657 = sadd.s32 %s656, 1
      %p660 = scmp.eq.s32.totalorder %s76, 1
      %p661 = scmp.ne.s32.totalorder %s656, %s658
      %p662 = scmp.eq.s32.totalorder %s76, 0
      %p663 = por %p661, %p662
      %p664 = scmp.ne.s32.totalorder %s656, %s658
      %p665 = scmp.eq.s32.totalorder %s81, 1
      %p666 = por %p664, %p665
      %p667 = scmp.ne.s32.totalorder %s658, %s659
      %p668 = scmp.eq.s32.totalorder %s81, 0
      %p669 = por %p667, %p668
      %p670 = scmp.ne.s32.totalorder %s658, %s659
      %p671 = scmp.eq.s32.totalorder %s82, 1
      %p672 = por %p670, %p671
      %p674 = scmp.ne.s32.totalorder %s659, %s673
      %p675 = scmp.eq.s32.totalorder %s82, 0
      %p676 = por %p674, %p675
      %s678 = sadd.s32 %s677, 1
      %p681 = scmp.eq.s32.totalorder %s76, 1
      %p682 = scmp.ne.s32.totalorder %s677, %s679
      %p683 = scmp.eq.s32.totalorder %s76, 0
      %p684 = por %p682, %p683
      %p685 = scmp.ne.s32.totalorder %s677, %s679
      %p686 = scmp.eq.s32.totalorder %s81, 1
      %p687 = por %p685, %p686
      %p688 = scmp.ne.s32.totalorder %s679, %s680
      %p689 = scmp.eq.s32.totalorder %s81, 0
      %p690 = por %p688, %p689
      %p691 = scmp.ne.s32.totalorder %s679, %s680
      %p692 = scmp.eq.s32.totalorder %s82, 1
      %p693 = por %p691, %p692
      %p695 = scmp.ne.s32.totalorder %s680, %s694
      %p696 = scmp.eq.s32.totalorder %s82, 0
      %p697 = por %p695, %p696
      %s699 = sadd.s32 %s698, 1
      %p702 = scmp.eq.s32.totalorder %s76, 1
      %p703 = scmp.ne.s32.totalorder %s698, %s700
      %p704 = scmp.eq.s32.totalorder %s76, 0
      %p705 = por %p703, %p704
      %p706 = scmp.ne.s32.totalorder %s698, %s700
      %p707 = scmp.eq.s32.totalorder %s81, 1
      %p708 = por %p706, %p707
      %p709 = scmp.ne.s32.totalorder %s700, %s701
      %p710 = scmp.eq.s32.totalorder %s81, 0
      %p711 = por %p709, %p710
      %p712 = scmp.ne.s32.totalorder %s700, %s701
      %p713 = scmp.eq.s32.totalorder %s82, 1
      %p714 = por %p712, %p713
      %p716 = scmp.ne.s32.totalorder %s701, %s715
      %p717 = scmp.eq.s32.totalorder %s82, 0
      %p718 = por %p716, %p717
      %s719 = ssub.s32 %s76, %s83
      %p720 = scmp.eq.s32.totalorder %s719, 0
      %s722 = sadd.s32 %s721, 1
      %s723 = scalar_select %p720, %s721, %s722
      %p726 = pneg %p720
      %p727 = scmp.eq.s32.totalorder %s76, 1
      %p728 = por %p726, %p727
      %p729 = scmp.ne.s32.totalorder %s721, %s724
      %p730 = scmp.eq.s32.totalorder %s76, 0
      %p731 = por %p729, %p730
      %p732 = scmp.ne.s32.totalorder %s721, %s724
      %p733 = scmp.eq.s32.totalorder %s81, 1
      %p734 = por %p732, %p733
      %p735 = scmp.ne.s32.totalorder %s724, %s725
      %p736 = scmp.eq.s32.totalorder %s81, 0
      %p737 = por %p735, %p736
      %p738 = scmp.ne.s32.totalorder %s724, %s725
      %p739 = scmp.eq.s32.totalorder %s82, 1
      %p740 = por %p738, %p739
      %p742 = scmp.ne.s32.totalorder %s725, %s741
      %p743 = scmp.eq.s32.totalorder %s82, 0
      %p744 = por %p742, %p743
      %p745 = scmp.le.s32.totalorder 1, %s76
      %p746 = scmp.lt.s32.totalorder %s76, 3
      %p747 = pnand %p745, %p746
      %p748 = pneg %p747
      // Predicated region
      $region9: #{clip_forward.1} parent=5 // pred_check
        _
      $region10: #{clip_forward.1} parent=5 // pred_check_branch
        %750 = sbr.rel (%p747) target = $region12
      $region11: #{clip_forward.1} parent=5 // pred_region
        %s751 = ssub.s32 %s76, 1
        // Predicated region
        $region13: #{clip_forward.1} parent=11 // pred_check
          %p752 = pneg %p123
        $region14: #{clip_forward.1} parent=11 // pred_check_branch
          %754 = sbr.rel (%p752) target = $region16
        $region15: #{clip_forward.1} parent=11 // pred_region
          _
        $region16: #{clip_forward.1} parent=11 // pred_fallthru
          _
        // Predicated region
        $region17: #{clip_forward.1} parent=11 // pred_check
          %p755 = pneg %p144
        $region18: #{clip_forward.1} parent=11 // pred_check_branch
          %757 = sbr.rel (%p755) target = $region20
        $region19: #{clip_forward.1} parent=11 // pred_region
          %759 = vsyncadd [#allocation3], 0
          %s761 = sshll.u32 %s5, 4
          %s762 = int_to_ptr.hbm [resolvable:$true] %s761
          %s763 = sshll.u32 [#allocation2], 4
          %s764 = int_to_ptr.vmem [resolvable:$true] %s763
          %766 = dma.hbm_to_vmem [thread:$0]  %s762, 16, %s764, [#allocation3]
        $region20: #{clip_forward.1} parent=11 // pred_fallthru
          _
        // Predicated region
        $region21: #{clip_forward.1} parent=11 // pred_check
          %p767 = pneg %p165
        $region22: #{clip_forward.1} parent=11 // pred_check_branch
          %769 = sbr.rel (%p767) target = $region24
        $region23: #{clip_forward.1} parent=11 // pred_region
          %771 = vsyncadd [#allocation5], 0
          %s772 = sshll.u32 %s7, 4
          %s773 = int_to_ptr.hbm [resolvable:$true] %s772
          %s774 = sshll.u32 [#allocation4], 4
          %s775 = int_to_ptr.vmem [resolvable:$true] %s774
          %780 = dma.hbm_to_vmem [thread:$0]  %s773, 256, %s775, [#allocation5], 128, 128, 8
        $region24: #{clip_forward.1} parent=11 // pred_fallthru
          _
        // Predicated region
        $region25: #{clip_forward.1} parent=11 // pred_check
          %p781 = pneg %p186
        $region26: #{clip_forward.1} parent=11 // pred_check_branch
          %783 = sbr.rel (%p781) target = $region28
        $region27: #{clip_forward.1} parent=11 // pred_region
          %785 = vsyncadd [#allocation5], 0
          %s787 = sshll.u32 %s9, 4
          %s788 = int_to_ptr.hbm [resolvable:$true] %s787
          %s789 = sshll.u32 [#allocation6], 4
          %s790 = int_to_ptr.vmem [resolvable:$true] %s789
          %792 = dma.hbm_to_vmem [thread:$0]  %s788, 16, %s790, [#allocation5]
        $region28: #{clip_forward.1} parent=11 // pred_fallthru
          _
        // Predicated region
        $region29: #{clip_forward.1} parent=11 // pred_check
          %p793 = pneg %p207
        $region30: #{clip_forward.1} parent=11 // pred_check_branch
          %795 = sbr.rel (%p793) target = $region32
        $region31: #{clip_forward.1} parent=11 // pred_region
          %797 = vsyncadd [#allocation8], 0
          %s799 = sshll.u32 %s11, 4
          %s800 = int_to_ptr.hbm [resolvable:$true] %s799
          %s801 = sshll.u32 [#allocation7], 4
          %s802 = int_to_ptr.vmem [resolvable:$true] %s801
          %804 = dma.hbm_to_vmem [thread:$0]  %s800, 16, %s802, [#allocation8]
        $region32: #{clip_forward.1} parent=11 // pred_fallthru
          _
        // Predicated region
        $region33: #{clip_forward.1} parent=11 // pred_check
          %p805 = pneg %p228
        $region34: #{clip_forward.1} parent=11 // pred_check_branch
          %807 = sbr.rel (%p805) target = $region36
        $region35: #{clip_forward.1} parent=11 // pred_region
          %809 = vsyncadd [#allocation8], 0
          %s811 = sshll.u32 %s13, 4
          %s812 = int_to_ptr.hbm [resolvable:$true] %s811
          %s813 = sshll.u32 [#allocation9], 4
          %s814 = int_to_ptr.vmem [resolvable:$true] %s813
          %816 = dma.hbm_to_vmem [thread:$0]  %s812, 16, %s814, [#allocation8]
        $region36: #{clip_forward.1} parent=11 // pred_fallthru
          _
        // Predicated region
        $region37: #{clip_forward.1} parent=11 // pred_check
          %p817 = pneg %p249
        $region38: #{clip_forward.1} parent=11 // pred_check_branch
          %819 = sbr.rel (%p817) target = $region40
        $region39: #{clip_forward.1} parent=11 // pred_region
          %821 = vsyncadd [#allocation11], 0
          %s823 = sshll.u32 %s15, 4
          %s824 = int_to_ptr.hbm [resolvable:$true] %s823
          %s825 = sshll.u32 [#allocation10], 4
          %s826 = int_to_ptr.vmem [resolvable:$true] %s825
          %828 = dma.hbm_to_vmem [thread:$0]  %s824, 16, %s826, [#allocation11]
        $region40: #{clip_forward.1} parent=11 // pred_fallthru
          _
        // Predicated region
        $region41: #{clip_forward.1} parent=11 // pred_check
          %p829 = pneg %p270
        $region42: #{clip_forward.1} parent=11 // pred_check_branch
          %831 = sbr.rel (%p829) target = $region44
        $region43: #{clip_forward.1} parent=11 // pred_region
          _
        $region44: #{clip_forward.1} parent=11 // pred_fallthru
          _
        // Predicated region
        $region45: #{clip_forward.1} parent=11 // pred_check
          %p832 = pneg %p291
        $region46: #{clip_forward.1} parent=11 // pred_check_branch
          %834 = sbr.rel (%p832) target = $region48
        $region47: #{clip_forward.1} parent=11 // pred_region
          _
        $region48: #{clip_forward.1} parent=11 // pred_fallthru
          _
        // Predicated region
        $region49: #{clip_forward.1} parent=11 // pred_check
          %p835 = pneg %p312
        $region50: #{clip_forward.1} parent=11 // pred_check_branch
          %837 = sbr.rel (%p835) target = $region52
        $region51: #{clip_forward.1} parent=11 // pred_region
          _
        $region52: #{clip_forward.1} parent=11 // pred_fallthru
          _
        // Predicated region
        $region53: #{clip_forward.1} parent=11 // pred_check
          %p838 = pneg %p333
        $region54: #{clip_forward.1} parent=11 // pred_check_branch
          %840 = sbr.rel (%p838) target = $region56
        $region55: #{clip_forward.1} parent=11 // pred_region
          %842 = vsyncadd [#allocation11], 0
          %s844 = sshll.u32 %s23, 4
          %s845 = int_to_ptr.hbm [resolvable:$true] %s844
          %s846 = sshll.u32 [#allocation12], 4
          %s847 = int_to_ptr.vmem [resolvable:$true] %s846
          %849 = dma.hbm_to_vmem [thread:$0]  %s845, 16, %s847, [#allocation11]
        $region56: #{clip_forward.1} parent=11 // pred_fallthru
          _
        // Predicated region
        $region57: #{clip_forward.1} parent=11 // pred_check
          %p850 = pneg %p354
        $region58: #{clip_forward.1} parent=11 // pred_check_branch
          %852 = sbr.rel (%p850) target = $region60
        $region59: #{clip_forward.1} parent=11 // pred_region
          %854 = vsyncadd [#allocation14], 0
          %s856 = sshll.u32 %s25, 4
          %s857 = int_to_ptr.hbm [resolvable:$true] %s856
          %s858 = sshll.u32 [#allocation13], 4
          %s859 = int_to_ptr.vmem [resolvable:$true] %s858
          %861 = dma.hbm_to_vmem [thread:$0]  %s857, 16, %s859, [#allocation14]
        $region60: #{clip_forward.1} parent=11 // pred_fallthru
          _
        // Predicated region
        $region61: #{clip_forward.1} parent=11 // pred_check
          %p862 = pneg %p375
        $region62: #{clip_forward.1} parent=11 // pred_check_branch
          %864 = sbr.rel (%p862) target = $region64
        $region63: #{clip_forward.1} parent=11 // pred_region
          %866 = vsyncadd [#allocation14], 0
          %s868 = sshll.u32 %s27, 4
          %s869 = int_to_ptr.hbm [resolvable:$true] %s868
          %s870 = sshll.u32 [#allocation15], 4
          %s871 = int_to_ptr.vmem [resolvable:$true] %s870
          %873 = dma.hbm_to_vmem [thread:$0]  %s869, 16, %s871, [#allocation14]
        $region64: #{clip_forward.1} parent=11 // pred_fallthru
          _
        // Predicated region
        $region65: #{clip_forward.1} parent=11 // pred_check
          %p874 = pneg %p396
        $region66: #{clip_forward.1} parent=11 // pred_check_branch
          %876 = sbr.rel (%p874) target = $region68
        $region67: #{clip_forward.1} parent=11 // pred_region
          _
        $region68: #{clip_forward.1} parent=11 // pred_fallthru
          _
        // Predicated region
        $region69: #{clip_forward.1} parent=11 // pred_check
          %p877 = pneg %p417
        $region70: #{clip_forward.1} parent=11 // pred_check_branch
          %879 = sbr.rel (%p877) target = $region72
        $region71: #{clip_forward.1} parent=11 // pred_region
          _
        $region72: #{clip_forward.1} parent=11 // pred_fallthru
          _
        // Predicated region
        $region73: #{clip_forward.1} parent=11 // pred_check
          %p880 = pneg %p438
        $region74: #{clip_forward.1} parent=11 // pred_check_branch
          %882 = sbr.rel (%p880) target = $region76
        $region75: #{clip_forward.1} parent=11 // pred_region
          _
        $region76: #{clip_forward.1} parent=11 // pred_fallthru
          _
        // Predicated region
        $region77: #{clip_forward.1} parent=11 // pred_check
          %p883 = pneg %p459
        $region78: #{clip_forward.1} parent=11 // pred_check_branch
          %885 = sbr.rel (%p883) target = $region80
        $region79: #{clip_forward.1} parent=11 // pred_region
          %887 = vsyncadd [#allocation17], 0
          %s889 = sshll.u32 %s35, 4
          %s890 = int_to_ptr.hbm [resolvable:$true] %s889
          %s891 = sshll.u32 [#allocation16], 4
          %s892 = int_to_ptr.vmem [resolvable:$true] %s891
          %894 = dma.hbm_to_vmem [thread:$0]  %s890, 16, %s892, [#allocation17]
        $region80: #{clip_forward.1} parent=11 // pred_fallthru
          _
        // Predicated region
        $region81: #{clip_forward.1} parent=11 // pred_check
          %p895 = pneg %p480
        $region82: #{clip_forward.1} parent=11 // pred_check_branch
          %897 = sbr.rel (%p895) target = $region84
        $region83: #{clip_forward.1} parent=11 // pred_region
          %899 = vsyncadd [#allocation17], 0
          %s901 = sshll.u32 %s37, 4
          %s902 = int_to_ptr.hbm [resolvable:$true] %s901
          %s903 = sshll.u32 [#allocation18], 4
          %s904 = int_to_ptr.vmem [resolvable:$true] %s903
          %906 = dma.hbm_to_vmem [thread:$0]  %s902, 16, %s904, [#allocation17]
        $region84: #{clip_forward.1} parent=11 // pred_fallthru
          _
        // Predicated region
        $region85: #{clip_forward.1} parent=11 // pred_check
          %p907 = pneg %p501
        $region86: #{clip_forward.1} parent=11 // pred_check_branch
          %909 = sbr.rel (%p907) target = $region88
        $region87: #{clip_forward.1} parent=11 // pred_region
          %911 = vsyncadd [#allocation20], 0
          %s913 = sshll.u32 %s39, 4
          %s914 = int_to_ptr.hbm [resolvable:$true] %s913
          %s915 = sshll.u32 [#allocation19], 4
          %s916 = int_to_ptr.vmem [resolvable:$true] %s915
          %918 = dma.hbm_to_vmem [thread:$0]  %s914, 16, %s916, [#allocation20]
        $region88: #{clip_forward.1} parent=11 // pred_fallthru
          _
        // Predicated region
        $region89: #{clip_forward.1} parent=11 // pred_check
          %p919 = pneg %p522
        $region90: #{clip_forward.1} parent=11 // pred_check_branch
          %921 = sbr.rel (%p919) target = $region92
        $region91: #{clip_forward.1} parent=11 // pred_region
          _
        $region92: #{clip_forward.1} parent=11 // pred_fallthru
          _
        // Predicated region
        $region93: #{clip_forward.1} parent=11 // pred_check
          %p922 = pneg %p543
        $region94: #{clip_forward.1} parent=11 // pred_check_branch
          %924 = sbr.rel (%p922) target = $region96
        $region95: #{clip_forward.1} parent=11 // pred_region
          %926 = vsyncadd [#allocation20], 0
          %s928 = sshll.u32 %s43, 4
          %s929 = int_to_ptr.hbm [resolvable:$true] %s928
          %s930 = sshll.u32 [#allocation21], 4
          %s931 = int_to_ptr.vmem [resolvable:$true] %s930
          %933 = dma.hbm_to_vmem [thread:$0]  %s929, 48, %s931, [#allocation20]
        $region96: #{clip_forward.1} parent=11 // pred_fallthru
          _
        // Predicated region
        $region97: #{clip_forward.1} parent=11 // pred_check
          %p934 = pneg %p564
        $region98: #{clip_forward.1} parent=11 // pred_check_branch
          %936 = sbr.rel (%p934) target = $region100
        $region99: #{clip_forward.1} parent=11 // pred_region
          _
        $region100: #{clip_forward.1} parent=11 // pred_fallthru
          _
        // Predicated region
        $region101: #{clip_forward.1} parent=11 // pred_check
          %p937 = pneg %p585
        $region102: #{clip_forward.1} parent=11 // pred_check_branch
          %939 = sbr.rel (%p937) target = $region104
        $region103: #{clip_forward.1} parent=11 // pred_region
          %941 = vsyncadd [#allocation23], 0
          %s943 = sshll.u32 %s47, 4
          %s944 = int_to_ptr.hbm [resolvable:$true] %s943
          %s945 = sshll.u32 [#allocation22], 4
          %s946 = int_to_ptr.vmem [resolvable:$true] %s945
          %948 = dma.hbm_to_vmem [thread:$0]  %s944, 16, %s946, [#allocation23]
        $region104: #{clip_forward.1} parent=11 // pred_fallthru
          _
        // Predicated region
        $region105: #{clip_forward.1} parent=11 // pred_check
          %p949 = pneg %p606
        $region106: #{clip_forward.1} parent=11 // pred_check_branch
          %951 = sbr.rel (%p949) target = $region108
        $region107: #{clip_forward.1} parent=11 // pred_region
          %953 = vsyncadd [#allocation23], 0
          %s955 = sshll.u32 %s49, 4
          %s956 = int_to_ptr.hbm [resolvable:$true] %s955
          %s957 = sshll.u32 [#allocation24], 4
          %s958 = int_to_ptr.vmem [resolvable:$true] %s957
          %960 = dma.hbm_to_vmem [thread:$0]  %s956, 16, %s958, [#allocation23]
        $region108: #{clip_forward.1} parent=11 // pred_fallthru
          _
        // Predicated region
        $region109: #{clip_forward.1} parent=11 // pred_check
          %p961 = pneg %p627
        $region110: #{clip_forward.1} parent=11 // pred_check_branch
          %963 = sbr.rel (%p961) target = $region112
        $region111: #{clip_forward.1} parent=11 // pred_region
          %965 = vsyncadd [#allocation26], 0
          %s967 = sshll.u32 %s51, 4
          %s968 = int_to_ptr.hbm [resolvable:$true] %s967
          %s969 = sshll.u32 [#allocation25], 4
          %s970 = int_to_ptr.vmem [resolvable:$true] %s969
          %972 = dma.hbm_to_vmem [thread:$0]  %s968, 16, %s970, [#allocation26]
        $region112: #{clip_forward.1} parent=11 // pred_fallthru
          _
        // Predicated region
        $region113: #{clip_forward.1} parent=11 // pred_check
          %p973 = pneg %p648
        $region114: #{clip_forward.1} parent=11 // pred_check_branch
          %975 = sbr.rel (%p973) target = $region116
        $region115: #{clip_forward.1} parent=11 // pred_region
          _
        $region116: #{clip_forward.1} parent=11 // pred_fallthru
          _
        // Predicated region
        $region117: #{clip_forward.1} parent=11 // pred_check
          %p976 = pneg %p669
        $region118: #{clip_forward.1} parent=11 // pred_check_branch
          %978 = sbr.rel (%p976) target = $region120
        $region119: #{clip_forward.1} parent=11 // pred_region
          _
        $region120: #{clip_forward.1} parent=11 // pred_fallthru
          _
        // Predicated region
        $region121: #{clip_forward.1} parent=11 // pred_check
          %p979 = pneg %p690
        $region122: #{clip_forward.1} parent=11 // pred_check_branch
          %981 = sbr.rel (%p979) target = $region124
        $region123: #{clip_forward.1} parent=11 // pred_region
          _
        $region124: #{clip_forward.1} parent=11 // pred_fallthru
          _
        // Predicated region
        $region125: #{clip_forward.1} parent=11 // pred_check
          %p982 = pneg %p711
        $region126: #{clip_forward.1} parent=11 // pred_check_branch
          %984 = sbr.rel (%p982) target = $region128
        $region127: #{clip_forward.1} parent=11 // pred_region
          %986 = vsyncadd [#allocation26], 0
          %s988 = sshll.u32 %s59, 4
          %s989 = int_to_ptr.hbm [resolvable:$true] %s988
          %s990 = sshll.u32 [#allocation27], 4
          %s991 = int_to_ptr.vmem [resolvable:$true] %s990
          %993 = dma.hbm_to_vmem [thread:$0]  %s989, 16, %s991, [#allocation26]
        $region128: #{clip_forward.1} parent=11 // pred_fallthru
          _
      $region12: #{clip_forward.1} parent=5 // pred_fallthru
        _
      %p994 = scmp.lt.s32.totalorder %s76, 2
      // Predicated region
      $region129: #{clip_forward.1} parent=5 // pred_check
        %p995 = pneg %p994
      $region130: #{clip_forward.1} parent=5 // pred_check_branch
        %997 = sbr.rel (%p995) target = $region132
      $region131: #{clip_forward.1} parent=5 // pred_region
        // Predicated region
        $region133: #{clip_forward.1} parent=131 // pred_check
          %p998 = pneg %p96
        $region134: #{clip_forward.1} parent=131 // pred_check_branch
          %1000 = sbr.rel (%p998) target = $region136
        $region135: #{clip_forward.1} parent=131 // pred_region
          %p1001 = scmp.lt.s32.totalorder %s76, 1
          %s1002 = scalar_select %p1001, %s76, 1
          %s1003 = smul.addr %s1002, 2
          %s1004 = smul.addr %s1003, 8
          %s1005 = scalar_lea.vmem %s1, %s1004
        $region136: #{clip_forward.1} parent=131 // pred_fallthru
          _
      $region132: #{clip_forward.1} parent=5 // pred_fallthru
        _
      %p1006 = scmp.le.s32.totalorder 1, %s76
      %p1007 = scmp.lt.s32.totalorder %s76, 3
      %p1008 = pnand %p1006, %p1007
      %p1009 = pneg %p1008
      // Predicated region
      $region137: #{clip_forward.1} parent=5 // pred_check
        _
      $region138: #{clip_forward.1} parent=5 // pred_check_branch
        %1011 = sbr.rel (%p1008) target = $region140
      $region139: #{clip_forward.1} parent=5 // pred_region
        %s1012 = ssub.s32 %s76, 1
        // Predicated region
        $region141: #{clip_forward.1} parent=139 // pred_check
          %p1013 = pneg %p144
        $region142: #{clip_forward.1} parent=139 // pred_check_branch
          %1015 = sbr.rel (%p1013) target = $region144
        $region143: #{clip_forward.1} parent=139 // pred_region
          %1017 = dma.done [#allocation3], 16
        $region144: #{clip_forward.1} parent=139 // pred_fallthru
          _
        // Predicated region
        $region145: #{clip_forward.1} parent=139 // pred_check
          %p1018 = pneg %p165
        $region146: #{clip_forward.1} parent=139 // pred_check_branch
          %1020 = sbr.rel (%p1018) target = $region148
        $region147: #{clip_forward.1} parent=139 // pred_region
          %1022 = dma.done [#allocation5], 256
        $region148: #{clip_forward.1} parent=139 // pred_fallthru
          _
        // Predicated region
        $region149: #{clip_forward.1} parent=139 // pred_check
          %p1023 = pneg %p186
        $region150: #{clip_forward.1} parent=139 // pred_check_branch
          %1025 = sbr.rel (%p1023) target = $region152
        $region151: #{clip_forward.1} parent=139 // pred_region
          %1027 = dma.done [#allocation5], 16
        $region152: #{clip_forward.1} parent=139 // pred_fallthru
          _
        // Predicated region
        $region153: #{clip_forward.1} parent=139 // pred_check
          %p1028 = pneg %p207
        $region154: #{clip_forward.1} parent=139 // pred_check_branch
          %1030 = sbr.rel (%p1028) target = $region156
        $region155: #{clip_forward.1} parent=139 // pred_region
          %1032 = dma.done [#allocation8], 16
        $region156: #{clip_forward.1} parent=139 // pred_fallthru
          _
        // Predicated region
        $region157: #{clip_forward.1} parent=139 // pred_check
          %p1033 = pneg %p228
        $region158: #{clip_forward.1} parent=139 // pred_check_branch
          %1035 = sbr.rel (%p1033) target = $region160
        $region159: #{clip_forward.1} parent=139 // pred_region
          %1037 = dma.done [#allocation8], 16
        $region160: #{clip_forward.1} parent=139 // pred_fallthru
          _
        // Predicated region
        $region161: #{clip_forward.1} parent=139 // pred_check
          %p1038 = pneg %p249
        $region162: #{clip_forward.1} parent=139 // pred_check_branch
          %1040 = sbr.rel (%p1038) target = $region164
        $region163: #{clip_forward.1} parent=139 // pred_region
          %1042 = dma.done [#allocation11], 16
        $region164: #{clip_forward.1} parent=139 // pred_fallthru
          _
        // Predicated region
        $region165: #{clip_forward.1} parent=139 // pred_check
          %p1043 = pneg %p333
        $region166: #{clip_forward.1} parent=139 // pred_check_branch
          %1045 = sbr.rel (%p1043) target = $region168
        $region167: #{clip_forward.1} parent=139 // pred_region
          %1047 = dma.done [#allocation11], 16
        $region168: #{clip_forward.1} parent=139 // pred_fallthru
          _
        // Predicated region
        $region169: #{clip_forward.1} parent=139 // pred_check
          %p1048 = pneg %p354
        $region170: #{clip_forward.1} parent=139 // pred_check_branch
          %1050 = sbr.rel (%p1048) target = $region172
        $region171: #{clip_forward.1} parent=139 // pred_region
          %1052 = dma.done [#allocation14], 16
        $region172: #{clip_forward.1} parent=139 // pred_fallthru
          _
        // Predicated region
        $region173: #{clip_forward.1} parent=139 // pred_check
          %p1053 = pneg %p375
        $region174: #{clip_forward.1} parent=139 // pred_check_branch
          %1055 = sbr.rel (%p1053) target = $region176
        $region175: #{clip_forward.1} parent=139 // pred_region
          %1057 = dma.done [#allocation14], 16
        $region176: #{clip_forward.1} parent=139 // pred_fallthru
          _
        // Predicated region
        $region177: #{clip_forward.1} parent=139 // pred_check
          %p1058 = pneg %p459
        $region178: #{clip_forward.1} parent=139 // pred_check_branch
          %1060 = sbr.rel (%p1058) target = $region180
        $region179: #{clip_forward.1} parent=139 // pred_region
          %1062 = dma.done [#allocation17], 16
        $region180: #{clip_forward.1} parent=139 // pred_fallthru
          _
        // Predicated region
        $region181: #{clip_forward.1} parent=139 // pred_check
          %p1063 = pneg %p480
        $region182: #{clip_forward.1} parent=139 // pred_check_branch
          %1065 = sbr.rel (%p1063) target = $region184
        $region183: #{clip_forward.1} parent=139 // pred_region
          %1067 = dma.done [#allocation17], 16
        $region184: #{clip_forward.1} parent=139 // pred_fallthru
          _
        // Predicated region
        $region185: #{clip_forward.1} parent=139 // pred_check
          %p1068 = pneg %p501
        $region186: #{clip_forward.1} parent=139 // pred_check_branch
          %1070 = sbr.rel (%p1068) target = $region188
        $region187: #{clip_forward.1} parent=139 // pred_region
          %1072 = dma.done [#allocation20], 16
        $region188: #{clip_forward.1} parent=139 // pred_fallthru
          _
        // Predicated region
        $region189: #{clip_forward.1} parent=139 // pred_check
          %p1073 = pneg %p543
        $region190: #{clip_forward.1} parent=139 // pred_check_branch
          %1075 = sbr.rel (%p1073) target = $region192
        $region191: #{clip_forward.1} parent=139 // pred_region
          %1077 = dma.done [#allocation20], 48
        $region192: #{clip_forward.1} parent=139 // pred_fallthru
          _
        // Predicated region
        $region193: #{clip_forward.1} parent=139 // pred_check
          %p1078 = pneg %p585
        $region194: #{clip_forward.1} parent=139 // pred_check_branch
          %1080 = sbr.rel (%p1078) target = $region196
        $region195: #{clip_forward.1} parent=139 // pred_region
          %1082 = dma.done [#allocation23], 16
        $region196: #{clip_forward.1} parent=139 // pred_fallthru
          _
        // Predicated region
        $region197: #{clip_forward.1} parent=139 // pred_check
          %p1083 = pneg %p606
        $region198: #{clip_forward.1} parent=139 // pred_check_branch
          %1085 = sbr.rel (%p1083) target = $region200
        $region199: #{clip_forward.1} parent=139 // pred_region
          %1087 = dma.done [#allocation23], 16
        $region200: #{clip_forward.1} parent=139 // pred_fallthru
          _
        // Predicated region
        $region201: #{clip_forward.1} parent=139 // pred_check
          %p1088 = pneg %p627
        $region202: #{clip_forward.1} parent=139 // pred_check_branch
          %1090 = sbr.rel (%p1088) target = $region204
        $region203: #{clip_forward.1} parent=139 // pred_region
          %1092 = dma.done [#allocation26], 16
        $region204: #{clip_forward.1} parent=139 // pred_fallthru
          _
        // Predicated region
        $region205: #{clip_forward.1} parent=139 // pred_check
          %p1093 = pneg %p711
        $region206: #{clip_forward.1} parent=139 // pred_check_branch
          %1095 = sbr.rel (%p1093) target = $region208
        $region207: #{clip_forward.1} parent=139 // pred_region
          %1097 = dma.done [#allocation26], 16
        $region208: #{clip_forward.1} parent=139 // pred_fallthru
          _
        %p1098 = scmp.lt.s32.totalorder %s81, 1
        %s1099 = scalar_select %p1098, %s81, 1
        %s1100 = smul.addr %s1099, 2
        %s1101 = smul.addr %s1100, 8
        %s1102 = scalar_lea.vmem %s1, %s1101
        %p1103 = pneg %p102
        %p1104 = pneg %p99
        %p1105 = pneg %p123
        %p1106 = pneg %p120
        %p1107 = pneg %p144
        %p1108 = pneg %p141
        %p1109 = pneg %p165
        %p1110 = pneg %p162
        %p1111 = pneg %p186
        %p1112 = pneg %p183
        %p1113 = pneg %p207
        %p1114 = pneg %p204
        %p1115 = pneg %p228
        %p1116 = pneg %p225
        %p1117 = pneg %p249
        %p1118 = pneg %p246
        %p1119 = pneg %p270
        %p1120 = pneg %p267
        %p1121 = pneg %p291
        %p1122 = pneg %p288
        %p1123 = pneg %p312
        %p1124 = pneg %p309
        %p1125 = pneg %p333
        %p1126 = pneg %p330
        %p1127 = pneg %p354
        %p1128 = pneg %p351
        %p1129 = pneg %p375
        %p1130 = pneg %p372
        %p1131 = pneg %p396
        %p1132 = pneg %p393
        %p1133 = pneg %p417
        %p1134 = pneg %p414
        %p1135 = pneg %p438
        %p1136 = pneg %p435
        %p1137 = pneg %p459
        %p1138 = pneg %p456
        %p1139 = pneg %p480
        %p1140 = pneg %p477
        %p1141 = pneg %p501
        %p1142 = pneg %p498
        %p1143 = pneg %p522
        %p1144 = pneg %p519
        %p1145 = pneg %p543
        %p1146 = pneg %p540
        %p1147 = pneg %p564
        %p1148 = pneg %p561
        %p1149 = pneg %p585
        %p1150 = pneg %p582
        %p1151 = pneg %p606
        %p1152 = pneg %p603
        %p1153 = pneg %p627
        %p1154 = pneg %p624
        %p1155 = pneg %p648
        %p1156 = pneg %p645
        %p1157 = pneg %p669
        %p1158 = pneg %p666
        %p1159 = pneg %p690
        %p1160 = pneg %p687
        %p1161 = pneg %p711
        %p1162 = pneg %p708
        %p1163 = pneg %p737
        %p1164 = pneg %p734
        %s1165 = sand.u32 %s724, 1
        %s1166 = sand.u32 %s724, 1
        %s1167 = smul.addr %s1166, 48
        %s1168 = scalar_lea.vmem [#allocation28], %s1167
        %p1169 = scmp.lt.s32.totalorder %s81, 1
        %s1170 = scalar_select %p1169, %s81, 1
        %s1171 = smul.addr %s1170, 2
        %s1172 = smul.addr %s1171, 8
        %s1173 = scalar_lea.vmem %s1, %s1172
        %s1174 = smul.u32 2, %s81
        %v1176 = vld [vmem:[%s1173] sm:$0xff]
        %v1177 = vld [vmem:[%s1173 + $0x8] sm:$0xff]
        %v1178 = vpack.c.bf16 %v1176, %v1176
        %v1179 = vpack.c.bf16 %v1177, %v1177
        %v1180 = vld [vmem:[%s3] sm:$0xf]
        %v1181 = vld [vmem:[%s3 + $0x4] sm:$0xf]
        %v1182 = vld [vmem:[%s3 + $0x8] sm:$0xf]
        %v1183 = vld [vmem:[%s3 + $0xc] sm:$0xf]
        %v1184 = vld [vmem:[%s3 + $0x10] sm:$0xf]
        %v1185 = vld [vmem:[%s3 + $0x14] sm:$0xf]
        %v1186 = vld [vmem:[%s3 + $0x18] sm:$0xf]
        %v1187 = vld [vmem:[%s3 + $0x1c] sm:$0xf]
        %v1188 = vld [vmem:[%s3 + $0x20] sm:$0xf]
        %v1189 = vld [vmem:[%s3 + $0x24] sm:$0xf]
        %v1190 = vld [vmem:[%s3 + $0x28] sm:$0xf]
        %v1191 = vld [vmem:[%s3 + $0x2c] sm:$0xf]
        %v1192 = vld [vmem:[%s3 + $0x30] sm:$0xf]
        %v1193 = vld [vmem:[%s3 + $0x34] sm:$0xf]
        %v1194 = vld [vmem:[%s3 + $0x38] sm:$0xf]
        %v1195 = vld [vmem:[%s3 + $0x3c] sm:$0xf]
        %v1196 = vld [vmem:[%s3 + $0x40] sm:$0xf]
        %v1197 = vld [vmem:[%s3 + $0x44] sm:$0xf]
        %v1198 = vld [vmem:[%s3 + $0x48] sm:$0xf]
        %v1199 = vld [vmem:[%s3 + $0x4c] sm:$0xf]
        %v1200 = vld [vmem:[%s3 + $0x50] sm:$0xf]
        %v1201 = vld [vmem:[%s3 + $0x54] sm:$0xf]
        %v1202 = vld [vmem:[%s3 + $0x58] sm:$0xf]
        %v1203 = vld [vmem:[%s3 + $0x5c] sm:$0xf]
        %v1228 = vunpack.c.l.b16 %v1180
        %v1229 = vunpack.c.l.b16 %v1181
        %v1230 = vunpack.c.l.b16 %v1182
        %v1231 = vunpack.c.l.b16 %v1183
        %v1232 = vunpack.c.l.b16 %v1184
        %v1233 = vunpack.c.l.b16 %v1185
        %v1234 = vunpack.c.l.b16 %v1186
        %v1235 = vunpack.c.l.b16 %v1187
        %v1236 = vunpack.c.l.b16 %v1188
        %v1237 = vunpack.c.l.b16 %v1189
        %v1238 = vunpack.c.l.b16 %v1190
        %v1239 = vunpack.c.l.b16 %v1191
        %v1240 = vunpack.c.l.b16 %v1192
        %v1241 = vunpack.c.l.b16 %v1193
        %v1242 = vunpack.c.l.b16 %v1194
        %v1243 = vunpack.c.l.b16 %v1195
        %v1244 = vunpack.c.l.b16 %v1196
        %v1245 = vunpack.c.l.b16 %v1197
        %v1246 = vunpack.c.l.b16 %v1198
        %v1247 = vunpack.c.l.b16 %v1199
        %v1248 = vunpack.c.l.b16 %v1200
        %v1249 = vunpack.c.l.b16 %v1201
        %v1250 = vunpack.c.l.b16 %v1202
        %v1251 = vunpack.c.l.b16 %v1203
        %v1252 = vpack.c.b16 %v1229, %v1228
        %v1253 = vpack.c.b16 %v1231, %v1230
        %v1254 = vpack.c.b16 %v1233, %v1232
        %v1255 = vpack.c.b16 %v1235, %v1234
        %v1256 = vpack.c.b16 %v1237, %v1236
        %v1257 = vpack.c.b16 %v1239, %v1238
        %v1258 = vpack.c.b16 %v1241, %v1240
        %v1259 = vpack.c.b16 %v1243, %v1242
        %v1260 = vpack.c.b16 %v1245, %v1244
        %v1261 = vpack.c.b16 %v1247, %v1246
        %v1262 = vpack.c.b16 %v1249, %v1248
        %v1263 = vpack.c.b16 %v1251, %v1250
        %vm1276 = vcmask 523264
        %v1278 = vsel %vm1276, %v1179, 0
        %1280 = vmatpush.bf16.msra.mxu0 %v1259
        %1281 = vmatpush.bf16.msra.mxu0 %v1258
        %1282 = vmatpush.bf16.msra.mxu0 %v1257
        %1283 = vmatpush.bf16.msra.mxu0 %v1256
        %1284 = vmatpush.bf16.msra.mxu0 %v1255
        %1285 = vmatpush.bf16.msra.mxu0 %v1254
        %1286 = vmatpush.bf16.msra.mxu0 %v1253
        %1287 = vmatpush.bf16.msra.mxu0 %v1252
        %1288 = vmatmul.bf16.gmra.mxu0 %v1178
        %v1289 = vpop.f32.mrf.mxu0
        %v1290 = vadd.f32 0.0, %v1289
        %v1291 = vpop.f32.mrf.mxu0
        %1292 = vdwg.mxu0
        %1293 = vmatpush.bf16.msra.mxu0 0
        %1294 = vmatpush.bf16.msra.mxu0 0
        %1295 = vmatpush.bf16.msra.mxu0 0
        %1296 = vmatpush.bf16.msra.mxu0 0
        %1297 = vmatpush.bf16.msra.mxu0 %v1263
        %1298 = vmatpush.bf16.msra.mxu0 %v1262
        %1299 = vmatpush.bf16.msra.mxu0 %v1261
        %1300 = vmatpush.bf16.msra.mxu0 %v1260
        %1301 = vmatmul.bf16.gmra.mxu0 %v1278
        %v1302 = vpop.f32.mrf.mxu0
        %v1303 = vadd.f32 %v1290, %v1302
        %v1304 = vpop.f32.mrf.mxu0
        %1305 = vdwg.mxu0
        %v1306 = vld [vmem:[#allocation2] sm:$0x1]
        %v1308 = vrot.slane %v1303, 7
        %v1310 = vrot.slane %v1303, 3
        %vm1312 = vcmask 1040384
        %v1313 = vsel %vm1312, %v1306, %v1308
        %vm1314 = vcmask 1044480
        %v1315 = vsel %vm1314, %v1313, 0.0
        %v1316 = vsel %vm1312, %v1306, %v1310
        %v1317 = vsel %vm1314, %v1316, 0.0
        %v1318 = vld [vmem:[#allocation4] sm:$0xff]
        %v1319 = vld [vmem:[#allocation4 + $0x8] sm:$0xff]
        %v1320 = vadd.f32 %v1315, %v1318
        %v1321 = vadd.f32 %v1317, %v1319
        %v1322 = vld [vmem:[#allocation6] sm:$0x1]
        %v1323 = vld [vmem:[#allocation7] sm:$0x1]
        %1324 = vadd.xlane.f32.xlu0 %v1320
        %v1325 = vpop.xlane.xlu0 %1324
        %1326 = vadd.xlane.f32.xlu0 %v1321
        %v1327 = vpop.xlane.xlu0 %1326
        %v1328 = vrcp.pop 128.0
        %v1329 = vmul.f32 128.0, %v1328
        %v1330 = vsub.f32 1.0, %v1329
        %v1331 = vmul.f32 %v1328, %v1330
        %v1332 = vadd.f32 %v1328, %v1331
        %vm1333 = vweird.f32 %v1328
        %v1334 = vsel %vm1333, %v1328, %v1332
        %v1335 = vmul.f32 %v1325, %v1334
        %v1336 = vmul.f32 %v1327, %v1334
        %v1337 = vsub.f32 %v1320, %v1335
        %v1338 = vsub.f32 %v1321, %v1336
        %v1339 = vmul.f32 %v1337, %v1337
        %v1340 = vmul.f32 %v1338, %v1338
        %1341 = vadd.xlane.f32.xlu0 %v1339
        %v1342 = vpop.xlane.xlu0 %1341
        %1343 = vadd.xlane.f32.xlu0 %v1340
        %v1344 = vpop.xlane.xlu0 %1343
        %v1345 = vmul.f32 %v1342, %v1334
        %v1346 = vmul.f32 %v1344, %v1334
        %v1347 = vadd.f32 %v1345, 1e-05
        %v1348 = vadd.f32 %v1346, 1e-05
        %v1349 = vrsqrt.pop %v1347
        %v1350 = vmul.f32 %v1349, %v1347
        %v1351 = vmul.f32 %v1350, %v1349
        %v1352 = vmul.f32 0.5, %v1351
        %v1353 = vsub.f32 1.5, %v1352
        %v1354 = vmul.f32 %v1349, %v1353
        %vm1355 = vweird.f32 %v1347
        %vm1356 = vweird.f32 %v1349
        %vm1357 = vmor %vm1355, %vm1356
        %v1358 = vsel %vm1357, %v1349, %v1354
        %v1359 = vrsqrt.pop %v1348
        %v1360 = vmul.f32 %v1359, %v1348
        %v1361 = vmul.f32 %v1360, %v1359
        %v1362 = vmul.f32 0.5, %v1361
        %v1363 = vsub.f32 1.5, %v1362
        %v1364 = vmul.f32 %v1359, %v1363
        %vm1365 = vweird.f32 %v1348
        %vm1366 = vweird.f32 %v1359
        %vm1367 = vmor %vm1365, %vm1366
        %v1368 = vsel %vm1367, %v1359, %v1364
        %v1369 = vmul.f32 %v1337, %v1358
        %v1370 = vmul.f32 %v1338, %v1368
        %v1372 = vperm.slane %v1322, 0
        %v1374 = vmul.f32 %v1369, %v1372
        %v1375 = vmul.f32 %v1370, %v1372
        %v1377 = vperm.slane %v1323, 0
        %v1379 = vadd.f32 %v1374, %v1377
        %v1380 = vadd.f32 %v1375, %v1377
        %1381 = vst [vmem:[%s1168] sm:$0xff] %v1379
        %1382 = vst [vmem:[%s1168 + $0x8] sm:$0xff] %v1380
        %v1383 = vlaneseq
        %v1384 = vand.u32 %v1383, 127
        %vm1385 = vcmp.lt.s32.totalorder %v1384, 5
        %v1386 = vsel %vm1385, 0.0, -1e+30
        %v1387 = vld [vmem:[#allocation9] sm:$0x1]
        %v1388 = vld [vmem:[#allocation10] sm:$0x1]
        %1389 = vadd.xlane.f32.xlu0 %v1379
        %v1390 = vpop.xlane.xlu0 %1389
        %1391 = vadd.xlane.f32.xlu0 %v1380
        %v1392 = vpop.xlane.xlu0 %1391
        %v1393 = vmul.f32 %v1390, %v1334
        %v1394 = vmul.f32 %v1392, %v1334
        %v1395 = vsub.f32 %v1379, %v1393
        %v1396 = vsub.f32 %v1380, %v1394
        %v1397 = vmul.f32 %v1395, %v1395
        %v1398 = vmul.f32 %v1396, %v1396
        %1399 = vadd.xlane.f32.xlu0 %v1397
        %v1400 = vpop.xlane.xlu0 %1399
        %1401 = vadd.xlane.f32.xlu0 %v1398
        %v1402 = vpop.xlane.xlu0 %1401
        %v1403 = vmul.f32 %v1400, %v1334
        %v1404 = vmul.f32 %v1402, %v1334
        %v1405 = vadd.f32 %v1403, 1e-05
        %v1406 = vadd.f32 %v1404, 1e-05
        %v1407 = vrsqrt.pop %v1405
        %v1408 = vmul.f32 %v1407, %v1405
        %v1409 = vmul.f32 %v1408, %v1407
        %v1410 = vmul.f32 0.5, %v1409
        %v1411 = vsub.f32 1.5, %v1410
        %v1412 = vmul.f32 %v1407, %v1411
        %vm1413 = vweird.f32 %v1405
        %vm1414 = vweird.f32 %v1407
        %vm1415 = vmor %vm1413, %vm1414
        %v1416 = vsel %vm1415, %v1407, %v1412
        %v1417 = vrsqrt.pop %v1406
        %v1418 = vmul.f32 %v1417, %v1406
        %v1419 = vmul.f32 %v1418, %v1417
        %v1420 = vmul.f32 0.5, %v1419
        %v1421 = vsub.f32 1.5, %v1420
        %v1422 = vmul.f32 %v1417, %v1421
        %vm1423 = vweird.f32 %v1406
        %vm1424 = vweird.f32 %v1417
        %vm1425 = vmor %vm1423, %vm1424
        %v1426 = vsel %vm1425, %v1417, %v1422
        %v1427 = vmul.f32 %v1395, %v1416
        %v1428 = vmul.f32 %v1396, %v1426
        %v1430 = vperm.slane %v1387, 0
        %v1432 = vmul.f32 %v1427, %v1430
        %v1433 = vmul.f32 %v1428, %v1430
        %v1435 = vperm.slane %v1388, 0
        %v1437 = vadd.f32 %v1432, %v1435
        %v1438 = vadd.f32 %v1433, %v1435
        %v1439 = vpack.c.bf16 %v1438, %v1437
        %v1440 = vld [vmem:[%s17] sm:$0xff]
        %v1441 = vld [vmem:[%s17 + $0x8] sm:$0xf]
        %v1442 = vld [vmem:[%s17 + $0xc] sm:$0xff]
        %v1443 = vld [vmem:[%s17 + $0x14] sm:$0xf]
        %v1444 = vld [vmem:[%s17 + $0x18] sm:$0xff]
        %v1445 = vld [vmem:[%s17 + $0x20] sm:$0xf]
        %v1446 = vld [vmem:[%s17 + $0x24] sm:$0xff]
        %v1447 = vld [vmem:[%s17 + $0x2c] sm:$0xf]
        %v1448 = vld [vmem:[%s17 + $0x30] sm:$0xff]
        %v1449 = vld [vmem:[%s17 + $0x38] sm:$0xf]
        %v1450 = vld [vmem:[%s17 + $0x3c] sm:$0xff]
        %v1451 = vld [vmem:[%s17 + $0x44] sm:$0xf]
        %v1452 = vld [vmem:[%s17 + $0x48] sm:$0xff]
        %v1453 = vld [vmem:[%s17 + $0x50] sm:$0xf]
        %v1454 = vld [vmem:[%s17 + $0x54] sm:$0xff]
        %v1455 = vld [vmem:[%s17 + $0x5c] sm:$0xf]
        %v1456 = vld [vmem:[%s17 + $0x60] sm:$0xff]
        %v1457 = vld [vmem:[%s17 + $0x68] sm:$0xf]
        %v1458 = vld [vmem:[%s17 + $0x6c] sm:$0xff]
        %v1459 = vld [vmem:[%s17 + $0x74] sm:$0xf]
        %v1460 = vld [vmem:[%s17 + $0x78] sm:$0xff]
        %v1461 = vld [vmem:[%s17 + $0x80] sm:$0xf]
        %v1462 = vld [vmem:[%s17 + $0x84] sm:$0xff]
        %v1463 = vld [vmem:[%s17 + $0x8c] sm:$0xf]
        %v1464 = vld [vmem:[%s17 + $0x90] sm:$0xff]
        %v1465 = vld [vmem:[%s17 + $0x98] sm:$0xf]
        %v1466 = vld [vmem:[%s17 + $0x9c] sm:$0xff]
        %v1467 = vld [vmem:[%s17 + $0xa4] sm:$0xf]
        %v1468 = vld [vmem:[%s17 + $0xa8] sm:$0xff]
        %v1469 = vld [vmem:[%s17 + $0xb0] sm:$0xf]
        %v1470 = vld [vmem:[%s17 + $0xb4] sm:$0xff]
        %v1471 = vld [vmem:[%s17 + $0xbc] sm:$0xf]
        %v1472 = vld [vmem:[%s19] sm:$0x7]
        %v1474 = vperm.slane %v1472, 0
        %v1475 = vperm.slane %v1472, 1
        %v1476 = vperm.slane %v1472, 2
        %v1512 = vunpack.c.l.b16 %v1440
        %v1513 = vunpack.c.h.b16 %v1440
        %v1514 = vunpack.c.l.b16 %v1441
        %v1515 = vunpack.c.l.b16 %v1442
        %v1516 = vunpack.c.h.b16 %v1442
        %v1517 = vunpack.c.l.b16 %v1443
        %v1518 = vunpack.c.l.b16 %v1444
        %v1519 = vunpack.c.h.b16 %v1444
        %v1520 = vunpack.c.l.b16 %v1445
        %v1521 = vunpack.c.l.b16 %v1446
        %v1522 = vunpack.c.h.b16 %v1446
        %v1523 = vunpack.c.l.b16 %v1447
        %v1524 = vunpack.c.l.b16 %v1448
        %v1525 = vunpack.c.h.b16 %v1448
        %v1526 = vunpack.c.l.b16 %v1449
        %v1527 = vunpack.c.l.b16 %v1450
        %v1528 = vunpack.c.h.b16 %v1450
        %v1529 = vunpack.c.l.b16 %v1451
        %v1530 = vunpack.c.l.b16 %v1452
        %v1531 = vunpack.c.h.b16 %v1452
        %v1532 = vunpack.c.l.b16 %v1453
        %v1533 = vunpack.c.l.b16 %v1454
        %v1534 = vunpack.c.h.b16 %v1454
        %v1535 = vunpack.c.l.b16 %v1455
        %v1536 = vunpack.c.l.b16 %v1456
        %v1537 = vunpack.c.h.b16 %v1456
        %v1538 = vunpack.c.l.b16 %v1457
        %v1539 = vunpack.c.l.b16 %v1458
        %v1540 = vunpack.c.h.b16 %v1458
        %v1541 = vunpack.c.l.b16 %v1459
        %v1542 = vunpack.c.l.b16 %v1460
        %v1543 = vunpack.c.h.b16 %v1460
        %v1544 = vunpack.c.l.b16 %v1461
        %v1545 = vunpack.c.l.b16 %v1462
        %v1546 = vunpack.c.h.b16 %v1462
        %v1547 = vunpack.c.l.b16 %v1463
        %v1548 = vunpack.c.l.b16 %v1464
        %v1549 = vunpack.c.h.b16 %v1464
        %v1550 = vunpack.c.l.b16 %v1465
        %v1551 = vunpack.c.l.b16 %v1466
        %v1552 = vunpack.c.h.b16 %v1466
        %v1553 = vunpack.c.l.b16 %v1467
        %v1554 = vunpack.c.l.b16 %v1468
        %v1555 = vunpack.c.h.b16 %v1468
        %v1556 = vunpack.c.l.b16 %v1469
        %v1557 = vunpack.c.l.b16 %v1470
        %v1558 = vunpack.c.h.b16 %v1470
        %v1559 = vunpack.c.l.b16 %v1471
        %v1560 = vpack.c.b16 %v1515, %v1512
        %v1561 = vpack.c.b16 %v1516, %v1513
        %v1562 = vpack.c.b16 %v1517, %v1514
        %v1563 = vpack.c.b16 %v1521, %v1518
        %v1564 = vpack.c.b16 %v1522, %v1519
        %v1565 = vpack.c.b16 %v1523, %v1520
        %v1566 = vpack.c.b16 %v1527, %v1524
        %v1567 = vpack.c.b16 %v1528, %v1525
        %v1568 = vpack.c.b16 %v1529, %v1526
        %v1569 = vpack.c.b16 %v1533, %v1530
        %v1570 = vpack.c.b16 %v1534, %v1531
        %v1571 = vpack.c.b16 %v1535, %v1532
        %v1572 = vpack.c.b16 %v1539, %v1536
        %v1573 = vpack.c.b16 %v1540, %v1537
        %v1574 = vpack.c.b16 %v1541, %v1538
        %v1575 = vpack.c.b16 %v1545, %v1542
        %v1576 = vpack.c.b16 %v1546, %v1543
        %v1577 = vpack.c.b16 %v1547, %v1544
        %v1578 = vpack.c.b16 %v1551, %v1548
        %v1579 = vpack.c.b16 %v1552, %v1549
        %v1580 = vpack.c.b16 %v1553, %v1550
        %v1581 = vpack.c.b16 %v1557, %v1554
        %v1582 = vpack.c.b16 %v1558, %v1555
        %v1583 = vpack.c.b16 %v1559, %v1556
        %1608 = vmatpush.bf16.msra.mxu0 %v1581
        %1609 = vmatpush.bf16.msra.mxu0 %v1578
        %1610 = vmatpush.bf16.msra.mxu0 %v1575
        %1611 = vmatpush.bf16.msra.mxu0 %v1572
        %1612 = vmatpush.bf16.msra.mxu0 %v1569
        %1613 = vmatpush.bf16.msra.mxu0 %v1566
        %1614 = vmatpush.bf16.msra.mxu0 %v1563
        %1615 = vmatpush.bf16.msra.mxu0 %v1560
        %1616 = vmatmul.bf16.gmra.mxu0 %v1439
        %v1617 = vpop.f32.mrf.mxu0
        %v1618 = vadd.f32 %v1474, %v1617
        %v1619 = vpop.f32.mrf.mxu0
        %v1620 = vadd.f32 %v1474, %v1619
        %1621 = vdwg.mxu0
        %1622 = vmatpush.bf16.msra.mxu0 %v1582
        %1623 = vmatpush.bf16.msra.mxu0 %v1579
        %1624 = vmatpush.bf16.msra.mxu0 %v1576
        %1625 = vmatpush.bf16.msra.mxu0 %v1573
        %1626 = vmatpush.bf16.msra.mxu0 %v1570
        %1627 = vmatpush.bf16.msra.mxu0 %v1567
        %1628 = vmatpush.bf16.msra.mxu0 %v1564
        %1629 = vmatpush.bf16.msra.mxu0 %v1561
        %1630 = vmatmul.bf16.gmra.mxu0 %v1439
        %v1631 = vpop.f32.mrf.mxu0
        %v1632 = vadd.f32 %v1475, %v1631
        %v1633 = vpop.f32.mrf.mxu0
        %v1634 = vadd.f32 %v1475, %v1633
        %1635 = vdwg.mxu0
        %1636 = vmatpush.bf16.msra.mxu0 %v1583
        %1637 = vmatpush.bf16.msra.mxu0 %v1580
        %1638 = vmatpush.bf16.msra.mxu0 %v1577
        %1639 = vmatpush.bf16.msra.mxu0 %v1574
        %1640 = vmatpush.bf16.msra.mxu0 %v1571
        %1641 = vmatpush.bf16.msra.mxu0 %v1568
        %1642 = vmatpush.bf16.msra.mxu0 %v1565
        %1643 = vmatpush.bf16.msra.mxu0 %v1562
        %1644 = vmatmul.bf16.gmra.mxu0 %v1439
        %v1645 = vpop.f32.mrf.mxu0
        %v1646 = vadd.f32 %v1476, %v1645
        %v1647 = vpop.f32.mrf.mxu0
        %v1648 = vadd.f32 %v1476, %v1647
        %1649 = vdwg.mxu0
        %v1650 = vpack.c.bf16 %v1618, %v1618
        %v1651 = vpack.c.bf16 %v1620, %v1620
        %v1652 = vpack.c.bf16 %v1632, %v1632
        %v1653 = vpack.c.bf16 %v1634, %v1634
        %vm1654 = vcmask 261120
        %v1656 = vsel %vm1654, %v1650, 0
        %v1659 = vsel %vm1654, %v1652, 0
        %1661 = vmatpush.bf16.xpose.msra.mxu0 0
        %1662 = vmatpush.bf16.xpose.msra.mxu0 0
        %1663 = vmatpush.bf16.xpose.msra.mxu0 0
        %1664 = vmatpush.bf16.xpose.msra.mxu0 0
        %1665 = vmatpush.bf16.xpose.msra.mxu0 0
        %1666 = vmatpush.bf16.xpose.msra.mxu0 0
        %1667 = vmatpush.bf16.xpose.msra.mxu0 0
        %1668 = vmatpush.bf16.xpose.msra.mxu0 %v1659
        %1669 = vmatmul.bf16.gmra.mxu0 %v1656
        %v1670 = vpop.f32.mrf.mxu0
        %v1671 = vadd.f32 %v1386, %v1670
        %v1672 = vpop.f32.mrf.mxu0
        %1673 = vdwg.mxu0
        %v1675 = vsel %vm1654, %v1651, 0
        %v1678 = vsel %vm1654, %v1653, 0
        %1680 = vmatpush.bf16.xpose.msra.mxu0 0
        %1681 = vmatpush.bf16.xpose.msra.mxu0 0
        %1682 = vmatpush.bf16.xpose.msra.mxu0 0
        %1683 = vmatpush.bf16.xpose.msra.mxu0 0
        %1684 = vmatpush.bf16.xpose.msra.mxu0 0
        %1685 = vmatpush.bf16.xpose.msra.mxu0 0
        %1686 = vmatpush.bf16.xpose.msra.mxu0 0
        %1687 = vmatpush.bf16.xpose.msra.mxu0 %v1678
        %1688 = vmatmul.bf16.gmra.mxu0 %v1675
        %v1689 = vpop.f32.mrf.mxu0
        %v1690 = vadd.f32 %v1386, %v1689
        %v1691 = vpop.f32.mrf.mxu0
        %1692 = vdwg.mxu0
        %vm1693 = vcmask 64512
        %v1694 = vsel %vm1693, %v1671, -inf
        %1695 = vmax.xlane.f32.xlu0 %v1694
        %v1696 = vpop.xlane.xlu0 %1695
        %v1697 = vsel %vm1693, %v1690, -inf
        %1698 = vmax.xlane.f32.xlu0 %v1697
        %v1699 = vpop.xlane.xlu0 %1698
        %v1700 = vsub.f32 %v1671, %v1696
        %v1701 = vsub.f32 %v1690, %v1699
        %v1702 = vmul.f32 %v1700, 1.442695
        %v1703 = vpow.pop %v1702
        %v1704 = vmul.f32 %v1701, 1.442695
        %v1705 = vpow.pop %v1704
        %v1706 = vsel %vm1693, %v1703, 0.0
        %1707 = vadd.xlane.f32.xlu0 %v1706
        %v1708 = vpop.xlane.xlu0 %1707
        %v1709 = vsel %vm1693, %v1705, 0.0
        %1710 = vadd.xlane.f32.xlu0 %v1709
        %v1711 = vpop.xlane.xlu0 %1710
        %v1712 = vrcp.pop %v1708
        %v1713 = vrcp.pop %v1711
        %v1714 = vmul.f32 %v1703, %v1712
        %v1715 = vmul.f32 %v1705, %v1713
        %v1716 = vpack.c.bf16 %v1714, %v1714
        %v1717 = vpack.c.bf16 %v1715, %v1715
        %v1718 = vpack.c.bf16 %v1646, %v1646
        %v1719 = vpack.c.bf16 %v1648, %v1648
        %v1721 = vsel %vm1693, %v1716, 0
        %vm1723 = vcmask 1043456
        %v1725 = vsel %vm1723, %v1718, 0
        %1727 = vmatpush.bf16.msra.mxu0 0
        %1728 = vmatpush.bf16.msra.mxu0 0
        %1729 = vmatpush.bf16.msra.mxu0 0
        %1730 = vmatpush.bf16.msra.mxu0 0
        %1731 = vmatpush.bf16.msra.mxu0 0
        %1732 = vmatpush.bf16.msra.mxu0 0
        %1733 = vmatpush.bf16.msra.mxu0 0
        %1734 = vmatpush.bf16.msra.mxu0 %v1725
        %1735 = vmatmul.bf16.gmra.mxu0 %v1721
        %v1736 = vpop.f32.mrf.mxu0
        %v1737 = vadd.f32 0.0, %v1736
        %v1738 = vpop.f32.mrf.mxu0
        %1739 = vdwg.mxu0
        %v1741 = vsel %vm1693, %v1717, 0
        %v1744 = vsel %vm1723, %v1719, 0
        %1746 = vmatpush.bf16.msra.mxu0 0
        %1747 = vmatpush.bf16.msra.mxu0 0
        %1748 = vmatpush.bf16.msra.mxu0 0
        %1749 = vmatpush.bf16.msra.mxu0 0
        %1750 = vmatpush.bf16.msra.mxu0 0
        %1751 = vmatpush.bf16.msra.mxu0 0
        %1752 = vmatpush.bf16.msra.mxu0 0
        %1753 = vmatpush.bf16.msra.mxu0 %v1744
        %1754 = vmatmul.bf16.gmra.mxu0 %v1741
        %v1755 = vpop.f32.mrf.mxu0
        %v1756 = vadd.f32 0.0, %v1755
        %v1757 = vpop.f32.mrf.mxu0
        %1758 = vdwg.mxu0
        %v1759 = vpack.c.bf16 %v1756, %v1737
        %v1760 = vld [vmem:[%s21] sm:$0xf]
        %v1761 = vld [vmem:[%s21 + $0x4] sm:$0xf]
        %v1762 = vld [vmem:[%s21 + $0x8] sm:$0xf]
        %v1763 = vld [vmem:[%s21 + $0xc] sm:$0xf]
        %v1765 = vunpack.c.l.b16 %v1650
        %v1766 = vpack.c.b16 %v1765, %v1765
        %1767 = vrot.lane.b32.xlu0 %v1766, 96
        %v1768 = vpop.permute.xlu0 %1767
        %v1770 = vunpack.c.l.b16 %v1652
        %v1771 = vpack.c.b16 %v1770, %v1770
        %1772 = vrot.lane.b32.xlu0 %v1771, 96
        %v1773 = vpop.permute.xlu0 %1772
        %v1775 = vsel %vm1654, %v1768, 0
        %v1778 = vsel %vm1654, %v1773, 0
        %1780 = vmatpush.bf16.xpose.msra.mxu0 0
        %1781 = vmatpush.bf16.xpose.msra.mxu0 0
        %1782 = vmatpush.bf16.xpose.msra.mxu0 0
        %1783 = vmatpush.bf16.xpose.msra.mxu0 0
        %1784 = vmatpush.bf16.xpose.msra.mxu0 0
        %1785 = vmatpush.bf16.xpose.msra.mxu0 0
        %1786 = vmatpush.bf16.xpose.msra.mxu0 0
        %1787 = vmatpush.bf16.xpose.msra.mxu0 %v1778
        %1788 = vmatmul.bf16.gmra.mxu0 %v1775
        %v1789 = vpop.f32.mrf.mxu0
        %v1790 = vadd.f32 %v1386, %v1789
        %v1791 = vpop.f32.mrf.mxu0
        %1792 = vdwg.mxu0
        %v1794 = vunpack.c.l.b16 %v1651
        %v1795 = vpack.c.b16 %v1794, %v1794
        %1796 = vrot.lane.b32.xlu0 %v1795, 96
        %v1797 = vpop.permute.xlu0 %1796
        %v1799 = vunpack.c.l.b16 %v1653
        %v1800 = vpack.c.b16 %v1799, %v1799
        %1801 = vrot.lane.b32.xlu0 %v1800, 96
        %v1802 = vpop.permute.xlu0 %1801
        %v1804 = vsel %vm1654, %v1797, 0
        %v1807 = vsel %vm1654, %v1802, 0
        %1809 = vmatpush.bf16.xpose.msra.mxu0 0
        %1810 = vmatpush.bf16.xpose.msra.mxu0 0
        %1811 = vmatpush.bf16.xpose.msra.mxu0 0
        %1812 = vmatpush.bf16.xpose.msra.mxu0 0
        %1813 = vmatpush.bf16.xpose.msra.mxu0 0
        %1814 = vmatpush.bf16.xpose.msra.mxu0 0
        %1815 = vmatpush.bf16.xpose.msra.mxu0 0
        %1816 = vmatpush.bf16.xpose.msra.mxu0 %v1807
        %1817 = vmatmul.bf16.gmra.mxu0 %v1804
        %v1818 = vpop.f32.mrf.mxu0
        %v1819 = vadd.f32 %v1386, %v1818
        %v1820 = vpop.f32.mrf.mxu0
        %1821 = vdwg.mxu0
        %v1822 = vsel %vm1693, %v1790, -inf
        %1823 = vmax.xlane.f32.xlu0 %v1822
        %v1824 = vpop.xlane.xlu0 %1823
        %v1825 = vsel %vm1693, %v1819, -inf
        %1826 = vmax.xlane.f32.xlu0 %v1825
        %v1827 = vpop.xlane.xlu0 %1826
        %v1828 = vsub.f32 %v1790, %v1824
        %v1829 = vsub.f32 %v1819, %v1827
        %v1830 = vmul.f32 %v1828, 1.442695
        %v1831 = vpow.pop %v1830
        %v1832 = vmul.f32 %v1829, 1.442695
        %v1833 = vpow.pop %v1832
        %v1834 = vsel %vm1693, %v1831, 0.0
        %1835 = vadd.xlane.f32.xlu0 %v1834
        %v1836 = vpop.xlane.xlu0 %1835
        %v1837 = vsel %vm1693, %v1833, 0.0
        %1838 = vadd.xlane.f32.xlu0 %v1837
        %v1839 = vpop.xlane.xlu0 %1838
        %v1840 = vrcp.pop %v1836
        %v1841 = vrcp.pop %v1839
        %v1842 = vmul.f32 %v1831, %v1840
        %v1843 = vmul.f32 %v1833, %v1841
        %v1844 = vpack.c.bf16 %v1842, %v1842
        %v1845 = vpack.c.bf16 %v1843, %v1843
        %v1847 = vunpack.c.l.b16 %v1718
        %v1848 = vpack.c.b16 %v1847, %v1847
        %1849 = vrot.lane.b32.xlu0 %v1848, 96
        %v1850 = vpop.permute.xlu0 %1849
        %v1852 = vsel %vm1693, %v1844, 0
        %v1855 = vsel %vm1723, %v1850, 0
        %1857 = vmatpush.bf16.msra.mxu0 0
        %1858 = vmatpush.bf16.msra.mxu0 0
        %1859 = vmatpush.bf16.msra.mxu0 0
        %1860 = vmatpush.bf16.msra.mxu0 0
        %1861 = vmatpush.bf16.msra.mxu0 0
        %1862 = vmatpush.bf16.msra.mxu0 0
        %1863 = vmatpush.bf16.msra.mxu0 0
        %1864 = vmatpush.bf16.msra.mxu0 %v1855
        %1865 = vmatmul.bf16.gmra.mxu0 %v1852
        %v1866 = vpop.f32.mrf.mxu0
        %v1867 = vadd.f32 0.0, %v1866
        %v1868 = vpop.f32.mrf.mxu0
        %1869 = vdwg.mxu0
        %v1871 = vunpack.c.l.b16 %v1719
        %v1872 = vpack.c.b16 %v1871, %v1871
        %1873 = vrot.lane.b32.xlu0 %v1872, 96
        %v1874 = vpop.permute.xlu0 %1873
        %v1876 = vsel %vm1693, %v1845, 0
        %v1879 = vsel %vm1723, %v1874, 0
        %1881 = vmatpush.bf16.msra.mxu0 0
        %1882 = vmatpush.bf16.msra.mxu0 0
        %1883 = vmatpush.bf16.msra.mxu0 0
        %1884 = vmatpush.bf16.msra.mxu0 0
        %1885 = vmatpush.bf16.msra.mxu0 0
        %1886 = vmatpush.bf16.msra.mxu0 0
        %1887 = vmatpush.bf16.msra.mxu0 0
        %1888 = vmatpush.bf16.msra.mxu0 %v1879
        %1889 = vmatmul.bf16.gmra.mxu0 %v1876
        %v1890 = vpop.f32.mrf.mxu0
        %v1891 = vadd.f32 0.0, %v1890
        %v1892 = vpop.f32.mrf.mxu0
        %1893 = vdwg.mxu0
        %v1894 = vpack.c.bf16 %v1891, %v1867
        %s1895 = scalar_lea.vmem %s21, 16
        %v1896 = vld [vmem:[%s1895] sm:$0xf]
        %v1897 = vld [vmem:[%s1895 + $0x4] sm:$0xf]
        %v1898 = vld [vmem:[%s1895 + $0x8] sm:$0xf]
        %v1899 = vld [vmem:[%s1895 + $0xc] sm:$0xf]
        %v1904 = vunpack.c.l.b16 %v1896
        %v1905 = vunpack.c.l.b16 %v1897
        %v1906 = vunpack.c.l.b16 %v1898
        %v1907 = vunpack.c.l.b16 %v1899
        %v1908 = vpack.c.b16 %v1905, %v1904
        %v1909 = vpack.c.b16 %v1907, %v1906
        %v1913 = vsel %vm1654, %v1894, 0
        %1915 = vmatpush.bf16.msra.mxu0 0
        %1916 = vmatpush.bf16.msra.mxu0 0
        %1917 = vmatpush.bf16.msra.mxu0 0
        %1918 = vmatpush.bf16.msra.mxu0 0
        %1919 = vmatpush.bf16.msra.mxu0 0
        %1920 = vmatpush.bf16.msra.mxu0 0
        %1921 = vmatpush.bf16.msra.mxu0 %v1909
        %1922 = vmatpush.bf16.msra.mxu0 %v1908
        %1923 = vmatmul.bf16.gmra.mxu0 %v1913
        %v1924 = vpop.f32.mrf.mxu0
        %v1925 = vadd.f32 0.0, %v1924
        %v1926 = vpop.f32.mrf.mxu0
        %v1927 = vadd.f32 0.0, %v1926
        %1928 = vdwg.mxu0
        %v1933 = vunpack.c.l.b16 %v1760
        %v1934 = vunpack.c.l.b16 %v1761
        %v1935 = vunpack.c.l.b16 %v1762
        %v1936 = vunpack.c.l.b16 %v1763
        %v1937 = vpack.c.b16 %v1934, %v1933
        %v1938 = vpack.c.b16 %v1936, %v1935
        %v1942 = vsel %vm1654, %v1759, 0
        %1944 = vmatpush.bf16.msra.mxu0 0
        %1945 = vmatpush.bf16.msra.mxu0 0
        %1946 = vmatpush.bf16.msra.mxu0 0
        %1947 = vmatpush.bf16.msra.mxu0 0
        %1948 = vmatpush.bf16.msra.mxu0 0
        %1949 = vmatpush.bf16.msra.mxu0 0
        %1950 = vmatpush.bf16.msra.mxu0 %v1938
        %1951 = vmatpush.bf16.msra.mxu0 %v1937
        %1952 = vmatmul.bf16.gmra.mxu0 %v1942
        %v1953 = vpop.f32.mrf.mxu0
        %v1954 = vadd.f32 %v1925, %v1953
        %v1955 = vpop.f32.mrf.mxu0
        %v1956 = vadd.f32 %v1927, %v1955
        %1957 = vdwg.mxu0
        %1958 = vrot.lane.b32.xlu0 %v1766, 64
        %v1959 = vpop.permute.xlu0 %1958
        %1960 = vrot.lane.b32.xlu0 %v1771, 64
        %v1961 = vpop.permute.xlu0 %1960
        %v1963 = vsel %vm1654, %v1959, 0
        %v1966 = vsel %vm1654, %v1961, 0
        %1968 = vmatpush.bf16.xpose.msra.mxu0 0
        %1969 = vmatpush.bf16.xpose.msra.mxu0 0
        %1970 = vmatpush.bf16.xpose.msra.mxu0 0
        %1971 = vmatpush.bf16.xpose.msra.mxu0 0
        %1972 = vmatpush.bf16.xpose.msra.mxu0 0
        %1973 = vmatpush.bf16.xpose.msra.mxu0 0
        %1974 = vmatpush.bf16.xpose.msra.mxu0 0
        %1975 = vmatpush.bf16.xpose.msra.mxu0 %v1966
        %1976 = vmatmul.bf16.gmra.mxu0 %v1963
        %v1977 = vpop.f32.mrf.mxu0
        %v1978 = vadd.f32 %v1386, %v1977
        %v1979 = vpop.f32.mrf.mxu0
        %1980 = vdwg.mxu0
        %1981 = vrot.lane.b32.xlu0 %v1795, 64
        %v1982 = vpop.permute.xlu0 %1981
        %1983 = vrot.lane.b32.xlu0 %v1800, 64
        %v1984 = vpop.permute.xlu0 %1983
        %v1986 = vsel %vm1654, %v1982, 0
        %v1989 = vsel %vm1654, %v1984, 0
        %1991 = vmatpush.bf16.xpose.msra.mxu0 0
        %1992 = vmatpush.bf16.xpose.msra.mxu0 0
        %1993 = vmatpush.bf16.xpose.msra.mxu0 0
        %1994 = vmatpush.bf16.xpose.msra.mxu0 0
        %1995 = vmatpush.bf16.xpose.msra.mxu0 0
        %1996 = vmatpush.bf16.xpose.msra.mxu0 0
        %1997 = vmatpush.bf16.xpose.msra.mxu0 0
        %1998 = vmatpush.bf16.xpose.msra.mxu0 %v1989
        %1999 = vmatmul.bf16.gmra.mxu0 %v1986
        %v2000 = vpop.f32.mrf.mxu0
        %v2001 = vadd.f32 %v1386, %v2000
        %v2002 = vpop.f32.mrf.mxu0
        %2003 = vdwg.mxu0
        %v2004 = vsel %vm1693, %v1978, -inf
        %2005 = vmax.xlane.f32.xlu0 %v2004
        %v2006 = vpop.xlane.xlu0 %2005
        %v2007 = vsel %vm1693, %v2001, -inf
        %2008 = vmax.xlane.f32.xlu0 %v2007
        %v2009 = vpop.xlane.xlu0 %2008
        %v2010 = vsub.f32 %v1978, %v2006
        %v2011 = vsub.f32 %v2001, %v2009
        %v2012 = vmul.f32 %v2010, 1.442695
        %v2013 = vpow.pop %v2012
        %v2014 = vmul.f32 %v2011, 1.442695
        %v2015 = vpow.pop %v2014
        %v2016 = vsel %vm1693, %v2013, 0.0
        %2017 = vadd.xlane.f32.xlu0 %v2016
        %v2018 = vpop.xlane.xlu0 %2017
        %v2019 = vsel %vm1693, %v2015, 0.0
        %2020 = vadd.xlane.f32.xlu0 %v2019
        %v2021 = vpop.xlane.xlu0 %2020
        %v2022 = vrcp.pop %v2018
        %v2023 = vrcp.pop %v2021
        %v2024 = vmul.f32 %v2013, %v2022
        %v2025 = vmul.f32 %v2015, %v2023
        %v2026 = vpack.c.bf16 %v2024, %v2024
        %v2027 = vpack.c.bf16 %v2025, %v2025
        %2028 = vrot.lane.b32.xlu0 %v1848, 64
        %v2029 = vpop.permute.xlu0 %2028
        %v2031 = vsel %vm1693, %v2026, 0
        %v2034 = vsel %vm1723, %v2029, 0
        %2036 = vmatpush.bf16.msra.mxu0 0
        %2037 = vmatpush.bf16.msra.mxu0 0
        %2038 = vmatpush.bf16.msra.mxu0 0
        %2039 = vmatpush.bf16.msra.mxu0 0
        %2040 = vmatpush.bf16.msra.mxu0 0
        %2041 = vmatpush.bf16.msra.mxu0 0
        %2042 = vmatpush.bf16.msra.mxu0 0
        %2043 = vmatpush.bf16.msra.mxu0 %v2034
        %2044 = vmatmul.bf16.gmra.mxu0 %v2031
        %v2045 = vpop.f32.mrf.mxu0
        %v2046 = vadd.f32 0.0, %v2045
        %v2047 = vpop.f32.mrf.mxu0
        %2048 = vdwg.mxu0
        %2049 = vrot.lane.b32.xlu0 %v1872, 64
        %v2050 = vpop.permute.xlu0 %2049
        %v2052 = vsel %vm1693, %v2027, 0
        %v2055 = vsel %vm1723, %v2050, 0
        %2057 = vmatpush.bf16.msra.mxu0 0
        %2058 = vmatpush.bf16.msra.mxu0 0
        %2059 = vmatpush.bf16.msra.mxu0 0
        %2060 = vmatpush.bf16.msra.mxu0 0
        %2061 = vmatpush.bf16.msra.mxu0 0
        %2062 = vmatpush.bf16.msra.mxu0 0
        %2063 = vmatpush.bf16.msra.mxu0 0
        %2064 = vmatpush.bf16.msra.mxu0 %v2055
        %2065 = vmatmul.bf16.gmra.mxu0 %v2052
        %v2066 = vpop.f32.mrf.mxu0
        %v2067 = vadd.f32 0.0, %v2066
        %v2068 = vpop.f32.mrf.mxu0
        %2069 = vdwg.mxu0
        %v2070 = vpack.c.bf16 %v2067, %v2046
        %s2071 = scalar_lea.vmem %s21, 32
        %v2072 = vld [vmem:[%s2071] sm:$0xf]
        %v2073 = vld [vmem:[%s2071 + $0x4] sm:$0xf]
        %v2074 = vld [vmem:[%s2071 + $0x8] sm:$0xf]
        %v2075 = vld [vmem:[%s2071 + $0xc] sm:$0xf]
        %v2080 = vunpack.c.l.b16 %v2072
        %v2081 = vunpack.c.l.b16 %v2073
        %v2082 = vunpack.c.l.b16 %v2074
        %v2083 = vunpack.c.l.b16 %v2075
        %v2084 = vpack.c.b16 %v2081, %v2080
        %v2085 = vpack.c.b16 %v2083, %v2082
        %v2089 = vsel %vm1654, %v2070, 0
        %2091 = vmatpush.bf16.msra.mxu0 0
        %2092 = vmatpush.bf16.msra.mxu0 0
        %2093 = vmatpush.bf16.msra.mxu0 0
        %2094 = vmatpush.bf16.msra.mxu0 0
        %2095 = vmatpush.bf16.msra.mxu0 0
        %2096 = vmatpush.bf16.msra.mxu0 0
        %2097 = vmatpush.bf16.msra.mxu0 %v2085
        %2098 = vmatpush.bf16.msra.mxu0 %v2084
        %2099 = vmatmul.bf16.gmra.mxu0 %v2089
        %v2100 = vpop.f32.mrf.mxu0
        %v2101 = vadd.f32 0.0, %v2100
        %v2102 = vpop.f32.mrf.mxu0
        %v2103 = vadd.f32 0.0, %v2102
        %2104 = vdwg.mxu0
        %v2105 = vadd.f32 %v1954, %v2101
        %v2106 = vadd.f32 %v1956, %v2103
        %2107 = vrot.lane.b32.xlu0 %v1766, 32
        %v2108 = vpop.permute.xlu0 %2107
        %2109 = vrot.lane.b32.xlu0 %v1771, 32
        %v2110 = vpop.permute.xlu0 %2109
        %v2112 = vsel %vm1654, %v2108, 0
        %v2115 = vsel %vm1654, %v2110, 0
        %2117 = vmatpush.bf16.xpose.msra.mxu0 0
        %2118 = vmatpush.bf16.xpose.msra.mxu0 0
        %2119 = vmatpush.bf16.xpose.msra.mxu0 0
        %2120 = vmatpush.bf16.xpose.msra.mxu0 0
        %2121 = vmatpush.bf16.xpose.msra.mxu0 0
        %2122 = vmatpush.bf16.xpose.msra.mxu0 0
        %2123 = vmatpush.bf16.xpose.msra.mxu0 0
        %2124 = vmatpush.bf16.xpose.msra.mxu0 %v2115
        %2125 = vmatmul.bf16.gmra.mxu0 %v2112
        %v2126 = vpop.f32.mrf.mxu0
        %v2127 = vadd.f32 %v1386, %v2126
        %v2128 = vpop.f32.mrf.mxu0
        %2129 = vdwg.mxu0
        %2130 = vrot.lane.b32.xlu0 %v1795, 32
        %v2131 = vpop.permute.xlu0 %2130
        %2132 = vrot.lane.b32.xlu0 %v1800, 32
        %v2133 = vpop.permute.xlu0 %2132
        %v2135 = vsel %vm1654, %v2131, 0
        %v2138 = vsel %vm1654, %v2133, 0
        %2140 = vmatpush.bf16.xpose.msra.mxu0 0
        %2141 = vmatpush.bf16.xpose.msra.mxu0 0
        %2142 = vmatpush.bf16.xpose.msra.mxu0 0
        %2143 = vmatpush.bf16.xpose.msra.mxu0 0
        %2144 = vmatpush.bf16.xpose.msra.mxu0 0
        %2145 = vmatpush.bf16.xpose.msra.mxu0 0
        %2146 = vmatpush.bf16.xpose.msra.mxu0 0
        %2147 = vmatpush.bf16.xpose.msra.mxu0 %v2138
        %2148 = vmatmul.bf16.gmra.mxu0 %v2135
        %v2149 = vpop.f32.mrf.mxu0
        %v2150 = vadd.f32 %v1386, %v2149
        %v2151 = vpop.f32.mrf.mxu0
        %2152 = vdwg.mxu0
        %v2153 = vsel %vm1693, %v2127, -inf
        %2154 = vmax.xlane.f32.xlu0 %v2153
        %v2155 = vpop.xlane.xlu0 %2154
        %v2156 = vsel %vm1693, %v2150, -inf
        %2157 = vmax.xlane.f32.xlu0 %v2156
        %v2158 = vpop.xlane.xlu0 %2157
        %v2159 = vsub.f32 %v2127, %v2155
        %v2160 = vsub.f32 %v2150, %v2158
        %v2161 = vmul.f32 %v2159, 1.442695
        %v2162 = vpow.pop %v2161
        %v2163 = vmul.f32 %v2160, 1.442695
        %v2164 = vpow.pop %v2163
        %v2165 = vsel %vm1693, %v2162, 0.0
        %2166 = vadd.xlane.f32.xlu0 %v2165
        %v2167 = vpop.xlane.xlu0 %2166
        %v2168 = vsel %vm1693, %v2164, 0.0
        %2169 = vadd.xlane.f32.xlu0 %v2168
        %v2170 = vpop.xlane.xlu0 %2169
        %v2171 = vrcp.pop %v2167
        %v2172 = vrcp.pop %v2170
        %v2173 = vmul.f32 %v2162, %v2171
        %v2174 = vmul.f32 %v2164, %v2172
        %v2175 = vpack.c.bf16 %v2173, %v2173
        %v2176 = vpack.c.bf16 %v2174, %v2174
        %2177 = vrot.lane.b32.xlu0 %v1848, 32
        %v2178 = vpop.permute.xlu0 %2177
        %v2180 = vsel %vm1693, %v2175, 0
        %v2183 = vsel %vm1723, %v2178, 0
        %2185 = vmatpush.bf16.msra.mxu0 0
        %2186 = vmatpush.bf16.msra.mxu0 0
        %2187 = vmatpush.bf16.msra.mxu0 0
        %2188 = vmatpush.bf16.msra.mxu0 0
        %2189 = vmatpush.bf16.msra.mxu0 0
        %2190 = vmatpush.bf16.msra.mxu0 0
        %2191 = vmatpush.bf16.msra.mxu0 0
        %2192 = vmatpush.bf16.msra.mxu0 %v2183
        %2193 = vmatmul.bf16.gmra.mxu0 %v2180
        %v2194 = vpop.f32.mrf.mxu0
        %v2195 = vadd.f32 0.0, %v2194
        %v2196 = vpop.f32.mrf.mxu0
        %2197 = vdwg.mxu0
        %2198 = vrot.lane.b32.xlu0 %v1872, 32
        %v2199 = vpop.permute.xlu0 %2198
        %v2201 = vsel %vm1693, %v2176, 0
        %v2204 = vsel %vm1723, %v2199, 0
        %2206 = vmatpush.bf16.msra.mxu0 0
        %2207 = vmatpush.bf16.msra.mxu0 0
        %2208 = vmatpush.bf16.msra.mxu0 0
        %2209 = vmatpush.bf16.msra.mxu0 0
        %2210 = vmatpush.bf16.msra.mxu0 0
        %2211 = vmatpush.bf16.msra.mxu0 0
        %2212 = vmatpush.bf16.msra.mxu0 0
        %2213 = vmatpush.bf16.msra.mxu0 %v2204
        %2214 = vmatmul.bf16.gmra.mxu0 %v2201
        %v2215 = vpop.f32.mrf.mxu0
        %v2216 = vadd.f32 0.0, %v2215
        %v2217 = vpop.f32.mrf.mxu0
        %2218 = vdwg.mxu0
        %v2219 = vpack.c.bf16 %v2216, %v2195
        %s2220 = scalar_lea.vmem %s21, 48
        %v2221 = vld [vmem:[%s2220] sm:$0xf]
        %v2222 = vld [vmem:[%s2220 + $0x4] sm:$0xf]
        %v2223 = vld [vmem:[%s2220 + $0x8] sm:$0xf]
        %v2224 = vld [vmem:[%s2220 + $0xc] sm:$0xf]
        %v2229 = vunpack.c.l.b16 %v2221
        %v2230 = vunpack.c.l.b16 %v2222
        %v2231 = vunpack.c.l.b16 %v2223
        %v2232 = vunpack.c.l.b16 %v2224
        %v2233 = vpack.c.b16 %v2230, %v2229
        %v2234 = vpack.c.b16 %v2232, %v2231
        %v2238 = vsel %vm1654, %v2219, 0
        %2240 = vmatpush.bf16.msra.mxu0 0
        %2241 = vmatpush.bf16.msra.mxu0 0
        %2242 = vmatpush.bf16.msra.mxu0 0
        %2243 = vmatpush.bf16.msra.mxu0 0
        %2244 = vmatpush.bf16.msra.mxu0 0
        %2245 = vmatpush.bf16.msra.mxu0 0
        %2246 = vmatpush.bf16.msra.mxu0 %v2234
        %2247 = vmatpush.bf16.msra.mxu0 %v2233
        %2248 = vmatmul.bf16.gmra.mxu0 %v2238
        %v2249 = vpop.f32.mrf.mxu0
        %v2250 = vadd.f32 0.0, %v2249
        %v2251 = vpop.f32.mrf.mxu0
        %v2252 = vadd.f32 0.0, %v2251
        %2253 = vdwg.mxu0
        %v2254 = vadd.f32 %v2105, %v2250
        %v2255 = vadd.f32 %v2106, %v2252
        %v2256 = vadd.f32 %v1379, %v2254
        %v2257 = vadd.f32 %v1380, %v2255
        %v2258 = vld [vmem:[#allocation12] sm:$0x1]
        %v2260 = vperm.slane %v2258, 0
        %v2262 = vadd.f32 %v2256, %v2260
        %v2263 = vadd.f32 %v2257, %v2260
        %v2264 = vld [vmem:[#allocation13] sm:$0x1]
        %v2265 = vld [vmem:[#allocation15] sm:$0x1]
        %2266 = vadd.xlane.f32.xlu0 %v2262
        %v2267 = vpop.xlane.xlu0 %2266
        %2268 = vadd.xlane.f32.xlu0 %v2263
        %v2269 = vpop.xlane.xlu0 %2268
        %v2270 = vmul.f32 %v2267, %v1334
        %v2271 = vmul.f32 %v2269, %v1334
        %v2272 = vsub.f32 %v2262, %v2270
        %v2273 = vsub.f32 %v2263, %v2271
        %v2274 = vmul.f32 %v2272, %v2272
        %v2275 = vmul.f32 %v2273, %v2273
        %2276 = vadd.xlane.f32.xlu0 %v2274
        %v2277 = vpop.xlane.xlu0 %2276
        %2278 = vadd.xlane.f32.xlu0 %v2275
        %v2279 = vpop.xlane.xlu0 %2278
        %v2280 = vmul.f32 %v2277, %v1334
        %v2281 = vmul.f32 %v2279, %v1334
        %v2282 = vadd.f32 %v2280, 1e-05
        %v2283 = vadd.f32 %v2281, 1e-05
        %v2284 = vrsqrt.pop %v2282
        %v2285 = vmul.f32 %v2284, %v2282
        %v2286 = vmul.f32 %v2285, %v2284
        %v2287 = vmul.f32 0.5, %v2286
        %v2288 = vsub.f32 1.5, %v2287
        %v2289 = vmul.f32 %v2284, %v2288
        %vm2290 = vweird.f32 %v2282
        %vm2291 = vweird.f32 %v2284
        %vm2292 = vmor %vm2290, %vm2291
        %v2293 = vsel %vm2292, %v2284, %v2289
        %v2294 = vrsqrt.pop %v2283
        %v2295 = vmul.f32 %v2294, %v2283
        %v2296 = vmul.f32 %v2295, %v2294
        %v2297 = vmul.f32 0.5, %v2296
        %v2298 = vsub.f32 1.5, %v2297
        %v2299 = vmul.f32 %v2294, %v2298
        %vm2300 = vweird.f32 %v2283
        %vm2301 = vweird.f32 %v2294
        %vm2302 = vmor %vm2300, %vm2301
        %v2303 = vsel %vm2302, %v2294, %v2299
        %v2304 = vmul.f32 %v2272, %v2293
        %v2305 = vmul.f32 %v2273, %v2303
        %v2307 = vperm.slane %v2264, 0
        %v2309 = vmul.f32 %v2304, %v2307
        %v2310 = vmul.f32 %v2305, %v2307
        %v2312 = vperm.slane %v2265, 0
        %v2314 = vadd.f32 %v2309, %v2312
        %v2315 = vadd.f32 %v2310, %v2312
        %v2316 = vpack.c.bf16 %v2315, %v2314
        %v2317 = vld [vmem:[%s29] sm:$0xff]
        %v2318 = vld [vmem:[%s29 + $0x8] sm:$0xff]
        %v2319 = vld [vmem:[%s29 + $0x10] sm:$0xff]
        %v2320 = vld [vmem:[%s29 + $0x18] sm:$0xff]
        %v2321 = vld [vmem:[%s29 + $0x20] sm:$0xff]
        %v2322 = vld [vmem:[%s29 + $0x28] sm:$0xff]
        %v2323 = vld [vmem:[%s29 + $0x30] sm:$0xff]
        %v2324 = vld [vmem:[%s29 + $0x38] sm:$0xff]
        %v2325 = vld [vmem:[%s29 + $0x40] sm:$0xff]
        %v2326 = vld [vmem:[%s29 + $0x48] sm:$0xff]
        %v2327 = vld [vmem:[%s29 + $0x50] sm:$0xff]
        %v2328 = vld [vmem:[%s29 + $0x58] sm:$0xff]
        %v2329 = vld [vmem:[%s29 + $0x60] sm:$0xff]
        %v2330 = vld [vmem:[%s29 + $0x68] sm:$0xff]
        %v2331 = vld [vmem:[%s29 + $0x70] sm:$0xff]
        %v2332 = vld [vmem:[%s29 + $0x78] sm:$0xff]
        %v2333 = vld [vmem:[%s29 + $0x80] sm:$0xff]
        %v2334 = vld [vmem:[%s29 + $0x88] sm:$0xff]
        %v2335 = vld [vmem:[%s29 + $0x90] sm:$0xff]
        %v2336 = vld [vmem:[%s29 + $0x98] sm:$0xff]
        %v2337 = vld [vmem:[%s29 + $0xa0] sm:$0xff]
        %v2338 = vld [vmem:[%s29 + $0xa8] sm:$0xff]
        %v2339 = vld [vmem:[%s29 + $0xb0] sm:$0xff]
        %v2340 = vld [vmem:[%s29 + $0xb8] sm:$0xff]
        %v2341 = vld [vmem:[%s29 + $0xc0] sm:$0xff]
        %v2342 = vld [vmem:[%s29 + $0xc8] sm:$0xff]
        %v2343 = vld [vmem:[%s29 + $0xd0] sm:$0xff]
        %v2344 = vld [vmem:[%s29 + $0xd8] sm:$0xff]
        %v2345 = vld [vmem:[%s29 + $0xe0] sm:$0xff]
        %v2346 = vld [vmem:[%s29 + $0xe8] sm:$0xff]
        %v2347 = vld [vmem:[%s29 + $0xf0] sm:$0xff]
        %v2348 = vld [vmem:[%s29 + $0xf8] sm:$0xff]
        %v2349 = vld [vmem:[%s31] sm:$0xf]
        %v2351 = vperm.slane %v2349, 0
        %v2352 = vperm.slane %v2349, 1
        %v2353 = vperm.slane %v2349, 2
        %v2354 = vperm.slane %v2349, 3
        %v2391 = vunpack.c.l.b16 %v2317
        %v2392 = vunpack.c.h.b16 %v2317
        %v2393 = vunpack.c.l.b16 %v2318
        %v2394 = vunpack.c.h.b16 %v2318
        %v2395 = vunpack.c.l.b16 %v2319
        %v2396 = vunpack.c.h.b16 %v2319
        %v2397 = vunpack.c.l.b16 %v2320
        %v2398 = vunpack.c.h.b16 %v2320
        %v2399 = vunpack.c.l.b16 %v2321
        %v2400 = vunpack.c.h.b16 %v2321
        %v2401 = vunpack.c.l.b16 %v2322
        %v2402 = vunpack.c.h.b16 %v2322
        %v2403 = vunpack.c.l.b16 %v2323
        %v2404 = vunpack.c.h.b16 %v2323
        %v2405 = vunpack.c.l.b16 %v2324
        %v2406 = vunpack.c.h.b16 %v2324
        %v2407 = vunpack.c.l.b16 %v2325
        %v2408 = vunpack.c.h.b16 %v2325
        %v2409 = vunpack.c.l.b16 %v2326
        %v2410 = vunpack.c.h.b16 %v2326
        %v2411 = vunpack.c.l.b16 %v2327
        %v2412 = vunpack.c.h.b16 %v2327
        %v2413 = vunpack.c.l.b16 %v2328
        %v2414 = vunpack.c.h.b16 %v2328
        %v2415 = vunpack.c.l.b16 %v2329
        %v2416 = vunpack.c.h.b16 %v2329
        %v2417 = vunpack.c.l.b16 %v2330
        %v2418 = vunpack.c.h.b16 %v2330
        %v2419 = vunpack.c.l.b16 %v2331
        %v2420 = vunpack.c.h.b16 %v2331
        %v2421 = vunpack.c.l.b16 %v2332
        %v2422 = vunpack.c.h.b16 %v2332
        %v2423 = vunpack.c.l.b16 %v2333
        %v2424 = vunpack.c.h.b16 %v2333
        %v2425 = vunpack.c.l.b16 %v2334
        %v2426 = vunpack.c.h.b16 %v2334
        %v2427 = vunpack.c.l.b16 %v2335
        %v2428 = vunpack.c.h.b16 %v2335
        %v2429 = vunpack.c.l.b16 %v2336
        %v2430 = vunpack.c.h.b16 %v2336
        %v2431 = vunpack.c.l.b16 %v2337
        %v2432 = vunpack.c.h.b16 %v2337
        %v2433 = vunpack.c.l.b16 %v2338
        %v2434 = vunpack.c.h.b16 %v2338
        %v2435 = vunpack.c.l.b16 %v2339
        %v2436 = vunpack.c.h.b16 %v2339
        %v2437 = vunpack.c.l.b16 %v2340
        %v2438 = vunpack.c.h.b16 %v2340
        %v2439 = vunpack.c.l.b16 %v2341
        %v2440 = vunpack.c.h.b16 %v2341
        %v2441 = vunpack.c.l.b16 %v2342
        %v2442 = vunpack.c.h.b16 %v2342
        %v2443 = vunpack.c.l.b16 %v2343
        %v2444 = vunpack.c.h.b16 %v2343
        %v2445 = vunpack.c.l.b16 %v2344
        %v2446 = vunpack.c.h.b16 %v2344
        %v2447 = vunpack.c.l.b16 %v2345
        %v2448 = vunpack.c.h.b16 %v2345
        %v2449 = vunpack.c.l.b16 %v2346
        %v2450 = vunpack.c.h.b16 %v2346
        %v2451 = vunpack.c.l.b16 %v2347
        %v2452 = vunpack.c.h.b16 %v2347
        %v2453 = vunpack.c.l.b16 %v2348
        %v2454 = vunpack.c.h.b16 %v2348
        %v2455 = vpack.c.b16 %v2395, %v2391
        %v2456 = vpack.c.b16 %v2396, %v2392
        %v2457 = vpack.c.b16 %v2397, %v2393
        %v2458 = vpack.c.b16 %v2398, %v2394
        %v2459 = vpack.c.b16 %v2403, %v2399
        %v2460 = vpack.c.b16 %v2404, %v2400
        %v2461 = vpack.c.b16 %v2405, %v2401
        %v2462 = vpack.c.b16 %v2406, %v2402
        %v2463 = vpack.c.b16 %v2411, %v2407
        %v2464 = vpack.c.b16 %v2412, %v2408
        %v2465 = vpack.c.b16 %v2413, %v2409
        %v2466 = vpack.c.b16 %v2414, %v2410
        %v2467 = vpack.c.b16 %v2419, %v2415
        %v2468 = vpack.c.b16 %v2420, %v2416
        %v2469 = vpack.c.b16 %v2421, %v2417
        %v2470 = vpack.c.b16 %v2422, %v2418
        %v2471 = vpack.c.b16 %v2427, %v2423
        %v2472 = vpack.c.b16 %v2428, %v2424
        %v2473 = vpack.c.b16 %v2429, %v2425
        %v2474 = vpack.c.b16 %v2430, %v2426
        %v2475 = vpack.c.b16 %v2435, %v2431
        %v2476 = vpack.c.b16 %v2436, %v2432
        %v2477 = vpack.c.b16 %v2437, %v2433
        %v2478 = vpack.c.b16 %v2438, %v2434
        %v2479 = vpack.c.b16 %v2443, %v2439
        %v2480 = vpack.c.b16 %v2444, %v2440
        %v2481 = vpack.c.b16 %v2445, %v2441
        %v2482 = vpack.c.b16 %v2446, %v2442
        %v2483 = vpack.c.b16 %v2451, %v2447
        %v2484 = vpack.c.b16 %v2452, %v2448
        %v2485 = vpack.c.b16 %v2453, %v2449
        %v2486 = vpack.c.b16 %v2454, %v2450
        %2519 = vmatpush.bf16.msra.mxu0 %v2483
        %2520 = vmatpush.bf16.msra.mxu0 %v2479
        %2521 = vmatpush.bf16.msra.mxu0 %v2475
        %2522 = vmatpush.bf16.msra.mxu0 %v2471
        %2523 = vmatpush.bf16.msra.mxu0 %v2467
        %2524 = vmatpush.bf16.msra.mxu0 %v2463
        %2525 = vmatpush.bf16.msra.mxu0 %v2459
        %2526 = vmatpush.bf16.msra.mxu0 %v2455
        %2527 = vmatmul.bf16.gmra.mxu0 %v2316
        %v2528 = vpop.f32.mrf.mxu0
        %v2529 = vadd.f32 %v2351, %v2528
        %v2530 = vpop.f32.mrf.mxu0
        %v2531 = vadd.f32 %v2351, %v2530
        %2532 = vdwg.mxu0
        %2533 = vmatpush.bf16.msra.mxu0 %v2484
        %2534 = vmatpush.bf16.msra.mxu0 %v2480
        %2535 = vmatpush.bf16.msra.mxu0 %v2476
        %2536 = vmatpush.bf16.msra.mxu0 %v2472
        %2537 = vmatpush.bf16.msra.mxu0 %v2468
        %2538 = vmatpush.bf16.msra.mxu0 %v2464
        %2539 = vmatpush.bf16.msra.mxu0 %v2460
        %2540 = vmatpush.bf16.msra.mxu0 %v2456
        %2541 = vmatmul.bf16.gmra.mxu0 %v2316
        %v2542 = vpop.f32.mrf.mxu0
        %v2543 = vadd.f32 %v2352, %v2542
        %v2544 = vpop.f32.mrf.mxu0
        %v2545 = vadd.f32 %v2352, %v2544
        %2546 = vdwg.mxu0
        %2547 = vmatpush.bf16.msra.mxu0 %v2485
        %2548 = vmatpush.bf16.msra.mxu0 %v2481
        %2549 = vmatpush.bf16.msra.mxu0 %v2477
        %2550 = vmatpush.bf16.msra.mxu0 %v2473
        %2551 = vmatpush.bf16.msra.mxu0 %v2469
        %2552 = vmatpush.bf16.msra.mxu0 %v2465
        %2553 = vmatpush.bf16.msra.mxu0 %v2461
        %2554 = vmatpush.bf16.msra.mxu0 %v2457
        %2555 = vmatmul.bf16.gmra.mxu0 %v2316
        %v2556 = vpop.f32.mrf.mxu0
        %v2557 = vadd.f32 %v2353, %v2556
        %v2558 = vpop.f32.mrf.mxu0
        %v2559 = vadd.f32 %v2353, %v2558
        %2560 = vdwg.mxu0
        %2561 = vmatpush.bf16.msra.mxu0 %v2486
        %2562 = vmatpush.bf16.msra.mxu0 %v2482
        %2563 = vmatpush.bf16.msra.mxu0 %v2478
        %2564 = vmatpush.bf16.msra.mxu0 %v2474
        %2565 = vmatpush.bf16.msra.mxu0 %v2470
        %2566 = vmatpush.bf16.msra.mxu0 %v2466
        %2567 = vmatpush.bf16.msra.mxu0 %v2462
        %2568 = vmatpush.bf16.msra.mxu0 %v2458
        %2569 = vmatmul.bf16.gmra.mxu0 %v2316
        %v2570 = vpop.f32.mrf.mxu0
        %v2571 = vadd.f32 %v2354, %v2570
        %v2572 = vpop.f32.mrf.mxu0
        %v2573 = vadd.f32 %v2354, %v2572
        %2574 = vdwg.mxu0
        %v2575 = vmul.f32 %v2529, 1.702
        %v2576 = vmul.f32 %v2543, 1.702
        %v2577 = vmul.f32 %v2557, 1.702
        %v2578 = vmul.f32 %v2571, 1.702
        %v2579 = vmul.f32 %v2531, 1.702
        %v2580 = vmul.f32 %v2545, 1.702
        %v2581 = vmul.f32 %v2559, 1.702
        %v2582 = vmul.f32 %v2573, 1.702
        %v2583 = vxor.u32 %v2575, 2147483648
        %v2584 = vxor.u32 %v2576, 2147483648
        %v2585 = vxor.u32 %v2577, 2147483648
        %v2586 = vxor.u32 %v2578, 2147483648
        %v2587 = vxor.u32 %v2579, 2147483648
        %v2588 = vxor.u32 %v2580, 2147483648
        %v2589 = vxor.u32 %v2581, 2147483648
        %v2590 = vxor.u32 %v2582, 2147483648
        %v2591 = vmul.f32 %v2583, 1.442695
        %v2592 = vpow.pop %v2591
        %v2593 = vmul.f32 %v2584, 1.442695
        %v2594 = vpow.pop %v2593
        %v2595 = vmul.f32 %v2585, 1.442695
        %v2596 = vpow.pop %v2595
        %v2597 = vmul.f32 %v2586, 1.442695
        %v2598 = vpow.pop %v2597
        %v2599 = vmul.f32 %v2587, 1.442695
        %v2600 = vpow.pop %v2599
        %v2601 = vmul.f32 %v2588, 1.442695
        %v2602 = vpow.pop %v2601
        %v2603 = vmul.f32 %v2589, 1.442695
        %v2604 = vpow.pop %v2603
        %v2605 = vmul.f32 %v2590, 1.442695
        %v2606 = vpow.pop %v2605
        %v2607 = vadd.f32 %v2592, 1.0
        %v2608 = vadd.f32 %v2594, 1.0
        %v2609 = vadd.f32 %v2596, 1.0
        %v2610 = vadd.f32 %v2598, 1.0
        %v2611 = vadd.f32 %v2600, 1.0
        %v2612 = vadd.f32 %v2602, 1.0
        %v2613 = vadd.f32 %v2604, 1.0
        %v2614 = vadd.f32 %v2606, 1.0
        %v2615 = vrcp.pop %v2607
        %v2616 = vmul.f32 %v2607, %v2615
        %v2617 = vsub.f32 1.0, %v2616
        %v2618 = vmul.f32 %v2615, %v2617
        %v2619 = vadd.f32 %v2615, %v2618
        %vm2620 = vweird.f32 %v2607
        %vm2621 = vweird.f32 %v2615
        %vm2622 = vmor %vm2620, %vm2621
        %v2623 = vsel %vm2622, %v2615, %v2619
        %v2624 = vand.u32 2147483647, %v2607
        %vm2625 = vcmp.eq.f32.partialorder %v2624, 8.507059e+37
        %v2626 = vand.u32 %v2607, 2147483648
        %v2627 = vor.u32 1.1754944e-38, %v2626
        %v2628 = vsel %vm2625, %v2627, %v2623
        %v2629 = vmul.f32 1.0, %v2628
        %v2630 = vrcp.pop %v2608
        %v2631 = vmul.f32 %v2608, %v2630
        %v2632 = vsub.f32 1.0, %v2631
        %v2633 = vmul.f32 %v2630, %v2632
        %v2634 = vadd.f32 %v2630, %v2633
        %vm2635 = vweird.f32 %v2608
        %vm2636 = vweird.f32 %v2630
        %vm2637 = vmor %vm2635, %vm2636
        %v2638 = vsel %vm2637, %v2630, %v2634
        %v2639 = vand.u32 2147483647, %v2608
        %vm2640 = vcmp.eq.f32.partialorder %v2639, 8.507059e+37
        %v2641 = vand.u32 %v2608, 2147483648
        %v2642 = vor.u32 1.1754944e-38, %v2641
        %v2643 = vsel %vm2640, %v2642, %v2638
        %v2644 = vmul.f32 1.0, %v2643
        %v2645 = vrcp.pop %v2609
        %v2646 = vmul.f32 %v2609, %v2645
        %v2647 = vsub.f32 1.0, %v2646
        %v2648 = vmul.f32 %v2645, %v2647
        %v2649 = vadd.f32 %v2645, %v2648
        %vm2650 = vweird.f32 %v2609
        %vm2651 = vweird.f32 %v2645
        %vm2652 = vmor %vm2650, %vm2651
        %v2653 = vsel %vm2652, %v2645, %v2649
        %v2654 = vand.u32 2147483647, %v2609
        %vm2655 = vcmp.eq.f32.partialorder %v2654, 8.507059e+37
        %v2656 = vand.u32 %v2609, 2147483648
        %v2657 = vor.u32 1.1754944e-38, %v2656
        %v2658 = vsel %vm2655, %v2657, %v2653
        %v2659 = vmul.f32 1.0, %v2658
        %v2660 = vrcp.pop %v2610
        %v2661 = vmul.f32 %v2610, %v2660
        %v2662 = vsub.f32 1.0, %v2661
        %v2663 = vmul.f32 %v2660, %v2662
        %v2664 = vadd.f32 %v2660, %v2663
        %vm2665 = vweird.f32 %v2610
        %vm2666 = vweird.f32 %v2660
        %vm2667 = vmor %vm2665, %vm2666
        %v2668 = vsel %vm2667, %v2660, %v2664
        %v2669 = vand.u32 2147483647, %v2610
        %vm2670 = vcmp.eq.f32.partialorder %v2669, 8.507059e+37
        %v2671 = vand.u32 %v2610, 2147483648
        %v2672 = vor.u32 1.1754944e-38, %v2671
        %v2673 = vsel %vm2670, %v2672, %v2668
        %v2674 = vmul.f32 1.0, %v2673
        %v2675 = vrcp.pop %v2611
        %v2676 = vmul.f32 %v2611, %v2675
        %v2677 = vsub.f32 1.0, %v2676
        %v2678 = vmul.f32 %v2675, %v2677
        %v2679 = vadd.f32 %v2675, %v2678
        %vm2680 = vweird.f32 %v2611
        %vm2681 = vweird.f32 %v2675
        %vm2682 = vmor %vm2680, %vm2681
        %v2683 = vsel %vm2682, %v2675, %v2679
        %v2684 = vand.u32 2147483647, %v2611
        %vm2685 = vcmp.eq.f32.partialorder %v2684, 8.507059e+37
        %v2686 = vand.u32 %v2611, 2147483648
        %v2687 = vor.u32 1.1754944e-38, %v2686
        %v2688 = vsel %vm2685, %v2687, %v2683
        %v2689 = vmul.f32 1.0, %v2688
        %v2690 = vrcp.pop %v2612
        %v2691 = vmul.f32 %v2612, %v2690
        %v2692 = vsub.f32 1.0, %v2691
        %v2693 = vmul.f32 %v2690, %v2692
        %v2694 = vadd.f32 %v2690, %v2693
        %vm2695 = vweird.f32 %v2612
        %vm2696 = vweird.f32 %v2690
        %vm2697 = vmor %vm2695, %vm2696
        %v2698 = vsel %vm2697, %v2690, %v2694
        %v2699 = vand.u32 2147483647, %v2612
        %vm2700 = vcmp.eq.f32.partialorder %v2699, 8.507059e+37
        %v2701 = vand.u32 %v2612, 2147483648
        %v2702 = vor.u32 1.1754944e-38, %v2701
        %v2703 = vsel %vm2700, %v2702, %v2698
        %v2704 = vmul.f32 1.0, %v2703
        %v2705 = vrcp.pop %v2613
        %v2706 = vmul.f32 %v2613, %v2705
        %v2707 = vsub.f32 1.0, %v2706
        %v2708 = vmul.f32 %v2705, %v2707
        %v2709 = vadd.f32 %v2705, %v2708
        %vm2710 = vweird.f32 %v2613
        %vm2711 = vweird.f32 %v2705
        %vm2712 = vmor %vm2710, %vm2711
        %v2713 = vsel %vm2712, %v2705, %v2709
        %v2714 = vand.u32 2147483647, %v2613
        %vm2715 = vcmp.eq.f32.partialorder %v2714, 8.507059e+37
        %v2716 = vand.u32 %v2613, 2147483648
        %v2717 = vor.u32 1.1754944e-38, %v2716
        %v2718 = vsel %vm2715, %v2717, %v2713
        %v2719 = vmul.f32 1.0, %v2718
        %v2720 = vrcp.pop %v2614
        %v2721 = vmul.f32 %v2614, %v2720
        %v2722 = vsub.f32 1.0, %v2721
        %v2723 = vmul.f32 %v2720, %v2722
        %v2724 = vadd.f32 %v2720, %v2723
        %vm2725 = vweird.f32 %v2614
        %vm2726 = vweird.f32 %v2720
        %vm2727 = vmor %vm2725, %vm2726
        %v2728 = vsel %vm2727, %v2720, %v2724
        %v2729 = vand.u32 2147483647, %v2614
        %vm2730 = vcmp.eq.f32.partialorder %v2729, 8.507059e+37
        %v2731 = vand.u32 %v2614, 2147483648
        %v2732 = vor.u32 1.1754944e-38, %v2731
        %v2733 = vsel %vm2730, %v2732, %v2728
        %v2734 = vmul.f32 1.0, %v2733
        %v2735 = vmul.f32 %v2529, %v2629
        %v2736 = vmul.f32 %v2543, %v2644
        %v2737 = vmul.f32 %v2557, %v2659
        %v2738 = vmul.f32 %v2571, %v2674
        %v2739 = vmul.f32 %v2531, %v2689
        %v2740 = vmul.f32 %v2545, %v2704
        %v2741 = vmul.f32 %v2559, %v2719
        %v2742 = vmul.f32 %v2573, %v2734
        %v2743 = vpack.c.bf16 %v2739, %v2735
        %v2744 = vpack.c.bf16 %v2740, %v2736
        %v2745 = vpack.c.bf16 %v2741, %v2737
        %v2746 = vpack.c.bf16 %v2742, %v2738
        %v2747 = vld [vmem:[%s33] sm:$0xf]
        %v2748 = vld [vmem:[%s33 + $0x4] sm:$0xf]
        %v2749 = vld [vmem:[%s33 + $0x8] sm:$0xf]
        %v2750 = vld [vmem:[%s33 + $0xc] sm:$0xf]
        %v2751 = vld [vmem:[%s33 + $0x10] sm:$0xf]
        %v2752 = vld [vmem:[%s33 + $0x14] sm:$0xf]
        %v2753 = vld [vmem:[%s33 + $0x18] sm:$0xf]
        %v2754 = vld [vmem:[%s33 + $0x1c] sm:$0xf]
        %v2755 = vld [vmem:[%s33 + $0x20] sm:$0xf]
        %v2756 = vld [vmem:[%s33 + $0x24] sm:$0xf]
        %v2757 = vld [vmem:[%s33 + $0x28] sm:$0xf]
        %v2758 = vld [vmem:[%s33 + $0x2c] sm:$0xf]
        %v2759 = vld [vmem:[%s33 + $0x30] sm:$0xf]
        %v2760 = vld [vmem:[%s33 + $0x34] sm:$0xf]
        %v2761 = vld [vmem:[%s33 + $0x38] sm:$0xf]
        %v2762 = vld [vmem:[%s33 + $0x3c] sm:$0xf]
        %v2763 = vld [vmem:[%s33 + $0x40] sm:$0xf]
        %v2764 = vld [vmem:[%s33 + $0x44] sm:$0xf]
        %v2765 = vld [vmem:[%s33 + $0x48] sm:$0xf]
        %v2766 = vld [vmem:[%s33 + $0x4c] sm:$0xf]
        %v2767 = vld [vmem:[%s33 + $0x50] sm:$0xf]
        %v2768 = vld [vmem:[%s33 + $0x54] sm:$0xf]
        %v2769 = vld [vmem:[%s33 + $0x58] sm:$0xf]
        %v2770 = vld [vmem:[%s33 + $0x5c] sm:$0xf]
        %v2771 = vld [vmem:[%s33 + $0x60] sm:$0xf]
        %v2772 = vld [vmem:[%s33 + $0x64] sm:$0xf]
        %v2773 = vld [vmem:[%s33 + $0x68] sm:$0xf]
        %v2774 = vld [vmem:[%s33 + $0x6c] sm:$0xf]
        %v2775 = vld [vmem:[%s33 + $0x70] sm:$0xf]
        %v2776 = vld [vmem:[%s33 + $0x74] sm:$0xf]
        %v2777 = vld [vmem:[%s33 + $0x78] sm:$0xf]
        %v2778 = vld [vmem:[%s33 + $0x7c] sm:$0xf]
        %v2779 = vld [vmem:[%s33 + $0x80] sm:$0xf]
        %v2780 = vld [vmem:[%s33 + $0x84] sm:$0xf]
        %v2781 = vld [vmem:[%s33 + $0x88] sm:$0xf]
        %v2782 = vld [vmem:[%s33 + $0x8c] sm:$0xf]
        %v2783 = vld [vmem:[%s33 + $0x90] sm:$0xf]
        %v2784 = vld [vmem:[%s33 + $0x94] sm:$0xf]
        %v2785 = vld [vmem:[%s33 + $0x98] sm:$0xf]
        %v2786 = vld [vmem:[%s33 + $0x9c] sm:$0xf]
        %v2787 = vld [vmem:[%s33 + $0xa0] sm:$0xf]
        %v2788 = vld [vmem:[%s33 + $0xa4] sm:$0xf]
        %v2789 = vld [vmem:[%s33 + $0xa8] sm:$0xf]
        %v2790 = vld [vmem:[%s33 + $0xac] sm:$0xf]
        %v2791 = vld [vmem:[%s33 + $0xb0] sm:$0xf]
        %v2792 = vld [vmem:[%s33 + $0xb4] sm:$0xf]
        %v2793 = vld [vmem:[%s33 + $0xb8] sm:$0xf]
        %v2794 = vld [vmem:[%s33 + $0xbc] sm:$0xf]
        %v2795 = vld [vmem:[%s33 + $0xc0] sm:$0xf]
        %v2796 = vld [vmem:[%s33 + $0xc4] sm:$0xf]
        %v2797 = vld [vmem:[%s33 + $0xc8] sm:$0xf]
        %v2798 = vld [vmem:[%s33 + $0xcc] sm:$0xf]
        %v2799 = vld [vmem:[%s33 + $0xd0] sm:$0xf]
        %v2800 = vld [vmem:[%s33 + $0xd4] sm:$0xf]
        %v2801 = vld [vmem:[%s33 + $0xd8] sm:$0xf]
        %v2802 = vld [vmem:[%s33 + $0xdc] sm:$0xf]
        %v2803 = vld [vmem:[%s33 + $0xe0] sm:$0xf]
        %v2804 = vld [vmem:[%s33 + $0xe4] sm:$0xf]
        %v2805 = vld [vmem:[%s33 + $0xe8] sm:$0xf]
        %v2806 = vld [vmem:[%s33 + $0xec] sm:$0xf]
        %v2807 = vld [vmem:[%s33 + $0xf0] sm:$0xf]
        %v2808 = vld [vmem:[%s33 + $0xf4] sm:$0xf]
        %v2809 = vld [vmem:[%s33 + $0xf8] sm:$0xf]
        %v2810 = vld [vmem:[%s33 + $0xfc] sm:$0xf]
        %v2811 = vld [vmem:[#allocation16] sm:$0x1]
        %v2813 = vperm.slane %v2811, 0
        %v2879 = vunpack.c.l.b16 %v2747
        %v2880 = vunpack.c.l.b16 %v2748
        %v2881 = vunpack.c.l.b16 %v2749
        %v2882 = vunpack.c.l.b16 %v2750
        %v2883 = vunpack.c.l.b16 %v2751
        %v2884 = vunpack.c.l.b16 %v2752
        %v2885 = vunpack.c.l.b16 %v2753
        %v2886 = vunpack.c.l.b16 %v2754
        %v2887 = vunpack.c.l.b16 %v2755
        %v2888 = vunpack.c.l.b16 %v2756
        %v2889 = vunpack.c.l.b16 %v2757
        %v2890 = vunpack.c.l.b16 %v2758
        %v2891 = vunpack.c.l.b16 %v2759
        %v2892 = vunpack.c.l.b16 %v2760
        %v2893 = vunpack.c.l.b16 %v2761
        %v2894 = vunpack.c.l.b16 %v2762
        %v2895 = vunpack.c.l.b16 %v2763
        %v2896 = vunpack.c.l.b16 %v2764
        %v2897 = vunpack.c.l.b16 %v2765
        %v2898 = vunpack.c.l.b16 %v2766
        %v2899 = vunpack.c.l.b16 %v2767
        %v2900 = vunpack.c.l.b16 %v2768
        %v2901 = vunpack.c.l.b16 %v2769
        %v2902 = vunpack.c.l.b16 %v2770
        %v2903 = vunpack.c.l.b16 %v2771
        %v2904 = vunpack.c.l.b16 %v2772
        %v2905 = vunpack.c.l.b16 %v2773
        %v2906 = vunpack.c.l.b16 %v2774
        %v2907 = vunpack.c.l.b16 %v2775
        %v2908 = vunpack.c.l.b16 %v2776
        %v2909 = vunpack.c.l.b16 %v2777
        %v2910 = vunpack.c.l.b16 %v2778
        %v2911 = vunpack.c.l.b16 %v2779
        %v2912 = vunpack.c.l.b16 %v2780
        %v2913 = vunpack.c.l.b16 %v2781
        %v2914 = vunpack.c.l.b16 %v2782
        %v2915 = vunpack.c.l.b16 %v2783
        %v2916 = vunpack.c.l.b16 %v2784
        %v2917 = vunpack.c.l.b16 %v2785
        %v2918 = vunpack.c.l.b16 %v2786
        %v2919 = vunpack.c.l.b16 %v2787
        %v2920 = vunpack.c.l.b16 %v2788
        %v2921 = vunpack.c.l.b16 %v2789
        %v2922 = vunpack.c.l.b16 %v2790
        %v2923 = vunpack.c.l.b16 %v2791
        %v2924 = vunpack.c.l.b16 %v2792
        %v2925 = vunpack.c.l.b16 %v2793
        %v2926 = vunpack.c.l.b16 %v2794
        %v2927 = vunpack.c.l.b16 %v2795
        %v2928 = vunpack.c.l.b16 %v2796
        %v2929 = vunpack.c.l.b16 %v2797
        %v2930 = vunpack.c.l.b16 %v2798
        %v2931 = vunpack.c.l.b16 %v2799
        %v2932 = vunpack.c.l.b16 %v2800
        %v2933 = vunpack.c.l.b16 %v2801
        %v2934 = vunpack.c.l.b16 %v2802
        %v2935 = vunpack.c.l.b16 %v2803
        %v2936 = vunpack.c.l.b16 %v2804
        %v2937 = vunpack.c.l.b16 %v2805
        %v2938 = vunpack.c.l.b16 %v2806
        %v2939 = vunpack.c.l.b16 %v2807
        %v2940 = vunpack.c.l.b16 %v2808
        %v2941 = vunpack.c.l.b16 %v2809
        %v2942 = vunpack.c.l.b16 %v2810
        %v2943 = vpack.c.b16 %v2880, %v2879
        %v2944 = vpack.c.b16 %v2882, %v2881
        %v2945 = vpack.c.b16 %v2884, %v2883
        %v2946 = vpack.c.b16 %v2886, %v2885
        %v2947 = vpack.c.b16 %v2888, %v2887
        %v2948 = vpack.c.b16 %v2890, %v2889
        %v2949 = vpack.c.b16 %v2892, %v2891
        %v2950 = vpack.c.b16 %v2894, %v2893
        %v2951 = vpack.c.b16 %v2896, %v2895
        %v2952 = vpack.c.b16 %v2898, %v2897
        %v2953 = vpack.c.b16 %v2900, %v2899
        %v2954 = vpack.c.b16 %v2902, %v2901
        %v2955 = vpack.c.b16 %v2904, %v2903
        %v2956 = vpack.c.b16 %v2906, %v2905
        %v2957 = vpack.c.b16 %v2908, %v2907
        %v2958 = vpack.c.b16 %v2910, %v2909
        %v2959 = vpack.c.b16 %v2912, %v2911
        %v2960 = vpack.c.b16 %v2914, %v2913
        %v2961 = vpack.c.b16 %v2916, %v2915
        %v2962 = vpack.c.b16 %v2918, %v2917
        %v2963 = vpack.c.b16 %v2920, %v2919
        %v2964 = vpack.c.b16 %v2922, %v2921
        %v2965 = vpack.c.b16 %v2924, %v2923
        %v2966 = vpack.c.b16 %v2926, %v2925
        %v2967 = vpack.c.b16 %v2928, %v2927
        %v2968 = vpack.c.b16 %v2930, %v2929
        %v2969 = vpack.c.b16 %v2932, %v2931
        %v2970 = vpack.c.b16 %v2934, %v2933
        %v2971 = vpack.c.b16 %v2936, %v2935
        %v2972 = vpack.c.b16 %v2938, %v2937
        %v2973 = vpack.c.b16 %v2940, %v2939
        %v2974 = vpack.c.b16 %v2942, %v2941
        %3007 = vmatpush.bf16.msra.mxu0 %v2950
        %3008 = vmatpush.bf16.msra.mxu0 %v2949
        %3009 = vmatpush.bf16.msra.mxu0 %v2948
        %3010 = vmatpush.bf16.msra.mxu0 %v2947
        %3011 = vmatpush.bf16.msra.mxu0 %v2946
        %3012 = vmatpush.bf16.msra.mxu0 %v2945
        %3013 = vmatpush.bf16.msra.mxu0 %v2944
        %3014 = vmatpush.bf16.msra.mxu0 %v2943
        %3015 = vmatmul.bf16.gmra.mxu0 %v2743
        %v3016 = vpop.f32.mrf.mxu0
        %v3017 = vadd.f32 %v2813, %v3016
        %v3018 = vpop.f32.mrf.mxu0
        %v3019 = vadd.f32 %v2813, %v3018
        %3020 = vdwg.mxu0
        %3021 = vmatpush.bf16.msra.mxu0 %v2958
        %3022 = vmatpush.bf16.msra.mxu0 %v2957
        %3023 = vmatpush.bf16.msra.mxu0 %v2956
        %3024 = vmatpush.bf16.msra.mxu0 %v2955
        %3025 = vmatpush.bf16.msra.mxu0 %v2954
        %3026 = vmatpush.bf16.msra.mxu0 %v2953
        %3027 = vmatpush.bf16.msra.mxu0 %v2952
        %3028 = vmatpush.bf16.msra.mxu0 %v2951
        %3029 = vmatmul.bf16.gmra.mxu0 %v2744
        %v3030 = vpop.f32.mrf.mxu0
        %v3031 = vadd.f32 %v3017, %v3030
        %v3032 = vpop.f32.mrf.mxu0
        %v3033 = vadd.f32 %v3019, %v3032
        %3034 = vdwg.mxu0
        %3035 = vmatpush.bf16.msra.mxu0 %v2966
        %3036 = vmatpush.bf16.msra.mxu0 %v2965
        %3037 = vmatpush.bf16.msra.mxu0 %v2964
        %3038 = vmatpush.bf16.msra.mxu0 %v2963
        %3039 = vmatpush.bf16.msra.mxu0 %v2962
        %3040 = vmatpush.bf16.msra.mxu0 %v2961
        %3041 = vmatpush.bf16.msra.mxu0 %v2960
        %3042 = vmatpush.bf16.msra.mxu0 %v2959
        %3043 = vmatmul.bf16.gmra.mxu0 %v2745
        %v3044 = vpop.f32.mrf.mxu0
        %v3045 = vadd.f32 %v3031, %v3044
        %v3046 = vpop.f32.mrf.mxu0
        %v3047 = vadd.f32 %v3033, %v3046
        %3048 = vdwg.mxu0
        %3049 = vmatpush.bf16.msra.mxu0 %v2974
        %3050 = vmatpush.bf16.msra.mxu0 %v2973
        %3051 = vmatpush.bf16.msra.mxu0 %v2972
        %3052 = vmatpush.bf16.msra.mxu0 %v2971
        %3053 = vmatpush.bf16.msra.mxu0 %v2970
        %3054 = vmatpush.bf16.msra.mxu0 %v2969
        %3055 = vmatpush.bf16.msra.mxu0 %v2968
        %3056 = vmatpush.bf16.msra.mxu0 %v2967
        %3057 = vmatmul.bf16.gmra.mxu0 %v2746
        %v3058 = vpop.f32.mrf.mxu0
        %v3059 = vadd.f32 %v3045, %v3058
        %v3060 = vpop.f32.mrf.mxu0
        %v3061 = vadd.f32 %v3047, %v3060
        %3062 = vdwg.mxu0
        %v3063 = vadd.f32 %v2262, %v3059
        %v3064 = vadd.f32 %v2263, %v3061
        %s3065 = scalar_lea.vmem %s1168, 16 [#allocation28]
        %3066 = vst [vmem:[%s3065] sm:$0xff] %v3063
        %3067 = vst [vmem:[%s3065 + $0x8] sm:$0xff] %v3064
        %v3068 = vld [vmem:[#allocation18] sm:$0x1]
        %v3069 = vld [vmem:[#allocation19] sm:$0x1]
        %3070 = vadd.xlane.f32.xlu0 %v3063
        %v3071 = vpop.xlane.xlu0 %3070
        %3072 = vadd.xlane.f32.xlu0 %v3064
        %v3073 = vpop.xlane.xlu0 %3072
        %v3074 = vmul.f32 %v3071, %v1334
        %v3075 = vmul.f32 %v3073, %v1334
        %v3076 = vsub.f32 %v3063, %v3074
        %v3077 = vsub.f32 %v3064, %v3075
        %v3078 = vmul.f32 %v3076, %v3076
        %v3079 = vmul.f32 %v3077, %v3077
        %3080 = vadd.xlane.f32.xlu0 %v3078
        %v3081 = vpop.xlane.xlu0 %3080
        %3082 = vadd.xlane.f32.xlu0 %v3079
        %v3083 = vpop.xlane.xlu0 %3082
        %v3084 = vmul.f32 %v3081, %v1334
        %v3085 = vmul.f32 %v3083, %v1334
        %v3086 = vadd.f32 %v3084, 1e-05
        %v3087 = vadd.f32 %v3085, 1e-05
        %v3088 = vrsqrt.pop %v3086
        %v3089 = vmul.f32 %v3088, %v3086
        %v3090 = vmul.f32 %v3089, %v3088
        %v3091 = vmul.f32 0.5, %v3090
        %v3092 = vsub.f32 1.5, %v3091
        %v3093 = vmul.f32 %v3088, %v3092
        %vm3094 = vweird.f32 %v3086
        %vm3095 = vweird.f32 %v3088
        %vm3096 = vmor %vm3094, %vm3095
        %v3097 = vsel %vm3096, %v3088, %v3093
        %v3098 = vrsqrt.pop %v3087
        %v3099 = vmul.f32 %v3098, %v3087
        %v3100 = vmul.f32 %v3099, %v3098
        %v3101 = vmul.f32 0.5, %v3100
        %v3102 = vsub.f32 1.5, %v3101
        %v3103 = vmul.f32 %v3098, %v3102
        %vm3104 = vweird.f32 %v3087
        %vm3105 = vweird.f32 %v3098
        %vm3106 = vmor %vm3104, %vm3105
        %v3107 = vsel %vm3106, %v3098, %v3103
        %v3108 = vmul.f32 %v3076, %v3097
        %v3109 = vmul.f32 %v3077, %v3107
        %v3111 = vperm.slane %v3068, 0
        %v3113 = vmul.f32 %v3108, %v3111
        %v3114 = vmul.f32 %v3109, %v3111
        %v3116 = vperm.slane %v3069, 0
        %v3118 = vadd.f32 %v3113, %v3116
        %v3119 = vadd.f32 %v3114, %v3116
        %v3120 = vpack.c.bf16 %v3119, %v3118
        %v3121 = vld [vmem:[%s41] sm:$0xff]
        %v3122 = vld [vmem:[%s41 + $0x8] sm:$0xf]
        %v3123 = vld [vmem:[%s41 + $0xc] sm:$0xff]
        %v3124 = vld [vmem:[%s41 + $0x14] sm:$0xf]
        %v3125 = vld [vmem:[%s41 + $0x18] sm:$0xff]
        %v3126 = vld [vmem:[%s41 + $0x20] sm:$0xf]
        %v3127 = vld [vmem:[%s41 + $0x24] sm:$0xff]
        %v3128 = vld [vmem:[%s41 + $0x2c] sm:$0xf]
        %v3129 = vld [vmem:[%s41 + $0x30] sm:$0xff]
        %v3130 = vld [vmem:[%s41 + $0x38] sm:$0xf]
        %v3131 = vld [vmem:[%s41 + $0x3c] sm:$0xff]
        %v3132 = vld [vmem:[%s41 + $0x44] sm:$0xf]
        %v3133 = vld [vmem:[%s41 + $0x48] sm:$0xff]
        %v3134 = vld [vmem:[%s41 + $0x50] sm:$0xf]
        %v3135 = vld [vmem:[%s41 + $0x54] sm:$0xff]
        %v3136 = vld [vmem:[%s41 + $0x5c] sm:$0xf]
        %v3137 = vld [vmem:[%s41 + $0x60] sm:$0xff]
        %v3138 = vld [vmem:[%s41 + $0x68] sm:$0xf]
        %v3139 = vld [vmem:[%s41 + $0x6c] sm:$0xff]
        %v3140 = vld [vmem:[%s41 + $0x74] sm:$0xf]
        %v3141 = vld [vmem:[%s41 + $0x78] sm:$0xff]
        %v3142 = vld [vmem:[%s41 + $0x80] sm:$0xf]
        %v3143 = vld [vmem:[%s41 + $0x84] sm:$0xff]
        %v3144 = vld [vmem:[%s41 + $0x8c] sm:$0xf]
        %v3145 = vld [vmem:[%s41 + $0x90] sm:$0xff]
        %v3146 = vld [vmem:[%s41 + $0x98] sm:$0xf]
        %v3147 = vld [vmem:[%s41 + $0x9c] sm:$0xff]
        %v3148 = vld [vmem:[%s41 + $0xa4] sm:$0xf]
        %v3149 = vld [vmem:[%s41 + $0xa8] sm:$0xff]
        %v3150 = vld [vmem:[%s41 + $0xb0] sm:$0xf]
        %v3151 = vld [vmem:[%s41 + $0xb4] sm:$0xff]
        %v3152 = vld [vmem:[%s41 + $0xbc] sm:$0xf]
        %v3153 = vld [vmem:[#allocation21] sm:$0x7]
        %v3155 = vperm.slane %v3153, 0
        %v3156 = vperm.slane %v3153, 1
        %v3157 = vperm.slane %v3153, 2
        %v3193 = vunpack.c.l.b16 %v3121
        %v3194 = vunpack.c.h.b16 %v3121
        %v3195 = vunpack.c.l.b16 %v3122
        %v3196 = vunpack.c.l.b16 %v3123
        %v3197 = vunpack.c.h.b16 %v3123
        %v3198 = vunpack.c.l.b16 %v3124
        %v3199 = vunpack.c.l.b16 %v3125
        %v3200 = vunpack.c.h.b16 %v3125
        %v3201 = vunpack.c.l.b16 %v3126
        %v3202 = vunpack.c.l.b16 %v3127
        %v3203 = vunpack.c.h.b16 %v3127
        %v3204 = vunpack.c.l.b16 %v3128
        %v3205 = vunpack.c.l.b16 %v3129
        %v3206 = vunpack.c.h.b16 %v3129
        %v3207 = vunpack.c.l.b16 %v3130
        %v3208 = vunpack.c.l.b16 %v3131
        %v3209 = vunpack.c.h.b16 %v3131
        %v3210 = vunpack.c.l.b16 %v3132
        %v3211 = vunpack.c.l.b16 %v3133
        %v3212 = vunpack.c.h.b16 %v3133
        %v3213 = vunpack.c.l.b16 %v3134
        %v3214 = vunpack.c.l.b16 %v3135
        %v3215 = vunpack.c.h.b16 %v3135
        %v3216 = vunpack.c.l.b16 %v3136
        %v3217 = vunpack.c.l.b16 %v3137
        %v3218 = vunpack.c.h.b16 %v3137
        %v3219 = vunpack.c.l.b16 %v3138
        %v3220 = vunpack.c.l.b16 %v3139
        %v3221 = vunpack.c.h.b16 %v3139
        %v3222 = vunpack.c.l.b16 %v3140
        %v3223 = vunpack.c.l.b16 %v3141
        %v3224 = vunpack.c.h.b16 %v3141
        %v3225 = vunpack.c.l.b16 %v3142
        %v3226 = vunpack.c.l.b16 %v3143
        %v3227 = vunpack.c.h.b16 %v3143
        %v3228 = vunpack.c.l.b16 %v3144
        %v3229 = vunpack.c.l.b16 %v3145
        %v3230 = vunpack.c.h.b16 %v3145
        %v3231 = vunpack.c.l.b16 %v3146
        %v3232 = vunpack.c.l.b16 %v3147
        %v3233 = vunpack.c.h.b16 %v3147
        %v3234 = vunpack.c.l.b16 %v3148
        %v3235 = vunpack.c.l.b16 %v3149
        %v3236 = vunpack.c.h.b16 %v3149
        %v3237 = vunpack.c.l.b16 %v3150
        %v3238 = vunpack.c.l.b16 %v3151
        %v3239 = vunpack.c.h.b16 %v3151
        %v3240 = vunpack.c.l.b16 %v3152
        %v3241 = vpack.c.b16 %v3196, %v3193
        %v3242 = vpack.c.b16 %v3197, %v3194
        %v3243 = vpack.c.b16 %v3198, %v3195
        %v3244 = vpack.c.b16 %v3202, %v3199
        %v3245 = vpack.c.b16 %v3203, %v3200
        %v3246 = vpack.c.b16 %v3204, %v3201
        %v3247 = vpack.c.b16 %v3208, %v3205
        %v3248 = vpack.c.b16 %v3209, %v3206
        %v3249 = vpack.c.b16 %v3210, %v3207
        %v3250 = vpack.c.b16 %v3214, %v3211
        %v3251 = vpack.c.b16 %v3215, %v3212
        %v3252 = vpack.c.b16 %v3216, %v3213
        %v3253 = vpack.c.b16 %v3220, %v3217
        %v3254 = vpack.c.b16 %v3221, %v3218
        %v3255 = vpack.c.b16 %v3222, %v3219
        %v3256 = vpack.c.b16 %v3226, %v3223
        %v3257 = vpack.c.b16 %v3227, %v3224
        %v3258 = vpack.c.b16 %v3228, %v3225
        %v3259 = vpack.c.b16 %v3232, %v3229
        %v3260 = vpack.c.b16 %v3233, %v3230
        %v3261 = vpack.c.b16 %v3234, %v3231
        %v3262 = vpack.c.b16 %v3238, %v3235
        %v3263 = vpack.c.b16 %v3239, %v3236
        %v3264 = vpack.c.b16 %v3240, %v3237
        %3289 = vmatpush.bf16.msra.mxu0 %v3262
        %3290 = vmatpush.bf16.msra.mxu0 %v3259
        %3291 = vmatpush.bf16.msra.mxu0 %v3256
        %3292 = vmatpush.bf16.msra.mxu0 %v3253
        %3293 = vmatpush.bf16.msra.mxu0 %v3250
        %3294 = vmatpush.bf16.msra.mxu0 %v3247
        %3295 = vmatpush.bf16.msra.mxu0 %v3244
        %3296 = vmatpush.bf16.msra.mxu0 %v3241
        %3297 = vmatmul.bf16.gmra.mxu0 %v3120
        %v3298 = vpop.f32.mrf.mxu0
        %v3299 = vadd.f32 %v3155, %v3298
        %v3300 = vpop.f32.mrf.mxu0
        %v3301 = vadd.f32 %v3155, %v3300
        %3302 = vdwg.mxu0
        %3303 = vmatpush.bf16.msra.mxu0 %v3263
        %3304 = vmatpush.bf16.msra.mxu0 %v3260
        %3305 = vmatpush.bf16.msra.mxu0 %v3257
        %3306 = vmatpush.bf16.msra.mxu0 %v3254
        %3307 = vmatpush.bf16.msra.mxu0 %v3251
        %3308 = vmatpush.bf16.msra.mxu0 %v3248
        %3309 = vmatpush.bf16.msra.mxu0 %v3245
        %3310 = vmatpush.bf16.msra.mxu0 %v3242
        %3311 = vmatmul.bf16.gmra.mxu0 %v3120
        %v3312 = vpop.f32.mrf.mxu0
        %v3313 = vadd.f32 %v3156, %v3312
        %v3314 = vpop.f32.mrf.mxu0
        %v3315 = vadd.f32 %v3156, %v3314
        %3316 = vdwg.mxu0
        %3317 = vmatpush.bf16.msra.mxu0 %v3264
        %3318 = vmatpush.bf16.msra.mxu0 %v3261
        %3319 = vmatpush.bf16.msra.mxu0 %v3258
        %3320 = vmatpush.bf16.msra.mxu0 %v3255
        %3321 = vmatpush.bf16.msra.mxu0 %v3252
        %3322 = vmatpush.bf16.msra.mxu0 %v3249
        %3323 = vmatpush.bf16.msra.mxu0 %v3246
        %3324 = vmatpush.bf16.msra.mxu0 %v3243
        %3325 = vmatmul.bf16.gmra.mxu0 %v3120
        %v3326 = vpop.f32.mrf.mxu0
        %v3327 = vadd.f32 %v3157, %v3326
        %v3328 = vpop.f32.mrf.mxu0
        %v3329 = vadd.f32 %v3157, %v3328
        %3330 = vdwg.mxu0
        %v3331 = vpack.c.bf16 %v3299, %v3299
        %v3332 = vpack.c.bf16 %v3301, %v3301
        %v3333 = vpack.c.bf16 %v3313, %v3313
        %v3334 = vpack.c.bf16 %v3315, %v3315
        %v3336 = vsel %vm1654, %v3331, 0
        %v3339 = vsel %vm1654, %v3333, 0
        %3341 = vmatpush.bf16.xpose.msra.mxu0 0
        %3342 = vmatpush.bf16.xpose.msra.mxu0 0
        %3343 = vmatpush.bf16.xpose.msra.mxu0 0
        %3344 = vmatpush.bf16.xpose.msra.mxu0 0
        %3345 = vmatpush.bf16.xpose.msra.mxu0 0
        %3346 = vmatpush.bf16.xpose.msra.mxu0 0
        %3347 = vmatpush.bf16.xpose.msra.mxu0 0
        %3348 = vmatpush.bf16.xpose.msra.mxu0 %v3339
        %3349 = vmatmul.bf16.gmra.mxu0 %v3336
        %v3350 = vpop.f32.mrf.mxu0
        %v3351 = vadd.f32 %v1386, %v3350
        %v3352 = vpop.f32.mrf.mxu0
        %3353 = vdwg.mxu0
        %v3355 = vsel %vm1654, %v3332, 0
        %v3358 = vsel %vm1654, %v3334, 0
        %3360 = vmatpush.bf16.xpose.msra.mxu0 0
        %3361 = vmatpush.bf16.xpose.msra.mxu0 0
        %3362 = vmatpush.bf16.xpose.msra.mxu0 0
        %3363 = vmatpush.bf16.xpose.msra.mxu0 0
        %3364 = vmatpush.bf16.xpose.msra.mxu0 0
        %3365 = vmatpush.bf16.xpose.msra.mxu0 0
        %3366 = vmatpush.bf16.xpose.msra.mxu0 0
        %3367 = vmatpush.bf16.xpose.msra.mxu0 %v3358
        %3368 = vmatmul.bf16.gmra.mxu0 %v3355
        %v3369 = vpop.f32.mrf.mxu0
        %v3370 = vadd.f32 %v1386, %v3369
        %v3371 = vpop.f32.mrf.mxu0
        %3372 = vdwg.mxu0
        %v3373 = vsel %vm1693, %v3351, -inf
        %3374 = vmax.xlane.f32.xlu0 %v3373
        %v3375 = vpop.xlane.xlu0 %3374
        %v3376 = vsel %vm1693, %v3370, -inf
        %3377 = vmax.xlane.f32.xlu0 %v3376
        %v3378 = vpop.xlane.xlu0 %3377
        %v3379 = vsub.f32 %v3351, %v3375
        %v3380 = vsub.f32 %v3370, %v3378
        %v3381 = vmul.f32 %v3379, 1.442695
        %v3382 = vpow.pop %v3381
        %v3383 = vmul.f32 %v3380, 1.442695
        %v3384 = vpow.pop %v3383
        %v3385 = vsel %vm1693, %v3382, 0.0
        %3386 = vadd.xlane.f32.xlu0 %v3385
        %v3387 = vpop.xlane.xlu0 %3386
        %v3388 = vsel %vm1693, %v3384, 0.0
        %3389 = vadd.xlane.f32.xlu0 %v3388
        %v3390 = vpop.xlane.xlu0 %3389
        %v3391 = vrcp.pop %v3387
        %v3392 = vrcp.pop %v3390
        %v3393 = vmul.f32 %v3382, %v3391
        %v3394 = vmul.f32 %v3384, %v3392
        %v3395 = vpack.c.bf16 %v3393, %v3393
        %v3396 = vpack.c.bf16 %v3394, %v3394
        %v3397 = vpack.c.bf16 %v3327, %v3327
        %v3398 = vpack.c.bf16 %v3329, %v3329
        %v3400 = vsel %vm1693, %v3395, 0
        %v3403 = vsel %vm1723, %v3397, 0
        %3405 = vmatpush.bf16.msra.mxu0 0
        %3406 = vmatpush.bf16.msra.mxu0 0
        %3407 = vmatpush.bf16.msra.mxu0 0
        %3408 = vmatpush.bf16.msra.mxu0 0
        %3409 = vmatpush.bf16.msra.mxu0 0
        %3410 = vmatpush.bf16.msra.mxu0 0
        %3411 = vmatpush.bf16.msra.mxu0 0
        %3412 = vmatpush.bf16.msra.mxu0 %v3403
        %3413 = vmatmul.bf16.gmra.mxu0 %v3400
        %v3414 = vpop.f32.mrf.mxu0
        %v3415 = vadd.f32 0.0, %v3414
        %v3416 = vpop.f32.mrf.mxu0
        %3417 = vdwg.mxu0
        %v3419 = vsel %vm1693, %v3396, 0
        %v3422 = vsel %vm1723, %v3398, 0
        %3424 = vmatpush.bf16.msra.mxu0 0
        %3425 = vmatpush.bf16.msra.mxu0 0
        %3426 = vmatpush.bf16.msra.mxu0 0
        %3427 = vmatpush.bf16.msra.mxu0 0
        %3428 = vmatpush.bf16.msra.mxu0 0
        %3429 = vmatpush.bf16.msra.mxu0 0
        %3430 = vmatpush.bf16.msra.mxu0 0
        %3431 = vmatpush.bf16.msra.mxu0 %v3422
        %3432 = vmatmul.bf16.gmra.mxu0 %v3419
        %v3433 = vpop.f32.mrf.mxu0
        %v3434 = vadd.f32 0.0, %v3433
        %v3435 = vpop.f32.mrf.mxu0
        %3436 = vdwg.mxu0
        %v3437 = vpack.c.bf16 %v3434, %v3415
        %v3438 = vld [vmem:[%s45] sm:$0xf]
        %v3439 = vld [vmem:[%s45 + $0x4] sm:$0xf]
        %v3440 = vld [vmem:[%s45 + $0x8] sm:$0xf]
        %v3441 = vld [vmem:[%s45 + $0xc] sm:$0xf]
        %v3443 = vunpack.c.l.b16 %v3331
        %v3444 = vpack.c.b16 %v3443, %v3443
        %3445 = vrot.lane.b32.xlu0 %v3444, 96
        %v3446 = vpop.permute.xlu0 %3445
        %v3448 = vunpack.c.l.b16 %v3333
        %v3449 = vpack.c.b16 %v3448, %v3448
        %3450 = vrot.lane.b32.xlu0 %v3449, 96
        %v3451 = vpop.permute.xlu0 %3450
        %v3453 = vsel %vm1654, %v3446, 0
        %v3456 = vsel %vm1654, %v3451, 0
        %3458 = vmatpush.bf16.xpose.msra.mxu0 0
        %3459 = vmatpush.bf16.xpose.msra.mxu0 0
        %3460 = vmatpush.bf16.xpose.msra.mxu0 0
        %3461 = vmatpush.bf16.xpose.msra.mxu0 0
        %3462 = vmatpush.bf16.xpose.msra.mxu0 0
        %3463 = vmatpush.bf16.xpose.msra.mxu0 0
        %3464 = vmatpush.bf16.xpose.msra.mxu0 0
        %3465 = vmatpush.bf16.xpose.msra.mxu0 %v3456
        %3466 = vmatmul.bf16.gmra.mxu0 %v3453
        %v3467 = vpop.f32.mrf.mxu0
        %v3468 = vadd.f32 %v1386, %v3467
        %v3469 = vpop.f32.mrf.mxu0
        %3470 = vdwg.mxu0
        %v3472 = vunpack.c.l.b16 %v3332
        %v3473 = vpack.c.b16 %v3472, %v3472
        %3474 = vrot.lane.b32.xlu0 %v3473, 96
        %v3475 = vpop.permute.xlu0 %3474
        %v3477 = vunpack.c.l.b16 %v3334
        %v3478 = vpack.c.b16 %v3477, %v3477
        %3479 = vrot.lane.b32.xlu0 %v3478, 96
        %v3480 = vpop.permute.xlu0 %3479
        %v3482 = vsel %vm1654, %v3475, 0
        %v3485 = vsel %vm1654, %v3480, 0
        %3487 = vmatpush.bf16.xpose.msra.mxu0 0
        %3488 = vmatpush.bf16.xpose.msra.mxu0 0
        %3489 = vmatpush.bf16.xpose.msra.mxu0 0
        %3490 = vmatpush.bf16.xpose.msra.mxu0 0
        %3491 = vmatpush.bf16.xpose.msra.mxu0 0
        %3492 = vmatpush.bf16.xpose.msra.mxu0 0
        %3493 = vmatpush.bf16.xpose.msra.mxu0 0
        %3494 = vmatpush.bf16.xpose.msra.mxu0 %v3485
        %3495 = vmatmul.bf16.gmra.mxu0 %v3482
        %v3496 = vpop.f32.mrf.mxu0
        %v3497 = vadd.f32 %v1386, %v3496
        %v3498 = vpop.f32.mrf.mxu0
        %3499 = vdwg.mxu0
        %v3500 = vsel %vm1693, %v3468, -inf
        %3501 = vmax.xlane.f32.xlu0 %v3500
        %v3502 = vpop.xlane.xlu0 %3501
        %v3503 = vsel %vm1693, %v3497, -inf
        %3504 = vmax.xlane.f32.xlu0 %v3503
        %v3505 = vpop.xlane.xlu0 %3504
        %v3506 = vsub.f32 %v3468, %v3502
        %v3507 = vsub.f32 %v3497, %v3505
        %v3508 = vmul.f32 %v3506, 1.442695
        %v3509 = vpow.pop %v3508
        %v3510 = vmul.f32 %v3507, 1.442695
        %v3511 = vpow.pop %v3510
        %v3512 = vsel %vm1693, %v3509, 0.0
        %3513 = vadd.xlane.f32.xlu0 %v3512
        %v3514 = vpop.xlane.xlu0 %3513
        %v3515 = vsel %vm1693, %v3511, 0.0
        %3516 = vadd.xlane.f32.xlu0 %v3515
        %v3517 = vpop.xlane.xlu0 %3516
        %v3518 = vrcp.pop %v3514
        %v3519 = vrcp.pop %v3517
        %v3520 = vmul.f32 %v3509, %v3518
        %v3521 = vmul.f32 %v3511, %v3519
        %v3522 = vpack.c.bf16 %v3520, %v3520
        %v3523 = vpack.c.bf16 %v3521, %v3521
        %v3525 = vunpack.c.l.b16 %v3397
        %v3526 = vpack.c.b16 %v3525, %v3525
        %3527 = vrot.lane.b32.xlu0 %v3526, 96
        %v3528 = vpop.permute.xlu0 %3527
        %v3530 = vsel %vm1693, %v3522, 0
        %v3533 = vsel %vm1723, %v3528, 0
        %3535 = vmatpush.bf16.msra.mxu0 0
        %3536 = vmatpush.bf16.msra.mxu0 0
        %3537 = vmatpush.bf16.msra.mxu0 0
        %3538 = vmatpush.bf16.msra.mxu0 0
        %3539 = vmatpush.bf16.msra.mxu0 0
        %3540 = vmatpush.bf16.msra.mxu0 0
        %3541 = vmatpush.bf16.msra.mxu0 0
        %3542 = vmatpush.bf16.msra.mxu0 %v3533
        %3543 = vmatmul.bf16.gmra.mxu0 %v3530
        %v3544 = vpop.f32.mrf.mxu0
        %v3545 = vadd.f32 0.0, %v3544
        %v3546 = vpop.f32.mrf.mxu0
        %3547 = vdwg.mxu0
        %v3549 = vunpack.c.l.b16 %v3398
        %v3550 = vpack.c.b16 %v3549, %v3549
        %3551 = vrot.lane.b32.xlu0 %v3550, 96
        %v3552 = vpop.permute.xlu0 %3551
        %v3554 = vsel %vm1693, %v3523, 0
        %v3557 = vsel %vm1723, %v3552, 0
        %3559 = vmatpush.bf16.msra.mxu0 0
        %3560 = vmatpush.bf16.msra.mxu0 0
        %3561 = vmatpush.bf16.msra.mxu0 0
        %3562 = vmatpush.bf16.msra.mxu0 0
        %3563 = vmatpush.bf16.msra.mxu0 0
        %3564 = vmatpush.bf16.msra.mxu0 0
        %3565 = vmatpush.bf16.msra.mxu0 0
        %3566 = vmatpush.bf16.msra.mxu0 %v3557
        %3567 = vmatmul.bf16.gmra.mxu0 %v3554
        %v3568 = vpop.f32.mrf.mxu0
        %v3569 = vadd.f32 0.0, %v3568
        %v3570 = vpop.f32.mrf.mxu0
        %3571 = vdwg.mxu0
        %v3572 = vpack.c.bf16 %v3569, %v3545
        %s3573 = scalar_lea.vmem %s45, 16
        %v3574 = vld [vmem:[%s3573] sm:$0xf]
        %v3575 = vld [vmem:[%s3573 + $0x4] sm:$0xf]
        %v3576 = vld [vmem:[%s3573 + $0x8] sm:$0xf]
        %v3577 = vld [vmem:[%s3573 + $0xc] sm:$0xf]
        %v3582 = vunpack.c.l.b16 %v3574
        %v3583 = vunpack.c.l.b16 %v3575
        %v3584 = vunpack.c.l.b16 %v3576
        %v3585 = vunpack.c.l.b16 %v3577
        %v3586 = vpack.c.b16 %v3583, %v3582
        %v3587 = vpack.c.b16 %v3585, %v3584
        %v3591 = vsel %vm1654, %v3572, 0
        %3593 = vmatpush.bf16.msra.mxu0 0
        %3594 = vmatpush.bf16.msra.mxu0 0
        %3595 = vmatpush.bf16.msra.mxu0 0
        %3596 = vmatpush.bf16.msra.mxu0 0
        %3597 = vmatpush.bf16.msra.mxu0 0
        %3598 = vmatpush.bf16.msra.mxu0 0
        %3599 = vmatpush.bf16.msra.mxu0 %v3587
        %3600 = vmatpush.bf16.msra.mxu0 %v3586
        %3601 = vmatmul.bf16.gmra.mxu0 %v3591
        %v3602 = vpop.f32.mrf.mxu0
        %v3603 = vadd.f32 0.0, %v3602
        %v3604 = vpop.f32.mrf.mxu0
        %v3605 = vadd.f32 0.0, %v3604
        %3606 = vdwg.mxu0
        %v3611 = vunpack.c.l.b16 %v3438
        %v3612 = vunpack.c.l.b16 %v3439
        %v3613 = vunpack.c.l.b16 %v3440
        %v3614 = vunpack.c.l.b16 %v3441
        %v3615 = vpack.c.b16 %v3612, %v3611
        %v3616 = vpack.c.b16 %v3614, %v3613
        %v3620 = vsel %vm1654, %v3437, 0
        %3622 = vmatpush.bf16.msra.mxu0 0
        %3623 = vmatpush.bf16.msra.mxu0 0
        %3624 = vmatpush.bf16.msra.mxu0 0
        %3625 = vmatpush.bf16.msra.mxu0 0
        %3626 = vmatpush.bf16.msra.mxu0 0
        %3627 = vmatpush.bf16.msra.mxu0 0
        %3628 = vmatpush.bf16.msra.mxu0 %v3616
        %3629 = vmatpush.bf16.msra.mxu0 %v3615
        %3630 = vmatmul.bf16.gmra.mxu0 %v3620
        %v3631 = vpop.f32.mrf.mxu0
        %v3632 = vadd.f32 %v3603, %v3631
        %v3633 = vpop.f32.mrf.mxu0
        %v3634 = vadd.f32 %v3605, %v3633
        %3635 = vdwg.mxu0
        %3636 = vrot.lane.b32.xlu0 %v3444, 64
        %v3637 = vpop.permute.xlu0 %3636
        %3638 = vrot.lane.b32.xlu0 %v3449, 64
        %v3639 = vpop.permute.xlu0 %3638
        %v3641 = vsel %vm1654, %v3637, 0
        %v3644 = vsel %vm1654, %v3639, 0
        %3646 = vmatpush.bf16.xpose.msra.mxu0 0
        %3647 = vmatpush.bf16.xpose.msra.mxu0 0
        %3648 = vmatpush.bf16.xpose.msra.mxu0 0
        %3649 = vmatpush.bf16.xpose.msra.mxu0 0
        %3650 = vmatpush.bf16.xpose.msra.mxu0 0
        %3651 = vmatpush.bf16.xpose.msra.mxu0 0
        %3652 = vmatpush.bf16.xpose.msra.mxu0 0
        %3653 = vmatpush.bf16.xpose.msra.mxu0 %v3644
        %3654 = vmatmul.bf16.gmra.mxu0 %v3641
        %v3655 = vpop.f32.mrf.mxu0
        %v3656 = vadd.f32 %v1386, %v3655
        %v3657 = vpop.f32.mrf.mxu0
        %3658 = vdwg.mxu0
        %3659 = vrot.lane.b32.xlu0 %v3473, 64
        %v3660 = vpop.permute.xlu0 %3659
        %3661 = vrot.lane.b32.xlu0 %v3478, 64
        %v3662 = vpop.permute.xlu0 %3661
        %v3664 = vsel %vm1654, %v3660, 0
        %v3667 = vsel %vm1654, %v3662, 0
        %3669 = vmatpush.bf16.xpose.msra.mxu0 0
        %3670 = vmatpush.bf16.xpose.msra.mxu0 0
        %3671 = vmatpush.bf16.xpose.msra.mxu0 0
        %3672 = vmatpush.bf16.xpose.msra.mxu0 0
        %3673 = vmatpush.bf16.xpose.msra.mxu0 0
        %3674 = vmatpush.bf16.xpose.msra.mxu0 0
        %3675 = vmatpush.bf16.xpose.msra.mxu0 0
        %3676 = vmatpush.bf16.xpose.msra.mxu0 %v3667
        %3677 = vmatmul.bf16.gmra.mxu0 %v3664
        %v3678 = vpop.f32.mrf.mxu0
        %v3679 = vadd.f32 %v1386, %v3678
        %v3680 = vpop.f32.mrf.mxu0
        %3681 = vdwg.mxu0
        %v3682 = vsel %vm1693, %v3656, -inf
        %3683 = vmax.xlane.f32.xlu0 %v3682
        %v3684 = vpop.xlane.xlu0 %3683
        %v3685 = vsel %vm1693, %v3679, -inf
        %3686 = vmax.xlane.f32.xlu0 %v3685
        %v3687 = vpop.xlane.xlu0 %3686
        %v3688 = vsub.f32 %v3656, %v3684
        %v3689 = vsub.f32 %v3679, %v3687
        %v3690 = vmul.f32 %v3688, 1.442695
        %v3691 = vpow.pop %v3690
        %v3692 = vmul.f32 %v3689, 1.442695
        %v3693 = vpow.pop %v3692
        %v3694 = vsel %vm1693, %v3691, 0.0
        %3695 = vadd.xlane.f32.xlu0 %v3694
        %v3696 = vpop.xlane.xlu0 %3695
        %v3697 = vsel %vm1693, %v3693, 0.0
        %3698 = vadd.xlane.f32.xlu0 %v3697
        %v3699 = vpop.xlane.xlu0 %3698
        %v3700 = vrcp.pop %v3696
        %v3701 = vrcp.pop %v3699
        %v3702 = vmul.f32 %v3691, %v3700
        %v3703 = vmul.f32 %v3693, %v3701
        %v3704 = vpack.c.bf16 %v3702, %v3702
        %v3705 = vpack.c.bf16 %v3703, %v3703
        %3706 = vrot.lane.b32.xlu0 %v3526, 64
        %v3707 = vpop.permute.xlu0 %3706
        %v3709 = vsel %vm1693, %v3704, 0
        %v3712 = vsel %vm1723, %v3707, 0
        %3714 = vmatpush.bf16.msra.mxu0 0
        %3715 = vmatpush.bf16.msra.mxu0 0
        %3716 = vmatpush.bf16.msra.mxu0 0
        %3717 = vmatpush.bf16.msra.mxu0 0
        %3718 = vmatpush.bf16.msra.mxu0 0
        %3719 = vmatpush.bf16.msra.mxu0 0
        %3720 = vmatpush.bf16.msra.mxu0 0
        %3721 = vmatpush.bf16.msra.mxu0 %v3712
        %3722 = vmatmul.bf16.gmra.mxu0 %v3709
        %v3723 = vpop.f32.mrf.mxu0
        %v3724 = vadd.f32 0.0, %v3723
        %v3725 = vpop.f32.mrf.mxu0
        %3726 = vdwg.mxu0
        %3727 = vrot.lane.b32.xlu0 %v3550, 64
        %v3728 = vpop.permute.xlu0 %3727
        %v3730 = vsel %vm1693, %v3705, 0
        %v3733 = vsel %vm1723, %v3728, 0
        %3735 = vmatpush.bf16.msra.mxu0 0
        %3736 = vmatpush.bf16.msra.mxu0 0
        %3737 = vmatpush.bf16.msra.mxu0 0
        %3738 = vmatpush.bf16.msra.mxu0 0
        %3739 = vmatpush.bf16.msra.mxu0 0
        %3740 = vmatpush.bf16.msra.mxu0 0
        %3741 = vmatpush.bf16.msra.mxu0 0
        %3742 = vmatpush.bf16.msra.mxu0 %v3733
        %3743 = vmatmul.bf16.gmra.mxu0 %v3730
        %v3744 = vpop.f32.mrf.mxu0
        %v3745 = vadd.f32 0.0, %v3744
        %v3746 = vpop.f32.mrf.mxu0
        %3747 = vdwg.mxu0
        %v3748 = vpack.c.bf16 %v3745, %v3724
        %s3749 = scalar_lea.vmem %s45, 32
        %v3750 = vld [vmem:[%s3749] sm:$0xf]
        %v3751 = vld [vmem:[%s3749 + $0x4] sm:$0xf]
        %v3752 = vld [vmem:[%s3749 + $0x8] sm:$0xf]
        %v3753 = vld [vmem:[%s3749 + $0xc] sm:$0xf]
        %v3758 = vunpack.c.l.b16 %v3750
        %v3759 = vunpack.c.l.b16 %v3751
        %v3760 = vunpack.c.l.b16 %v3752
        %v3761 = vunpack.c.l.b16 %v3753
        %v3762 = vpack.c.b16 %v3759, %v3758
        %v3763 = vpack.c.b16 %v3761, %v3760
        %v3767 = vsel %vm1654, %v3748, 0
        %3769 = vmatpush.bf16.msra.mxu0 0
        %3770 = vmatpush.bf16.msra.mxu0 0
        %3771 = vmatpush.bf16.msra.mxu0 0
        %3772 = vmatpush.bf16.msra.mxu0 0
        %3773 = vmatpush.bf16.msra.mxu0 0
        %3774 = vmatpush.bf16.msra.mxu0 0
        %3775 = vmatpush.bf16.msra.mxu0 %v3763
        %3776 = vmatpush.bf16.msra.mxu0 %v3762
        %3777 = vmatmul.bf16.gmra.mxu0 %v3767
        %v3778 = vpop.f32.mrf.mxu0
        %v3779 = vadd.f32 0.0, %v3778
        %v3780 = vpop.f32.mrf.mxu0
        %v3781 = vadd.f32 0.0, %v3780
        %3782 = vdwg.mxu0
        %v3783 = vadd.f32 %v3632, %v3779
        %v3784 = vadd.f32 %v3634, %v3781
        %3785 = vrot.lane.b32.xlu0 %v3444, 32
        %v3786 = vpop.permute.xlu0 %3785
        %3787 = vrot.lane.b32.xlu0 %v3449, 32
        %v3788 = vpop.permute.xlu0 %3787
        %v3790 = vsel %vm1654, %v3786, 0
        %v3793 = vsel %vm1654, %v3788, 0
        %3795 = vmatpush.bf16.xpose.msra.mxu0 0
        %3796 = vmatpush.bf16.xpose.msra.mxu0 0
        %3797 = vmatpush.bf16.xpose.msra.mxu0 0
        %3798 = vmatpush.bf16.xpose.msra.mxu0 0
        %3799 = vmatpush.bf16.xpose.msra.mxu0 0
        %3800 = vmatpush.bf16.xpose.msra.mxu0 0
        %3801 = vmatpush.bf16.xpose.msra.mxu0 0
        %3802 = vmatpush.bf16.xpose.msra.mxu0 %v3793
        %3803 = vmatmul.bf16.gmra.mxu0 %v3790
        %v3804 = vpop.f32.mrf.mxu0
        %v3805 = vadd.f32 %v1386, %v3804
        %v3806 = vpop.f32.mrf.mxu0
        %3807 = vdwg.mxu0
        %3808 = vrot.lane.b32.xlu0 %v3473, 32
        %v3809 = vpop.permute.xlu0 %3808
        %3810 = vrot.lane.b32.xlu0 %v3478, 32
        %v3811 = vpop.permute.xlu0 %3810
        %v3813 = vsel %vm1654, %v3809, 0
        %v3816 = vsel %vm1654, %v3811, 0
        %3818 = vmatpush.bf16.xpose.msra.mxu0 0
        %3819 = vmatpush.bf16.xpose.msra.mxu0 0
        %3820 = vmatpush.bf16.xpose.msra.mxu0 0
        %3821 = vmatpush.bf16.xpose.msra.mxu0 0
        %3822 = vmatpush.bf16.xpose.msra.mxu0 0
        %3823 = vmatpush.bf16.xpose.msra.mxu0 0
        %3824 = vmatpush.bf16.xpose.msra.mxu0 0
        %3825 = vmatpush.bf16.xpose.msra.mxu0 %v3816
        %3826 = vmatmul.bf16.gmra.mxu0 %v3813
        %v3827 = vpop.f32.mrf.mxu0
        %v3828 = vadd.f32 %v1386, %v3827
        %v3829 = vpop.f32.mrf.mxu0
        %3830 = vdwg.mxu0
        %v3831 = vsel %vm1693, %v3805, -inf
        %3832 = vmax.xlane.f32.xlu0 %v3831
        %v3833 = vpop.xlane.xlu0 %3832
        %v3834 = vsel %vm1693, %v3828, -inf
        %3835 = vmax.xlane.f32.xlu0 %v3834
        %v3836 = vpop.xlane.xlu0 %3835
        %v3837 = vsub.f32 %v3805, %v3833
        %v3838 = vsub.f32 %v3828, %v3836
        %v3839 = vmul.f32 %v3837, 1.442695
        %v3840 = vpow.pop %v3839
        %v3841 = vmul.f32 %v3838, 1.442695
        %v3842 = vpow.pop %v3841
        %v3843 = vsel %vm1693, %v3840, 0.0
        %3844 = vadd.xlane.f32.xlu0 %v3843
        %v3845 = vpop.xlane.xlu0 %3844
        %v3846 = vsel %vm1693, %v3842, 0.0
        %3847 = vadd.xlane.f32.xlu0 %v3846
        %v3848 = vpop.xlane.xlu0 %3847
        %v3849 = vrcp.pop %v3845
        %v3850 = vrcp.pop %v3848
        %v3851 = vmul.f32 %v3840, %v3849
        %v3852 = vmul.f32 %v3842, %v3850
        %v3853 = vpack.c.bf16 %v3851, %v3851
        %v3854 = vpack.c.bf16 %v3852, %v3852
        %3855 = vrot.lane.b32.xlu0 %v3526, 32
        %v3856 = vpop.permute.xlu0 %3855
        %v3858 = vsel %vm1693, %v3853, 0
        %v3861 = vsel %vm1723, %v3856, 0
        %3863 = vmatpush.bf16.msra.mxu0 0
        %3864 = vmatpush.bf16.msra.mxu0 0
        %3865 = vmatpush.bf16.msra.mxu0 0
        %3866 = vmatpush.bf16.msra.mxu0 0
        %3867 = vmatpush.bf16.msra.mxu0 0
        %3868 = vmatpush.bf16.msra.mxu0 0
        %3869 = vmatpush.bf16.msra.mxu0 0
        %3870 = vmatpush.bf16.msra.mxu0 %v3861
        %3871 = vmatmul.bf16.gmra.mxu0 %v3858
        %v3872 = vpop.f32.mrf.mxu0
        %v3873 = vadd.f32 0.0, %v3872
        %v3874 = vpop.f32.mrf.mxu0
        %3875 = vdwg.mxu0
        %3876 = vrot.lane.b32.xlu0 %v3550, 32
        %v3877 = vpop.permute.xlu0 %3876
        %v3879 = vsel %vm1693, %v3854, 0
        %v3882 = vsel %vm1723, %v3877, 0
        %3884 = vmatpush.bf16.msra.mxu0 0
        %3885 = vmatpush.bf16.msra.mxu0 0
        %3886 = vmatpush.bf16.msra.mxu0 0
        %3887 = vmatpush.bf16.msra.mxu0 0
        %3888 = vmatpush.bf16.msra.mxu0 0
        %3889 = vmatpush.bf16.msra.mxu0 0
        %3890 = vmatpush.bf16.msra.mxu0 0
        %3891 = vmatpush.bf16.msra.mxu0 %v3882
        %3892 = vmatmul.bf16.gmra.mxu0 %v3879
        %v3893 = vpop.f32.mrf.mxu0
        %v3894 = vadd.f32 0.0, %v3893
        %v3895 = vpop.f32.mrf.mxu0
        %3896 = vdwg.mxu0
        %v3897 = vpack.c.bf16 %v3894, %v3873
        %s3898 = scalar_lea.vmem %s45, 48
        %v3899 = vld [vmem:[%s3898] sm:$0xf]
        %v3900 = vld [vmem:[%s3898 + $0x4] sm:$0xf]
        %v3901 = vld [vmem:[%s3898 + $0x8] sm:$0xf]
        %v3902 = vld [vmem:[%s3898 + $0xc] sm:$0xf]
        %v3907 = vunpack.c.l.b16 %v3899
        %v3908 = vunpack.c.l.b16 %v3900
        %v3909 = vunpack.c.l.b16 %v3901
        %v3910 = vunpack.c.l.b16 %v3902
        %v3911 = vpack.c.b16 %v3908, %v3907
        %v3912 = vpack.c.b16 %v3910, %v3909
        %v3916 = vsel %vm1654, %v3897, 0
        %3918 = vmatpush.bf16.msra.mxu0 0
        %3919 = vmatpush.bf16.msra.mxu0 0
        %3920 = vmatpush.bf16.msra.mxu0 0
        %3921 = vmatpush.bf16.msra.mxu0 0
        %3922 = vmatpush.bf16.msra.mxu0 0
        %3923 = vmatpush.bf16.msra.mxu0 0
        %3924 = vmatpush.bf16.msra.mxu0 %v3912
        %3925 = vmatpush.bf16.msra.mxu0 %v3911
        %3926 = vmatmul.bf16.gmra.mxu0 %v3916
        %v3927 = vpop.f32.mrf.mxu0
        %v3928 = vadd.f32 0.0, %v3927
        %v3929 = vpop.f32.mrf.mxu0
        %v3930 = vadd.f32 0.0, %v3929
        %3931 = vdwg.mxu0
        %v3932 = vadd.f32 %v3783, %v3928
        %v3933 = vadd.f32 %v3784, %v3930
        %v3934 = vadd.f32 %v3063, %v3932
        %v3935 = vadd.f32 %v3064, %v3933
        %v3936 = vld [vmem:[#allocation22] sm:$0x1]
        %v3938 = vperm.slane %v3936, 0
        %v3940 = vadd.f32 %v3934, %v3938
        %v3941 = vadd.f32 %v3935, %v3938
        %v3942 = vld [vmem:[#allocation24] sm:$0x1]
        %v3943 = vld [vmem:[#allocation25] sm:$0x1]
        %3944 = vadd.xlane.f32.xlu0 %v3940
        %v3945 = vpop.xlane.xlu0 %3944
        %3946 = vadd.xlane.f32.xlu0 %v3941
        %v3947 = vpop.xlane.xlu0 %3946
        %v3948 = vmul.f32 %v3945, %v1334
        %v3949 = vmul.f32 %v3947, %v1334
        %v3950 = vsub.f32 %v3940, %v3948
        %v3951 = vsub.f32 %v3941, %v3949
        %v3952 = vmul.f32 %v3950, %v3950
        %v3953 = vmul.f32 %v3951, %v3951
        %3954 = vadd.xlane.f32.xlu0 %v3952
        %v3955 = vpop.xlane.xlu0 %3954
        %3956 = vadd.xlane.f32.xlu0 %v3953
        %v3957 = vpop.xlane.xlu0 %3956
        %v3958 = vmul.f32 %v3955, %v1334
        %v3959 = vmul.f32 %v3957, %v1334
        %v3960 = vadd.f32 %v3958, 1e-05
        %v3961 = vadd.f32 %v3959, 1e-05
        %v3962 = vrsqrt.pop %v3960
        %v3963 = vmul.f32 %v3962, %v3960
        %v3964 = vmul.f32 %v3963, %v3962
        %v3965 = vmul.f32 0.5, %v3964
        %v3966 = vsub.f32 1.5, %v3965
        %v3967 = vmul.f32 %v3962, %v3966
        %vm3968 = vweird.f32 %v3960
        %vm3969 = vweird.f32 %v3962
        %vm3970 = vmor %vm3968, %vm3969
        %v3971 = vsel %vm3970, %v3962, %v3967
        %v3972 = vrsqrt.pop %v3961
        %v3973 = vmul.f32 %v3972, %v3961
        %v3974 = vmul.f32 %v3973, %v3972
        %v3975 = vmul.f32 0.5, %v3974
        %v3976 = vsub.f32 1.5, %v3975
        %v3977 = vmul.f32 %v3972, %v3976
        %vm3978 = vweird.f32 %v3961
        %vm3979 = vweird.f32 %v3972
        %vm3980 = vmor %vm3978, %vm3979
        %v3981 = vsel %vm3980, %v3972, %v3977
        %v3982 = vmul.f32 %v3950, %v3971
        %v3983 = vmul.f32 %v3951, %v3981
        %v3985 = vperm.slane %v3942, 0
        %v3987 = vmul.f32 %v3982, %v3985
        %v3988 = vmul.f32 %v3983, %v3985
        %v3990 = vperm.slane %v3943, 0
        %v3992 = vadd.f32 %v3987, %v3990
        %v3993 = vadd.f32 %v3988, %v3990
        %v3994 = vpack.c.bf16 %v3993, %v3992
        %v3995 = vld [vmem:[%s53] sm:$0xff]
        %v3996 = vld [vmem:[%s53 + $0x8] sm:$0xff]
        %v3997 = vld [vmem:[%s53 + $0x10] sm:$0xff]
        %v3998 = vld [vmem:[%s53 + $0x18] sm:$0xff]
        %v3999 = vld [vmem:[%s53 + $0x20] sm:$0xff]
        %v4000 = vld [vmem:[%s53 + $0x28] sm:$0xff]
        %v4001 = vld [vmem:[%s53 + $0x30] sm:$0xff]
        %v4002 = vld [vmem:[%s53 + $0x38] sm:$0xff]
        %v4003 = vld [vmem:[%s53 + $0x40] sm:$0xff]
        %v4004 = vld [vmem:[%s53 + $0x48] sm:$0xff]
        %v4005 = vld [vmem:[%s53 + $0x50] sm:$0xff]
        %v4006 = vld [vmem:[%s53 + $0x58] sm:$0xff]
        %v4007 = vld [vmem:[%s53 + $0x60] sm:$0xff]
        %v4008 = vld [vmem:[%s53 + $0x68] sm:$0xff]
        %v4009 = vld [vmem:[%s53 + $0x70] sm:$0xff]
        %v4010 = vld [vmem:[%s53 + $0x78] sm:$0xff]
        %v4011 = vld [vmem:[%s53 + $0x80] sm:$0xff]
        %v4012 = vld [vmem:[%s53 + $0x88] sm:$0xff]
        %v4013 = vld [vmem:[%s53 + $0x90] sm:$0xff]
        %v4014 = vld [vmem:[%s53 + $0x98] sm:$0xff]
        %v4015 = vld [vmem:[%s53 + $0xa0] sm:$0xff]
        %v4016 = vld [vmem:[%s53 + $0xa8] sm:$0xff]
        %v4017 = vld [vmem:[%s53 + $0xb0] sm:$0xff]
        %v4018 = vld [vmem:[%s53 + $0xb8] sm:$0xff]
        %v4019 = vld [vmem:[%s53 + $0xc0] sm:$0xff]
        %v4020 = vld [vmem:[%s53 + $0xc8] sm:$0xff]
        %v4021 = vld [vmem:[%s53 + $0xd0] sm:$0xff]
        %v4022 = vld [vmem:[%s53 + $0xd8] sm:$0xff]
        %v4023 = vld [vmem:[%s53 + $0xe0] sm:$0xff]
        %v4024 = vld [vmem:[%s53 + $0xe8] sm:$0xff]
        %v4025 = vld [vmem:[%s53 + $0xf0] sm:$0xff]
        %v4026 = vld [vmem:[%s53 + $0xf8] sm:$0xff]
        %v4027 = vld [vmem:[%s55] sm:$0xf]
        %v4029 = vperm.slane %v4027, 0
        %v4030 = vperm.slane %v4027, 1
        %v4031 = vperm.slane %v4027, 2
        %v4032 = vperm.slane %v4027, 3
        %v4069 = vunpack.c.l.b16 %v3995
        %v4070 = vunpack.c.h.b16 %v3995
        %v4071 = vunpack.c.l.b16 %v3996
        %v4072 = vunpack.c.h.b16 %v3996
        %v4073 = vunpack.c.l.b16 %v3997
        %v4074 = vunpack.c.h.b16 %v3997
        %v4075 = vunpack.c.l.b16 %v3998
        %v4076 = vunpack.c.h.b16 %v3998
        %v4077 = vunpack.c.l.b16 %v3999
        %v4078 = vunpack.c.h.b16 %v3999
        %v4079 = vunpack.c.l.b16 %v4000
        %v4080 = vunpack.c.h.b16 %v4000
        %v4081 = vunpack.c.l.b16 %v4001
        %v4082 = vunpack.c.h.b16 %v4001
        %v4083 = vunpack.c.l.b16 %v4002
        %v4084 = vunpack.c.h.b16 %v4002
        %v4085 = vunpack.c.l.b16 %v4003
        %v4086 = vunpack.c.h.b16 %v4003
        %v4087 = vunpack.c.l.b16 %v4004
        %v4088 = vunpack.c.h.b16 %v4004
        %v4089 = vunpack.c.l.b16 %v4005
        %v4090 = vunpack.c.h.b16 %v4005
        %v4091 = vunpack.c.l.b16 %v4006
        %v4092 = vunpack.c.h.b16 %v4006
        %v4093 = vunpack.c.l.b16 %v4007
        %v4094 = vunpack.c.h.b16 %v4007
        %v4095 = vunpack.c.l.b16 %v4008
        %v4096 = vunpack.c.h.b16 %v4008
        %v4097 = vunpack.c.l.b16 %v4009
        %v4098 = vunpack.c.h.b16 %v4009
        %v4099 = vunpack.c.l.b16 %v4010
        %v4100 = vunpack.c.h.b16 %v4010
        %v4101 = vunpack.c.l.b16 %v4011
        %v4102 = vunpack.c.h.b16 %v4011
        %v4103 = vunpack.c.l.b16 %v4012
        %v4104 = vunpack.c.h.b16 %v4012
        %v4105 = vunpack.c.l.b16 %v4013
        %v4106 = vunpack.c.h.b16 %v4013
        %v4107 = vunpack.c.l.b16 %v4014
        %v4108 = vunpack.c.h.b16 %v4014
        %v4109 = vunpack.c.l.b16 %v4015
        %v4110 = vunpack.c.h.b16 %v4015
        %v4111 = vunpack.c.l.b16 %v4016
        %v4112 = vunpack.c.h.b16 %v4016
        %v4113 = vunpack.c.l.b16 %v4017
        %v4114 = vunpack.c.h.b16 %v4017
        %v4115 = vunpack.c.l.b16 %v4018
        %v4116 = vunpack.c.h.b16 %v4018
        %v4117 = vunpack.c.l.b16 %v4019
        %v4118 = vunpack.c.h.b16 %v4019
        %v4119 = vunpack.c.l.b16 %v4020
        %v4120 = vunpack.c.h.b16 %v4020
        %v4121 = vunpack.c.l.b16 %v4021
        %v4122 = vunpack.c.h.b16 %v4021
        %v4123 = vunpack.c.l.b16 %v4022
        %v4124 = vunpack.c.h.b16 %v4022
        %v4125 = vunpack.c.l.b16 %v4023
        %v4126 = vunpack.c.h.b16 %v4023
        %v4127 = vunpack.c.l.b16 %v4024
        %v4128 = vunpack.c.h.b16 %v4024
        %v4129 = vunpack.c.l.b16 %v4025
        %v4130 = vunpack.c.h.b16 %v4025
        %v4131 = vunpack.c.l.b16 %v4026
        %v4132 = vunpack.c.h.b16 %v4026
        %v4133 = vpack.c.b16 %v4073, %v4069
        %v4134 = vpack.c.b16 %v4074, %v4070
        %v4135 = vpack.c.b16 %v4075, %v4071
        %v4136 = vpack.c.b16 %v4076, %v4072
        %v4137 = vpack.c.b16 %v4081, %v4077
        %v4138 = vpack.c.b16 %v4082, %v4078
        %v4139 = vpack.c.b16 %v4083, %v4079
        %v4140 = vpack.c.b16 %v4084, %v4080
        %v4141 = vpack.c.b16 %v4089, %v4085
        %v4142 = vpack.c.b16 %v4090, %v4086
        %v4143 = vpack.c.b16 %v4091, %v4087
        %v4144 = vpack.c.b16 %v4092, %v4088
        %v4145 = vpack.c.b16 %v4097, %v4093
        %v4146 = vpack.c.b16 %v4098, %v4094
        %v4147 = vpack.c.b16 %v4099, %v4095
        %v4148 = vpack.c.b16 %v4100, %v4096
        %v4149 = vpack.c.b16 %v4105, %v4101
        %v4150 = vpack.c.b16 %v4106, %v4102
        %v4151 = vpack.c.b16 %v4107, %v4103
        %v4152 = vpack.c.b16 %v4108, %v4104
        %v4153 = vpack.c.b16 %v4113, %v4109
        %v4154 = vpack.c.b16 %v4114, %v4110
        %v4155 = vpack.c.b16 %v4115, %v4111
        %v4156 = vpack.c.b16 %v4116, %v4112
        %v4157 = vpack.c.b16 %v4121, %v4117
        %v4158 = vpack.c.b16 %v4122, %v4118
        %v4159 = vpack.c.b16 %v4123, %v4119
        %v4160 = vpack.c.b16 %v4124, %v4120
        %v4161 = vpack.c.b16 %v4129, %v4125
        %v4162 = vpack.c.b16 %v4130, %v4126
        %v4163 = vpack.c.b16 %v4131, %v4127
        %v4164 = vpack.c.b16 %v4132, %v4128
        %4197 = vmatpush.bf16.msra.mxu0 %v4161
        %4198 = vmatpush.bf16.msra.mxu0 %v4157
        %4199 = vmatpush.bf16.msra.mxu0 %v4153
        %4200 = vmatpush.bf16.msra.mxu0 %v4149
        %4201 = vmatpush.bf16.msra.mxu0 %v4145
        %4202 = vmatpush.bf16.msra.mxu0 %v4141
        %4203 = vmatpush.bf16.msra.mxu0 %v4137
        %4204 = vmatpush.bf16.msra.mxu0 %v4133
        %4205 = vmatmul.bf16.gmra.mxu0 %v3994
        %v4206 = vpop.f32.mrf.mxu0
        %v4207 = vadd.f32 %v4029, %v4206
        %v4208 = vpop.f32.mrf.mxu0
        %v4209 = vadd.f32 %v4029, %v4208
        %4210 = vdwg.mxu0
        %4211 = vmatpush.bf16.msra.mxu0 %v4162
        %4212 = vmatpush.bf16.msra.mxu0 %v4158
        %4213 = vmatpush.bf16.msra.mxu0 %v4154
        %4214 = vmatpush.bf16.msra.mxu0 %v4150
        %4215 = vmatpush.bf16.msra.mxu0 %v4146
        %4216 = vmatpush.bf16.msra.mxu0 %v4142
        %4217 = vmatpush.bf16.msra.mxu0 %v4138
        %4218 = vmatpush.bf16.msra.mxu0 %v4134
        %4219 = vmatmul.bf16.gmra.mxu0 %v3994
        %v4220 = vpop.f32.mrf.mxu0
        %v4221 = vadd.f32 %v4030, %v4220
        %v4222 = vpop.f32.mrf.mxu0
        %v4223 = vadd.f32 %v4030, %v4222
        %4224 = vdwg.mxu0
        %4225 = vmatpush.bf16.msra.mxu0 %v4163
        %4226 = vmatpush.bf16.msra.mxu0 %v4159
        %4227 = vmatpush.bf16.msra.mxu0 %v4155
        %4228 = vmatpush.bf16.msra.mxu0 %v4151
        %4229 = vmatpush.bf16.msra.mxu0 %v4147
        %4230 = vmatpush.bf16.msra.mxu0 %v4143
        %4231 = vmatpush.bf16.msra.mxu0 %v4139
        %4232 = vmatpush.bf16.msra.mxu0 %v4135
        %4233 = vmatmul.bf16.gmra.mxu0 %v3994
        %v4234 = vpop.f32.mrf.mxu0
        %v4235 = vadd.f32 %v4031, %v4234
        %v4236 = vpop.f32.mrf.mxu0
        %v4237 = vadd.f32 %v4031, %v4236
        %4238 = vdwg.mxu0
        %4239 = vmatpush.bf16.msra.mxu0 %v4164
        %4240 = vmatpush.bf16.msra.mxu0 %v4160
        %4241 = vmatpush.bf16.msra.mxu0 %v4156
        %4242 = vmatpush.bf16.msra.mxu0 %v4152
        %4243 = vmatpush.bf16.msra.mxu0 %v4148
        %4244 = vmatpush.bf16.msra.mxu0 %v4144
        %4245 = vmatpush.bf16.msra.mxu0 %v4140
        %4246 = vmatpush.bf16.msra.mxu0 %v4136
        %4247 = vmatmul.bf16.gmra.mxu0 %v3994
        %v4248 = vpop.f32.mrf.mxu0
        %v4249 = vadd.f32 %v4032, %v4248
        %v4250 = vpop.f32.mrf.mxu0
        %v4251 = vadd.f32 %v4032, %v4250
        %4252 = vdwg.mxu0
        %v4253 = vmul.f32 %v4207, 1.702
        %v4254 = vmul.f32 %v4221, 1.702
        %v4255 = vmul.f32 %v4235, 1.702
        %v4256 = vmul.f32 %v4249, 1.702
        %v4257 = vmul.f32 %v4209, 1.702
        %v4258 = vmul.f32 %v4223, 1.702
        %v4259 = vmul.f32 %v4237, 1.702
        %v4260 = vmul.f32 %v4251, 1.702
        %v4261 = vxor.u32 %v4253, 2147483648
        %v4262 = vxor.u32 %v4254, 2147483648
        %v4263 = vxor.u32 %v4255, 2147483648
        %v4264 = vxor.u32 %v4256, 2147483648
        %v4265 = vxor.u32 %v4257, 2147483648
        %v4266 = vxor.u32 %v4258, 2147483648
        %v4267 = vxor.u32 %v4259, 2147483648
        %v4268 = vxor.u32 %v4260, 2147483648
        %v4269 = vmul.f32 %v4261, 1.442695
        %v4270 = vpow.pop %v4269
        %v4271 = vmul.f32 %v4262, 1.442695
        %v4272 = vpow.pop %v4271
        %v4273 = vmul.f32 %v4263, 1.442695
        %v4274 = vpow.pop %v4273
        %v4275 = vmul.f32 %v4264, 1.442695
        %v4276 = vpow.pop %v4275
        %v4277 = vmul.f32 %v4265, 1.442695
        %v4278 = vpow.pop %v4277
        %v4279 = vmul.f32 %v4266, 1.442695
        %v4280 = vpow.pop %v4279
        %v4281 = vmul.f32 %v4267, 1.442695
        %v4282 = vpow.pop %v4281
        %v4283 = vmul.f32 %v4268, 1.442695
        %v4284 = vpow.pop %v4283
        %v4285 = vadd.f32 %v4270, 1.0
        %v4286 = vadd.f32 %v4272, 1.0
        %v4287 = vadd.f32 %v4274, 1.0
        %v4288 = vadd.f32 %v4276, 1.0
        %v4289 = vadd.f32 %v4278, 1.0
        %v4290 = vadd.f32 %v4280, 1.0
        %v4291 = vadd.f32 %v4282, 1.0
        %v4292 = vadd.f32 %v4284, 1.0
        %v4293 = vrcp.pop %v4285
        %v4294 = vmul.f32 %v4285, %v4293
        %v4295 = vsub.f32 1.0, %v4294
        %v4296 = vmul.f32 %v4293, %v4295
        %v4297 = vadd.f32 %v4293, %v4296
        %vm4298 = vweird.f32 %v4285
        %vm4299 = vweird.f32 %v4293
        %vm4300 = vmor %vm4298, %vm4299
        %v4301 = vsel %vm4300, %v4293, %v4297
        %v4302 = vand.u32 2147483647, %v4285
        %vm4303 = vcmp.eq.f32.partialorder %v4302, 8.507059e+37
        %v4304 = vand.u32 %v4285, 2147483648
        %v4305 = vor.u32 1.1754944e-38, %v4304
        %v4306 = vsel %vm4303, %v4305, %v4301
        %v4307 = vmul.f32 1.0, %v4306
        %v4308 = vrcp.pop %v4286
        %v4309 = vmul.f32 %v4286, %v4308
        %v4310 = vsub.f32 1.0, %v4309
        %v4311 = vmul.f32 %v4308, %v4310
        %v4312 = vadd.f32 %v4308, %v4311
        %vm4313 = vweird.f32 %v4286
        %vm4314 = vweird.f32 %v4308
        %vm4315 = vmor %vm4313, %vm4314
        %v4316 = vsel %vm4315, %v4308, %v4312
        %v4317 = vand.u32 2147483647, %v4286
        %vm4318 = vcmp.eq.f32.partialorder %v4317, 8.507059e+37
        %v4319 = vand.u32 %v4286, 2147483648
        %v4320 = vor.u32 1.1754944e-38, %v4319
        %v4321 = vsel %vm4318, %v4320, %v4316
        %v4322 = vmul.f32 1.0, %v4321
        %v4323 = vrcp.pop %v4287
        %v4324 = vmul.f32 %v4287, %v4323
        %v4325 = vsub.f32 1.0, %v4324
        %v4326 = vmul.f32 %v4323, %v4325
        %v4327 = vadd.f32 %v4323, %v4326
        %vm4328 = vweird.f32 %v4287
        %vm4329 = vweird.f32 %v4323
        %vm4330 = vmor %vm4328, %vm4329
        %v4331 = vsel %vm4330, %v4323, %v4327
        %v4332 = vand.u32 2147483647, %v4287
        %vm4333 = vcmp.eq.f32.partialorder %v4332, 8.507059e+37
        %v4334 = vand.u32 %v4287, 2147483648
        %v4335 = vor.u32 1.1754944e-38, %v4334
        %v4336 = vsel %vm4333, %v4335, %v4331
        %v4337 = vmul.f32 1.0, %v4336
        %v4338 = vrcp.pop %v4288
        %v4339 = vmul.f32 %v4288, %v4338
        %v4340 = vsub.f32 1.0, %v4339
        %v4341 = vmul.f32 %v4338, %v4340
        %v4342 = vadd.f32 %v4338, %v4341
        %vm4343 = vweird.f32 %v4288
        %vm4344 = vweird.f32 %v4338
        %vm4345 = vmor %vm4343, %vm4344
        %v4346 = vsel %vm4345, %v4338, %v4342
        %v4347 = vand.u32 2147483647, %v4288
        %vm4348 = vcmp.eq.f32.partialorder %v4347, 8.507059e+37
        %v4349 = vand.u32 %v4288, 2147483648
        %v4350 = vor.u32 1.1754944e-38, %v4349
        %v4351 = vsel %vm4348, %v4350, %v4346
        %v4352 = vmul.f32 1.0, %v4351
        %v4353 = vrcp.pop %v4289
        %v4354 = vmul.f32 %v4289, %v4353
        %v4355 = vsub.f32 1.0, %v4354
        %v4356 = vmul.f32 %v4353, %v4355
        %v4357 = vadd.f32 %v4353, %v4356
        %vm4358 = vweird.f32 %v4289
        %vm4359 = vweird.f32 %v4353
        %vm4360 = vmor %vm4358, %vm4359
        %v4361 = vsel %vm4360, %v4353, %v4357
        %v4362 = vand.u32 2147483647, %v4289
        %vm4363 = vcmp.eq.f32.partialorder %v4362, 8.507059e+37
        %v4364 = vand.u32 %v4289, 2147483648
        %v4365 = vor.u32 1.1754944e-38, %v4364
        %v4366 = vsel %vm4363, %v4365, %v4361
        %v4367 = vmul.f32 1.0, %v4366
        %v4368 = vrcp.pop %v4290
        %v4369 = vmul.f32 %v4290, %v4368
        %v4370 = vsub.f32 1.0, %v4369
        %v4371 = vmul.f32 %v4368, %v4370
        %v4372 = vadd.f32 %v4368, %v4371
        %vm4373 = vweird.f32 %v4290
        %vm4374 = vweird.f32 %v4368
        %vm4375 = vmor %vm4373, %vm4374
        %v4376 = vsel %vm4375, %v4368, %v4372
        %v4377 = vand.u32 2147483647, %v4290
        %vm4378 = vcmp.eq.f32.partialorder %v4377, 8.507059e+37
        %v4379 = vand.u32 %v4290, 2147483648
        %v4380 = vor.u32 1.1754944e-38, %v4379
        %v4381 = vsel %vm4378, %v4380, %v4376
        %v4382 = vmul.f32 1.0, %v4381
        %v4383 = vrcp.pop %v4291
        %v4384 = vmul.f32 %v4291, %v4383
        %v4385 = vsub.f32 1.0, %v4384
        %v4386 = vmul.f32 %v4383, %v4385
        %v4387 = vadd.f32 %v4383, %v4386
        %vm4388 = vweird.f32 %v4291
        %vm4389 = vweird.f32 %v4383
        %vm4390 = vmor %vm4388, %vm4389
        %v4391 = vsel %vm4390, %v4383, %v4387
        %v4392 = vand.u32 2147483647, %v4291
        %vm4393 = vcmp.eq.f32.partialorder %v4392, 8.507059e+37
        %v4394 = vand.u32 %v4291, 2147483648
        %v4395 = vor.u32 1.1754944e-38, %v4394
        %v4396 = vsel %vm4393, %v4395, %v4391
        %v4397 = vmul.f32 1.0, %v4396
        %v4398 = vrcp.pop %v4292
        %v4399 = vmul.f32 %v4292, %v4398
        %v4400 = vsub.f32 1.0, %v4399
        %v4401 = vmul.f32 %v4398, %v4400
        %v4402 = vadd.f32 %v4398, %v4401
        %vm4403 = vweird.f32 %v4292
        %vm4404 = vweird.f32 %v4398
        %vm4405 = vmor %vm4403, %vm4404
        %v4406 = vsel %vm4405, %v4398, %v4402
        %v4407 = vand.u32 2147483647, %v4292
        %vm4408 = vcmp.eq.f32.partialorder %v4407, 8.507059e+37
        %v4409 = vand.u32 %v4292, 2147483648
        %v4410 = vor.u32 1.1754944e-38, %v4409
        %v4411 = vsel %vm4408, %v4410, %v4406
        %v4412 = vmul.f32 1.0, %v4411
        %v4413 = vmul.f32 %v4207, %v4307
        %v4414 = vmul.f32 %v4221, %v4322
        %v4415 = vmul.f32 %v4235, %v4337
        %v4416 = vmul.f32 %v4249, %v4352
        %v4417 = vmul.f32 %v4209, %v4367
        %v4418 = vmul.f32 %v4223, %v4382
        %v4419 = vmul.f32 %v4237, %v4397
        %v4420 = vmul.f32 %v4251, %v4412
        %v4421 = vpack.c.bf16 %v4417, %v4413
        %v4422 = vpack.c.bf16 %v4418, %v4414
        %v4423 = vpack.c.bf16 %v4419, %v4415
        %v4424 = vpack.c.bf16 %v4420, %v4416
        %v4425 = vld [vmem:[%s57] sm:$0xf]
        %v4426 = vld [vmem:[%s57 + $0x4] sm:$0xf]
        %v4427 = vld [vmem:[%s57 + $0x8] sm:$0xf]
        %v4428 = vld [vmem:[%s57 + $0xc] sm:$0xf]
        %v4429 = vld [vmem:[%s57 + $0x10] sm:$0xf]
        %v4430 = vld [vmem:[%s57 + $0x14] sm:$0xf]
        %v4431 = vld [vmem:[%s57 + $0x18] sm:$0xf]
        %v4432 = vld [vmem:[%s57 + $0x1c] sm:$0xf]
        %v4433 = vld [vmem:[%s57 + $0x20] sm:$0xf]
        %v4434 = vld [vmem:[%s57 + $0x24] sm:$0xf]
        %v4435 = vld [vmem:[%s57 + $0x28] sm:$0xf]
        %v4436 = vld [vmem:[%s57 + $0x2c] sm:$0xf]
        %v4437 = vld [vmem:[%s57 + $0x30] sm:$0xf]
        %v4438 = vld [vmem:[%s57 + $0x34] sm:$0xf]
        %v4439 = vld [vmem:[%s57 + $0x38] sm:$0xf]
        %v4440 = vld [vmem:[%s57 + $0x3c] sm:$0xf]
        %v4441 = vld [vmem:[%s57 + $0x40] sm:$0xf]
        %v4442 = vld [vmem:[%s57 + $0x44] sm:$0xf]
        %v4443 = vld [vmem:[%s57 + $0x48] sm:$0xf]
        %v4444 = vld [vmem:[%s57 + $0x4c] sm:$0xf]
        %v4445 = vld [vmem:[%s57 + $0x50] sm:$0xf]
        %v4446 = vld [vmem:[%s57 + $0x54] sm:$0xf]
        %v4447 = vld [vmem:[%s57 + $0x58] sm:$0xf]
        %v4448 = vld [vmem:[%s57 + $0x5c] sm:$0xf]
        %v4449 = vld [vmem:[%s57 + $0x60] sm:$0xf]
        %v4450 = vld [vmem:[%s57 + $0x64] sm:$0xf]
        %v4451 = vld [vmem:[%s57 + $0x68] sm:$0xf]
        %v4452 = vld [vmem:[%s57 + $0x6c] sm:$0xf]
        %v4453 = vld [vmem:[%s57 + $0x70] sm:$0xf]
        %v4454 = vld [vmem:[%s57 + $0x74] sm:$0xf]
        %v4455 = vld [vmem:[%s57 + $0x78] sm:$0xf]
        %v4456 = vld [vmem:[%s57 + $0x7c] sm:$0xf]
        %v4457 = vld [vmem:[%s57 + $0x80] sm:$0xf]
        %v4458 = vld [vmem:[%s57 + $0x84] sm:$0xf]
        %v4459 = vld [vmem:[%s57 + $0x88] sm:$0xf]
        %v4460 = vld [vmem:[%s57 + $0x8c] sm:$0xf]
        %v4461 = vld [vmem:[%s57 + $0x90] sm:$0xf]
        %v4462 = vld [vmem:[%s57 + $0x94] sm:$0xf]
        %v4463 = vld [vmem:[%s57 + $0x98] sm:$0xf]
        %v4464 = vld [vmem:[%s57 + $0x9c] sm:$0xf]
        %v4465 = vld [vmem:[%s57 + $0xa0] sm:$0xf]
        %v4466 = vld [vmem:[%s57 + $0xa4] sm:$0xf]
        %v4467 = vld [vmem:[%s57 + $0xa8] sm:$0xf]
        %v4468 = vld [vmem:[%s57 + $0xac] sm:$0xf]
        %v4469 = vld [vmem:[%s57 + $0xb0] sm:$0xf]
        %v4470 = vld [vmem:[%s57 + $0xb4] sm:$0xf]
        %v4471 = vld [vmem:[%s57 + $0xb8] sm:$0xf]
        %v4472 = vld [vmem:[%s57 + $0xbc] sm:$0xf]
        %v4473 = vld [vmem:[%s57 + $0xc0] sm:$0xf]
        %v4474 = vld [vmem:[%s57 + $0xc4] sm:$0xf]
        %v4475 = vld [vmem:[%s57 + $0xc8] sm:$0xf]
        %v4476 = vld [vmem:[%s57 + $0xcc] sm:$0xf]
        %v4477 = vld [vmem:[%s57 + $0xd0] sm:$0xf]
        %v4478 = vld [vmem:[%s57 + $0xd4] sm:$0xf]
        %v4479 = vld [vmem:[%s57 + $0xd8] sm:$0xf]
        %v4480 = vld [vmem:[%s57 + $0xdc] sm:$0xf]
        %v4481 = vld [vmem:[%s57 + $0xe0] sm:$0xf]
        %v4482 = vld [vmem:[%s57 + $0xe4] sm:$0xf]
        %v4483 = vld [vmem:[%s57 + $0xe8] sm:$0xf]
        %v4484 = vld [vmem:[%s57 + $0xec] sm:$0xf]
        %v4485 = vld [vmem:[%s57 + $0xf0] sm:$0xf]
        %v4486 = vld [vmem:[%s57 + $0xf4] sm:$0xf]
        %v4487 = vld [vmem:[%s57 + $0xf8] sm:$0xf]
        %v4488 = vld [vmem:[%s57 + $0xfc] sm:$0xf]
        %v4489 = vld [vmem:[#allocation27] sm:$0x1]
        %v4491 = vperm.slane %v4489, 0
        %v4557 = vunpack.c.l.b16 %v4425
        %v4558 = vunpack.c.l.b16 %v4426
        %v4559 = vunpack.c.l.b16 %v4427
        %v4560 = vunpack.c.l.b16 %v4428
        %v4561 = vunpack.c.l.b16 %v4429
        %v4562 = vunpack.c.l.b16 %v4430
        %v4563 = vunpack.c.l.b16 %v4431
        %v4564 = vunpack.c.l.b16 %v4432
        %v4565 = vunpack.c.l.b16 %v4433
        %v4566 = vunpack.c.l.b16 %v4434
        %v4567 = vunpack.c.l.b16 %v4435
        %v4568 = vunpack.c.l.b16 %v4436
        %v4569 = vunpack.c.l.b16 %v4437
        %v4570 = vunpack.c.l.b16 %v4438
        %v4571 = vunpack.c.l.b16 %v4439
        %v4572 = vunpack.c.l.b16 %v4440
        %v4573 = vunpack.c.l.b16 %v4441
        %v4574 = vunpack.c.l.b16 %v4442
        %v4575 = vunpack.c.l.b16 %v4443
        %v4576 = vunpack.c.l.b16 %v4444
        %v4577 = vunpack.c.l.b16 %v4445
        %v4578 = vunpack.c.l.b16 %v4446
        %v4579 = vunpack.c.l.b16 %v4447
        %v4580 = vunpack.c.l.b16 %v4448
        %v4581 = vunpack.c.l.b16 %v4449
        %v4582 = vunpack.c.l.b16 %v4450
        %v4583 = vunpack.c.l.b16 %v4451
        %v4584 = vunpack.c.l.b16 %v4452
        %v4585 = vunpack.c.l.b16 %v4453
        %v4586 = vunpack.c.l.b16 %v4454
        %v4587 = vunpack.c.l.b16 %v4455
        %v4588 = vunpack.c.l.b16 %v4456
        %v4589 = vunpack.c.l.b16 %v4457
        %v4590 = vunpack.c.l.b16 %v4458
        %v4591 = vunpack.c.l.b16 %v4459
        %v4592 = vunpack.c.l.b16 %v4460
        %v4593 = vunpack.c.l.b16 %v4461
        %v4594 = vunpack.c.l.b16 %v4462
        %v4595 = vunpack.c.l.b16 %v4463
        %v4596 = vunpack.c.l.b16 %v4464
        %v4597 = vunpack.c.l.b16 %v4465
        %v4598 = vunpack.c.l.b16 %v4466
        %v4599 = vunpack.c.l.b16 %v4467
        %v4600 = vunpack.c.l.b16 %v4468
        %v4601 = vunpack.c.l.b16 %v4469
        %v4602 = vunpack.c.l.b16 %v4470
        %v4603 = vunpack.c.l.b16 %v4471
        %v4604 = vunpack.c.l.b16 %v4472
        %v4605 = vunpack.c.l.b16 %v4473
        %v4606 = vunpack.c.l.b16 %v4474
        %v4607 = vunpack.c.l.b16 %v4475
        %v4608 = vunpack.c.l.b16 %v4476
        %v4609 = vunpack.c.l.b16 %v4477
        %v4610 = vunpack.c.l.b16 %v4478
        %v4611 = vunpack.c.l.b16 %v4479
        %v4612 = vunpack.c.l.b16 %v4480
        %v4613 = vunpack.c.l.b16 %v4481
        %v4614 = vunpack.c.l.b16 %v4482
        %v4615 = vunpack.c.l.b16 %v4483
        %v4616 = vunpack.c.l.b16 %v4484
        %v4617 = vunpack.c.l.b16 %v4485
        %v4618 = vunpack.c.l.b16 %v4486
        %v4619 = vunpack.c.l.b16 %v4487
        %v4620 = vunpack.c.l.b16 %v4488
        %v4621 = vpack.c.b16 %v4558, %v4557
        %v4622 = vpack.c.b16 %v4560, %v4559
        %v4623 = vpack.c.b16 %v4562, %v4561
        %v4624 = vpack.c.b16 %v4564, %v4563
        %v4625 = vpack.c.b16 %v4566, %v4565
        %v4626 = vpack.c.b16 %v4568, %v4567
        %v4627 = vpack.c.b16 %v4570, %v4569
        %v4628 = vpack.c.b16 %v4572, %v4571
        %v4629 = vpack.c.b16 %v4574, %v4573
        %v4630 = vpack.c.b16 %v4576, %v4575
        %v4631 = vpack.c.b16 %v4578, %v4577
        %v4632 = vpack.c.b16 %v4580, %v4579
        %v4633 = vpack.c.b16 %v4582, %v4581
        %v4634 = vpack.c.b16 %v4584, %v4583
        %v4635 = vpack.c.b16 %v4586, %v4585
        %v4636 = vpack.c.b16 %v4588, %v4587
        %v4637 = vpack.c.b16 %v4590, %v4589
        %v4638 = vpack.c.b16 %v4592, %v4591
        %v4639 = vpack.c.b16 %v4594, %v4593
        %v4640 = vpack.c.b16 %v4596, %v4595
        %v4641 = vpack.c.b16 %v4598, %v4597
        %v4642 = vpack.c.b16 %v4600, %v4599
        %v4643 = vpack.c.b16 %v4602, %v4601
        %v4644 = vpack.c.b16 %v4604, %v4603
        %v4645 = vpack.c.b16 %v4606, %v4605
        %v4646 = vpack.c.b16 %v4608, %v4607
        %v4647 = vpack.c.b16 %v4610, %v4609
        %v4648 = vpack.c.b16 %v4612, %v4611
        %v4649 = vpack.c.b16 %v4614, %v4613
        %v4650 = vpack.c.b16 %v4616, %v4615
        %v4651 = vpack.c.b16 %v4618, %v4617
        %v4652 = vpack.c.b16 %v4620, %v4619
        %4685 = vmatpush.bf16.msra.mxu0 %v4628
        %4686 = vmatpush.bf16.msra.mxu0 %v4627
        %4687 = vmatpush.bf16.msra.mxu0 %v4626
        %4688 = vmatpush.bf16.msra.mxu0 %v4625
        %4689 = vmatpush.bf16.msra.mxu0 %v4624
        %4690 = vmatpush.bf16.msra.mxu0 %v4623
        %4691 = vmatpush.bf16.msra.mxu0 %v4622
        %4692 = vmatpush.bf16.msra.mxu0 %v4621
        %4693 = vmatmul.bf16.gmra.mxu0 %v4421
        %v4694 = vpop.f32.mrf.mxu0
        %v4695 = vadd.f32 %v4491, %v4694
        %v4696 = vpop.f32.mrf.mxu0
        %v4697 = vadd.f32 %v4491, %v4696
        %4698 = vdwg.mxu0
        %4699 = vmatpush.bf16.msra.mxu0 %v4636
        %4700 = vmatpush.bf16.msra.mxu0 %v4635
        %4701 = vmatpush.bf16.msra.mxu0 %v4634
        %4702 = vmatpush.bf16.msra.mxu0 %v4633
        %4703 = vmatpush.bf16.msra.mxu0 %v4632
        %4704 = vmatpush.bf16.msra.mxu0 %v4631
        %4705 = vmatpush.bf16.msra.mxu0 %v4630
        %4706 = vmatpush.bf16.msra.mxu0 %v4629
        %4707 = vmatmul.bf16.gmra.mxu0 %v4422
        %v4708 = vpop.f32.mrf.mxu0
        %v4709 = vadd.f32 %v4695, %v4708
        %v4710 = vpop.f32.mrf.mxu0
        %v4711 = vadd.f32 %v4697, %v4710
        %4712 = vdwg.mxu0
        %4713 = vmatpush.bf16.msra.mxu0 %v4644
        %4714 = vmatpush.bf16.msra.mxu0 %v4643
        %4715 = vmatpush.bf16.msra.mxu0 %v4642
        %4716 = vmatpush.bf16.msra.mxu0 %v4641
        %4717 = vmatpush.bf16.msra.mxu0 %v4640
        %4718 = vmatpush.bf16.msra.mxu0 %v4639
        %4719 = vmatpush.bf16.msra.mxu0 %v4638
        %4720 = vmatpush.bf16.msra.mxu0 %v4637
        %4721 = vmatmul.bf16.gmra.mxu0 %v4423
        %v4722 = vpop.f32.mrf.mxu0
        %v4723 = vadd.f32 %v4709, %v4722
        %v4724 = vpop.f32.mrf.mxu0
        %v4725 = vadd.f32 %v4711, %v4724
        %4726 = vdwg.mxu0
        %4727 = vmatpush.bf16.msra.mxu0 %v4652
        %4728 = vmatpush.bf16.msra.mxu0 %v4651
        %4729 = vmatpush.bf16.msra.mxu0 %v4650
        %4730 = vmatpush.bf16.msra.mxu0 %v4649
        %4731 = vmatpush.bf16.msra.mxu0 %v4648
        %4732 = vmatpush.bf16.msra.mxu0 %v4647
        %4733 = vmatpush.bf16.msra.mxu0 %v4646
        %4734 = vmatpush.bf16.msra.mxu0 %v4645
        %4735 = vmatmul.bf16.gmra.mxu0 %v4424
        %v4736 = vpop.f32.mrf.mxu0
        %v4737 = vadd.f32 %v4723, %v4736
        %v4738 = vpop.f32.mrf.mxu0
        %v4739 = vadd.f32 %v4725, %v4738
        %4740 = vdwg.mxu0
        %v4741 = vadd.f32 %v3940, %v4737
        %v4742 = vadd.f32 %v3941, %v4739
        %s4743 = scalar_lea.vmem %s1168, 32 [#allocation28]
        %4744 = vst [vmem:[%s4743] sm:$0xff] %v4741
        %4745 = vst [vmem:[%s4743 + $0x8] sm:$0xff] %v4742
        %s4746 = sand.u32 %s724, 1
        %s4747 = sand.u32 %s724, 1
        %s4748 = smul.addr %s4747, 48
        %s4749 = scalar_lea.vmem [#allocation28], %s4748
        // Predicated region
        $region209: #{clip_forward.1} parent=139 // pred_check
          %p4750 = pneg %p734
        $region210: #{clip_forward.1} parent=139 // pred_check_branch
          %4752 = sbr.rel (%p4750) target = $region212
        $region211: #{clip_forward.1} parent=139 // pred_region
          %s4753 = smul.u32 2, %s81
          %s4754 = smul.addr %s4753, 8
          %s4755 = scalar_lea.vmem %s61, %s4754
          // Predicated region
          $region213: #{clip_forward.1} parent=211 // pred_check
            _
          $region214: #{clip_forward.1} parent=211 // pred_check_branch
            %4757 = sbr.rel (0) target = $region216
          $region215: #{clip_forward.1} parent=211 // pred_region
            // Predicated region
            $region217: #{clip_forward.1} parent=215 // pred_check
              _
            $region218: #{clip_forward.1} parent=215 // pred_check_branch
              %4759 = sbr.rel (0) target = $region220
            $region219: #{clip_forward.1} parent=215 // pred_region
              // Predicated region
              $region232: #{clip_forward.1} parent=219 // pred_check
                _
              $region233: #{clip_forward.1} parent=219 // pred_check_branch
                %4785 = sbr.rel (0) target = $region235
              $region234: #{clip_forward.1} parent=219 // pred_region
                loop: start=0, step=1, limit=1
                $region236: #{clip_forward.1} parent=234 // loop_pre_header
                  _
                $region237: #{clip_forward.1} parent=234 // loop_header
                  %s4787 = sphi 0, %s4791
                  %p4788 = scmp.ge.s32.totalorder %s4787, 1
                  %s4792 = sphi %s4749, %s4749
                  %s4793 = sphi %s4755, %s4755
                $region238: #{clip_forward.1} parent=234 // loop_header_branch
                  %4790 = sbr.rel (%p4788) target = $region242
                $region239: #{clip_forward.1} parent=234 // loop_body
                  %v4794 = vld [vmem:[%s4792] sm:$0xff]
                  %4795 = vst [vmem:[%s4793] sm:$0xff] %v4794
                  %v4796 = vld [vmem:[%s4792 + $0x8] sm:$0xff]
                  %4797 = vst [vmem:[%s4793 + $0x8] sm:$0xff] %v4796
                  %v4798 = vld [vmem:[%s4792 + $0x10] sm:$0xff]
                  %4799 = vst [vmem:[%s4793 + $0x20] sm:$0xff] %v4798
                  %v4800 = vld [vmem:[%s4792 + $0x18] sm:$0xff]
                  %4801 = vst [vmem:[%s4793 + $0x28] sm:$0xff] %v4800
                  %v4802 = vld [vmem:[%s4792 + $0x20] sm:$0xff]
                  %4803 = vst [vmem:[%s4793 + $0x40] sm:$0xff] %v4802
                  %v4804 = vld [vmem:[%s4792 + $0x28] sm:$0xff]
                  %4805 = vst [vmem:[%s4793 + $0x48] sm:$0xff] %v4804
                $region240: #{clip_forward.1} parent=234 // loop_footer
                  %s4791 = sadd.s32 1, %s4787
                $region241: #{clip_forward.1} parent=234 // loop_footer_branch
                  %4786 = sbr.rel target = $region237
                $region242: #{clip_forward.1} parent=234 // loop_exit
                  _
              $region235: #{clip_forward.1} parent=219 // pred_fallthru
                _
              // Predicated region
              $region243: #{clip_forward.1} parent=219 // pred_check
                _
              $region244: #{clip_forward.1} parent=219 // pred_check_branch
                %4807 = sbr.rel target = $region246
              $region245: #{clip_forward.1} parent=219 // pred_region
                _
              $region246: #{clip_forward.1} parent=219 // pred_fallthru
                _
            $region220: #{clip_forward.1} parent=215 // pred_fallthru
              _
            // Predicated region
            $region221: #{clip_forward.1} parent=215 // pred_check
              _
            $region222: #{clip_forward.1} parent=215 // pred_check_branch
              %4761 = sbr.rel target = $region224
            $region223: #{clip_forward.1} parent=215 // pred_region
              %s4763 = ssub.s32 256, 1
              loop: start=0, step=1, limit=1
              $region225: #{clip_forward.1} parent=223 // loop_pre_header
                _
              $region226: #{clip_forward.1} parent=223 // loop_header
                %s4765 = sphi 0, %s4769
                %p4766 = scmp.ge.s32.totalorder %s4765, 1
                %s4770 = sphi %s4749, %s4749
                %s4771 = sphi %s4755, %s4755
              $region227: #{clip_forward.1} parent=223 // loop_header_branch
                %4768 = sbr.rel (%p4766) target = $region231
              $region228: #{clip_forward.1} parent=223 // loop_body
                %v4772 = vld [vmem:[%s4770] sm:%s4763]
                %4773 = vst [vmem:[%s4771] sm:%s4763] %v4772
                %v4774 = vld [vmem:[%s4770 + $0x8] sm:%s4763]
                %4775 = vst [vmem:[%s4771 + $0x8] sm:%s4763] %v4774
                %v4776 = vld [vmem:[%s4770 + $0x10] sm:%s4763]
                %4777 = vst [vmem:[%s4771 + $0x20] sm:%s4763] %v4776
                %v4778 = vld [vmem:[%s4770 + $0x18] sm:%s4763]
                %4779 = vst [vmem:[%s4771 + $0x28] sm:%s4763] %v4778
                %v4780 = vld [vmem:[%s4770 + $0x20] sm:%s4763]
                %4781 = vst [vmem:[%s4771 + $0x40] sm:%s4763] %v4780
                %v4782 = vld [vmem:[%s4770 + $0x28] sm:%s4763]
                %4783 = vst [vmem:[%s4771 + $0x48] sm:%s4763] %v4782
              $region229: #{clip_forward.1} parent=223 // loop_footer
                %s4769 = sadd.s32 1, %s4765
              $region230: #{clip_forward.1} parent=223 // loop_footer_branch
                %4764 = sbr.rel target = $region226
              $region231: #{clip_forward.1} parent=223 // loop_exit
                _
            $region224: #{clip_forward.1} parent=215 // pred_fallthru
              _
          $region216: #{clip_forward.1} parent=211 // pred_fallthru
            _
          %4808 = vnop
        $region212: #{clip_forward.1} parent=139 // pred_fallthru
          _
      $region140: #{clip_forward.1} parent=5 // pred_fallthru
        _
      %p4809 = scmp.le.s32.totalorder 2, %s76
      // Predicated region
      $region247: #{clip_forward.1} parent=5 // pred_check
        %p4810 = pneg %p4809
      $region248: #{clip_forward.1} parent=5 // pred_check_branch
        %4812 = sbr.rel (%p4810) target = $region250
      $region249: #{clip_forward.1} parent=5 // pred_region
        %s4813 = ssub.s32 %s76, 2
        // Predicated region
        $region251: #{clip_forward.1} parent=249 // pred_check
          %p4814 = pneg %p740
        $region252: #{clip_forward.1} parent=249 // pred_check_branch
          %4816 = sbr.rel (%p4814) target = $region254
        $region253: #{clip_forward.1} parent=249 // pred_region
          %s4817 = sand.u32 %s725, 1
          %s4818 = sand.u32 %s725, 1
          %s4819 = smul.addr %s4818, 48
          %s4820 = scalar_lea.vmem [#allocation28], %s4819
        $region254: #{clip_forward.1} parent=249 // pred_fallthru
          _
      $region250: #{clip_forward.1} parent=5 // pred_fallthru
        _
    $region6: #{clip_forward.1} parent=1 // loop_footer
      %s80 = sadd.s32 1, %s76
    $region7: #{clip_forward.1} parent=1 // loop_footer_branch
      %75 = sbr.rel target = $region3
    $region8: #{clip_forward.1} parent=1 // loop_exit
      _
    %4821 = vsyncpa [#allocation3], 1
    %s4822 = scalar_lea.sflag [#allocation3], 1
    %4823 = vsyncpa %s4822, 1
    %4824 = vsyncpa [#allocation5], 1
    %4825 = vsyncpa [#allocation8], 1
    %4826 = vsyncpa [#allocation11], 1
    %4827 = vsyncpa [#allocation14], 1
    %4828 = vsyncpa [#allocation17], 1
    %4829 = vsyncpa [#allocation20], 1
    %4830 = vsyncpa [#allocation23], 1
    %4831 = vsyncpa [#allocation26], 1

</llo_original>
